<compile_context>
chip_gen: v7x
topology: tpu7x:2x2x1
jax: 0.10.0
libtpu: 0.0.40
codegen_flags: <defaults>
</compile_context>

<pallas_src>
import jax
import jax.numpy as jnp
from jax.experimental import pallas as pl
from jax.experimental.pallas import tpu as pltpu

SIGMA_DATA = 0.5   # KDiffusion sigma_data
NPARAMS = 11       # scalars per sampling step in the SMEM table


# ----------------------------------------------------------------------------
# Pallas kernel: full ADPM2 sampling chain for one batch element (grid = (B,)).
# ----------------------------------------------------------------------------
def _adpm2_sample_kernel(params_ref,      # SMEM (S*NPARAMS,): per-step scalars
                         x0_ref,          # VMEM (1, C, T): sigmas[0] * noise
                         snoise_ref,      # VMEM (1, S, C, T): ancestral noise, all steps
                         w1_ref,          # VMEM (H, C)
                         w2_ref,          # VMEM (C, H)
                         b2_ref,          # VMEM (C, 1)
                         fbias_ref,       # VMEM (2*S, H, 1): fused biases b1+e1*c_noise
                         o_ref):          # VMEM (1, C, T): clamped output
    S = snoise_ref.shape[1]

    # Weights loaded once; they stay live across the fully unrolled step loop.
    w1 = w1_ref[...]
    w2 = w2_ref[...]
    b2 = b2_ref[...]

    def denoise(xv, c_skip, c_in, c_out, fb):
        # KDiffusion scale weights (host-precomputed) around the net + skip.
        h = jnp.dot(w1, c_in * xv, preferred_element_type=jnp.float32)
        h = jnp.maximum(h + fb, 0.0)                       # fb = b1 + e1*c_noise
        x_pred = jnp.dot(w2, h, preferred_element_type=jnp.float32) + b2
        return c_skip * xv + c_out * x_pred

    # x = sigmas[0] * noise (prescaled on the host).
    x = x0_ref[0]

    # ADPM2Sampler: S = num_steps - 1 second-order ancestral updates.
    # S is small and static -> fully unrolled, all SMEM/VMEM indices static.
    for i in range(S):
        base = i * NPARAMS
        c_skip    = params_ref[base + 0]
        c_in      = params_ref[base + 1]
        c_out     = params_ref[base + 2]
        c_skip_m  = params_ref[base + 3]
        c_in_m    = params_ref[base + 4]
        c_out_m   = params_ref[base + 5]
        inv_sig   = params_ref[base + 6]   # 1 / sigma
        inv_sig_m = params_ref[base + 7]   # 1 / sigma_mid
        dt_mid    = params_ref[base + 8]   # sigma_mid  - sigma
        dt_down   = params_ref[base + 9]   # sigma_down - sigma
        sigma_up  = params_ref[base + 10]

        d = (x - denoise(x, c_skip, c_in, c_out, fbias_ref[2 * i])) * inv_sig
        x_mid = x + d * dt_mid
        d_mid = (x_mid - denoise(x_mid, c_skip_m, c_in_m, c_out_m,
                                 fbias_ref[2 * i + 1])) * inv_sig_m
        # torch.randn_like replaced by host-precomputed per-step noise.
        x = x + d_mid * dt_down + snoise_ref[0, i] * sigma_up

    # DiffusionSampler clamp=True; single write per batch element.
    o_ref[0] = jnp.clip(x, -1.0, 1.0)


# ----------------------------------------------------------------------------
# Host-side glue: Karras schedule + per-step scalar/bias tables (all
# transcendentals and reciprocals hoisted out of the kernel).
# ----------------------------------------------------------------------------
def karras_schedule(num_steps, sigma_min, sigma_max, rho):
    rho_inv = 1.0 / rho
    steps = jnp.arange(num_steps, dtype=jnp.float32)
    sigmas = (sigma_max ** rho_inv
              + steps / (num_steps - 1) * (sigma_min ** rho_inv - sigma_max ** rho_inv)) ** rho
    return jnp.concatenate([sigmas, jnp.zeros((1,), jnp.float32)])  # F.pad(..., value=0)


def adpm2_step_tables(sigmas, num_steps, b1, e1, rho_s=1.0):
    # ADPM2Sampler.get_sigmas for i in range(num_steps - 1), plus every
    # sigma-derived scalar the kernel needs (flat SMEM table) and the per-step
    # fused biases b1 + e1 * c_noise (VMEM table).
    s = sigmas[: num_steps - 1]
    sn = sigmas[1:num_steps]
    sigma_up = jnp.sqrt(sn ** 2 * (s ** 2 - sn ** 2) / (s ** 2))
    sigma_down = jnp.sqrt(sn ** 2 - sigma_up ** 2)
    sigma_mid = ((s ** (1.0 / rho_s) + sigma_down ** (1.0 / rho_s)) / 2.0) ** rho_s

    sd2 = SIGMA_DATA * SIGMA_DATA

    def scale_weights(sig):
        c_skip = sd2 / (sig * sig + sd2)
        c_in = 1.0 / jnp.sqrt(sig * sig + sd2)
        c_out = sig * SIGMA_DATA * c_in
        c_noise = jnp.log(sig) * 0.25
        return c_skip, c_in, c_out, c_noise

    cs, ci, co, cn = scale_weights(s)
    csm, cim, com, cnm = scale_weights(sigma_mid)

    params = jnp.stack(
        [cs, ci, co, csm, cim, com,
         1.0 / s, 1.0 / sigma_mid, sigma_mid - s, sigma_down - s, sigma_up],
        axis=1).astype(jnp.float32)                   # (S, NPARAMS)
    params_flat = params.reshape(-1)                  # (S*NPARAMS,) 1-D SMEM table

    # fused biases: (S, 2, H, 1) -> (2S, H, 1); [2i] = step i sigma, [2i+1] = sigma_mid
    fb0 = b1[None] + e1[None] * cn[:, None, None]     # (S, H, 1)
    fb1 = b1[None] + e1[None] * cnm[:, None, None]    # (S, H, 1)
    fused_bias = jnp.stack([fb0, fb1], axis=1).reshape(-1, b1.shape[0], 1)
    return params_flat, fused_bias.astype(jnp.float32)


# ----------------------------------------------------------------------------
# Wrapper: one pallas_call, grid over batch only (step loop is in-kernel).
# ----------------------------------------------------------------------------
def diffusion_sampler(x0, step_params_flat, step_noise, w1, w2, b2, fused_bias):
    B, C, T = x0.shape
    S = step_noise.shape[1]    # num_steps - 1 sampler iterations
    H = w1.shape[0]

    return pl.pallas_call(
        _adpm2_sample_kernel,
        out_shape=jax.ShapeDtypeStruct((B, C, T), jnp.float32),
        grid=(B,),
        in_specs=[
            pl.BlockSpec(memory_space=pltpu.MemorySpace.SMEM),           # step scalars (1-D)
            pl.BlockSpec((1, C, T), lambda b: (b, 0, 0)),                # sigmas[0]*noise
            pl.BlockSpec((1, S, C, T), lambda b: (b, 0, 0, 0)),          # per-step noise slab
            pl.BlockSpec((H, C), lambda b: (0, 0)),                      # w1
            pl.BlockSpec((C, H), lambda b: (0, 0)),                      # w2
            pl.BlockSpec((C, 1), lambda b: (0, 0)),                      # b2
            pl.BlockSpec((2 * S, H, 1), lambda b: (0, 0, 0)),            # fused biases
        ],
        out_specs=pl.BlockSpec((1, C, T), lambda b: (b, 0, 0)),
        compiler_params=pltpu.CompilerParams(
            dimension_semantics=("parallel",)),                          # megacore over batch
    )(step_params_flat, x0, step_noise, w1, w2, b2, fused_bias)


if __name__ == "__main__":
    # Small but lane/sublane-dense shapes for a 1D audio-latent diffusion sampler.
    B, C, T, H = 2, 8, 128, 32
    num_steps = 8
    S = num_steps - 1
    sigma_min, sigma_max, rho = 1e-4, 3.0, 9.0   # StyleTTS2 KarrasSchedule settings

    key = jax.random.PRNGKey(0)
    k_noise, k_step, k_w1, k_b1, k_e1, k_w2, k_b2 = jax.random.split(key, 7)

    noise = jax.random.normal(k_noise, (B, C, T), jnp.float32)
    # deterministic replacement for torch.randn_like at each ancestral step
    step_noise = jax.random.normal(k_step, (B, S, C, T), jnp.float32)

    # synthetic denoiser-net parameters (deterministic init, no checkpoint)
    # TODO(synk): the abstract Diffusion.denoise_fn has no concrete net in the
    # reference module; a small channel-mixing MLP conditioned on c_noise stands in.
    w1 = 0.3 * jax.random.normal(k_w1, (H, C), jnp.float32)
    b1 = 0.05 * jax.random.normal(k_b1, (H, 1), jnp.float32)
    e1 = 0.05 * jax.random.normal(k_e1, (H, 1), jnp.float32)
    w2 = 0.3 * jax.random.normal(k_w2, (C, H), jnp.float32)
    b2 = 0.05 * jax.random.normal(k_b2, (C, 1), jnp.float32)

    sigmas = karras_schedule(num_steps, sigma_min, sigma_max, rho)       # (num_steps + 1,)
    step_params, fused_bias = adpm2_step_tables(sigmas, num_steps, b1, e1)
    x0 = noise * sigmas[0]                                               # hoisted first step

    out = diffusion_sampler(x0, step_params, step_noise, w1, w2, b2, fused_bias)
    out = jax.block_until_ready(out)

    assert out.shape == (B, C, T)
    assert bool(jnp.all(jnp.isfinite(out)))
    assert bool(jnp.all(jnp.abs(out) <= 1.0))
    print("KERNEL_OK")
</pallas_src>

<mosaic_0001>
module attributes {stable_mosaic.version = 11 : i64} {
  func.func @_adpm2_sample_kernel(%arg0: i32, %arg1: memref<77xf32, #tpu.memory_space<smem>>, %arg2: memref<1x8x128xf32, #tpu.memory_space<vmem>>, %arg3: memref<1x7x8x128xf32, #tpu.memory_space<vmem>>, %arg4: memref<32x8xf32, #tpu.memory_space<vmem>>, %arg5: memref<8x32xf32, #tpu.memory_space<vmem>>, %arg6: memref<8x1xf32, #tpu.memory_space<vmem>>, %arg7: memref<14x32x1xf32, #tpu.memory_space<vmem>>, %arg8: memref<1x8x128xf32, #tpu.memory_space<vmem>>) attributes {dimension_semantics = [#tpu.dimension_semantics<parallel>], iteration_bounds = array<i64: 2>, scalar_prefetch = 0 : i64, scratch_operands = 0 : i64, tpu.core_type = #tpu.core_type<tc>, window_params = [{transform_indices = @transform_0, window_bounds = array<i64: 77>}, {transform_indices = @transform_1, window_bounds = array<i64: 1, 8, 128>}, {transform_indices = @transform_2, window_bounds = array<i64: 1, 7, 8, 128>}, {pipeline_mode = #tpu.pipeline_mode<synchronous>, transform_indices = @transform_3, window_bounds = array<i64: 32, 8>}, {pipeline_mode = #tpu.pipeline_mode<synchronous>, transform_indices = @transform_4, window_bounds = array<i64: 8, 32>}, {pipeline_mode = #tpu.pipeline_mode<synchronous>, transform_indices = @transform_5, window_bounds = array<i64: 8, 1>}, {pipeline_mode = #tpu.pipeline_mode<synchronous>, transform_indices = @transform_6, window_bounds = array<i64: 14, 32, 1>}, {transform_indices = @transform_7, window_bounds = array<i64: 1, 8, 128>}]} {
    %c0 = arith.constant 0 : index
    %c0_0 = arith.constant 0 : index
    %0 = vector.load %arg4[%c0, %c0_0] : memref<32x8xf32, #tpu.memory_space<vmem>>, vector<32x8xf32>
    %c0_1 = arith.constant 0 : index
    %c0_2 = arith.constant 0 : index
    %1 = vector.load %arg5[%c0_1, %c0_2] : memref<8x32xf32, #tpu.memory_space<vmem>>, vector<8x32xf32>
    %c0_3 = arith.constant 0 : index
    %c0_4 = arith.constant 0 : index
    %2 = vector.load %arg6[%c0_3, %c0_4] : memref<8x1xf32, #tpu.memory_space<vmem>>, vector<8x1xf32>
    %c0_5 = arith.constant 0 : index
    %c0_6 = arith.constant 0 : index
    %c0_7 = arith.constant 0 : index
    %3 = vector.load %arg2[%c0_5, %c0_6, %c0_7] : memref<1x8x128xf32, #tpu.memory_space<vmem>>, vector<1x8x128xf32>
    %4 = vector.shape_cast %3 : vector<1x8x128xf32> to vector<8x128xf32>
    %c0_8 = arith.constant 0 : index
    %5 = memref.load %arg1[%c0_8] : memref<77xf32, #tpu.memory_space<smem>>
    %c1 = arith.constant 1 : index
    %6 = memref.load %arg1[%c1] : memref<77xf32, #tpu.memory_space<smem>>
    %c2 = arith.constant 2 : index
    %7 = memref.load %arg1[%c2] : memref<77xf32, #tpu.memory_space<smem>>
    %c3 = arith.constant 3 : index
    %8 = memref.load %arg1[%c3] : memref<77xf32, #tpu.memory_space<smem>>
    %c4 = arith.constant 4 : index
    %9 = memref.load %arg1[%c4] : memref<77xf32, #tpu.memory_space<smem>>
    %c5 = arith.constant 5 : index
    %10 = memref.load %arg1[%c5] : memref<77xf32, #tpu.memory_space<smem>>
    %c6 = arith.constant 6 : index
    %11 = memref.load %arg1[%c6] : memref<77xf32, #tpu.memory_space<smem>>
    %c7 = arith.constant 7 : index
    %12 = memref.load %arg1[%c7] : memref<77xf32, #tpu.memory_space<smem>>
    %c8 = arith.constant 8 : index
    %13 = memref.load %arg1[%c8] : memref<77xf32, #tpu.memory_space<smem>>
    %c9 = arith.constant 9 : index
    %14 = memref.load %arg1[%c9] : memref<77xf32, #tpu.memory_space<smem>>
    %c10 = arith.constant 10 : index
    %15 = memref.load %arg1[%c10] : memref<77xf32, #tpu.memory_space<smem>>
    %c0_9 = arith.constant 0 : index
    %c0_10 = arith.constant 0 : index
    %c0_11 = arith.constant 0 : index
    %16 = vector.load %arg7[%c0_9, %c0_10, %c0_11] : memref<14x32x1xf32, #tpu.memory_space<vmem>>, vector<1x32x1xf32>
    %17 = vector.shape_cast %16 : vector<1x32x1xf32> to vector<32x1xf32>
    %18 = vector.broadcast %6 : f32 to vector<8x128xf32>
    %19 = arith.mulf %18, %4 : vector<8x128xf32>
    %cst = arith.constant dense<0.000000e+00> : vector<32x128xf32>
    %20 = tpu.matmul %0, %19, %cst {dimension_numbers = #tpu.dot_dimension_numbers<[1], [0], [0], [1], [0, 0, 1, 1], [], []>} : vector<32x8xf32>, vector<8x128xf32>, vector<32x128xf32> -> vector<32x128xf32>
    %21 = vector.broadcast %17 : vector<32x1xf32> to vector<32x128xf32>
    %22 = arith.addf %20, %21 : vector<32x128xf32>
    %cst_12 = arith.constant 0.000000e+00 : f32
    %23 = vector.broadcast %cst_12 : f32 to vector<32x128xf32>
    %24 = arith.maximumf %22, %23 : vector<32x128xf32>
    %cst_13 = arith.constant dense<0.000000e+00> : vector<8x128xf32>
    %25 = tpu.matmul %1, %24, %cst_13 {dimension_numbers = #tpu.dot_dimension_numbers<[1], [0], [0], [1], [0, 0, 1, 1], [], []>} : vector<8x32xf32>, vector<32x128xf32>, vector<8x128xf32> -> vector<8x128xf32>
    %26 = vector.broadcast %2 : vector<8x1xf32> to vector<8x128xf32>
    %27 = arith.addf %25, %26 : vector<8x128xf32>
    %28 = vector.broadcast %5 : f32 to vector<8x128xf32>
    %29 = arith.mulf %28, %4 : vector<8x128xf32>
    %30 = vector.broadcast %7 : f32 to vector<8x128xf32>
    %31 = arith.mulf %30, %27 : vector<8x128xf32>
    %32 = arith.addf %29, %31 : vector<8x128xf32>
    %33 = arith.subf %4, %32 : vector<8x128xf32>
    %34 = vector.broadcast %11 : f32 to vector<8x128xf32>
    %35 = arith.mulf %33, %34 : vector<8x128xf32>
    %36 = vector.broadcast %13 : f32 to vector<8x128xf32>
    %37 = arith.mulf %35, %36 : vector<8x128xf32>
    %38 = arith.addf %4, %37 : vector<8x128xf32>
    %c1_14 = arith.constant 1 : index
    %c0_15 = arith.constant 0 : index
    %c0_16 = arith.constant 0 : index
    %39 = vector.load %arg7[%c1_14, %c0_15, %c0_16] : memref<14x32x1xf32, #tpu.memory_space<vmem>>, vector<1x32x1xf32>
    %40 = vector.shape_cast %39 : vector<1x32x1xf32> to vector<32x1xf32>
    %41 = vector.broadcast %9 : f32 to vector<8x128xf32>
    %42 = arith.mulf %41, %38 : vector<8x128xf32>
    %cst_17 = arith.constant dense<0.000000e+00> : vector<32x128xf32>
    %43 = tpu.matmul %0, %42, %cst_17 {dimension_numbers = #tpu.dot_dimension_numbers<[1], [0], [0], [1], [0, 0, 1, 1], [], []>} : vector<32x8xf32>, vector<8x128xf32>, vector<32x128xf32> -> vector<32x128xf32>
    %44 = vector.broadcast %40 : vector<32x1xf32> to vector<32x128xf32>
    %45 = arith.addf %43, %44 : vector<32x128xf32>
    %cst_18 = arith.constant 0.000000e+00 : f32
    %46 = vector.broadcast %cst_18 : f32 to vector<32x128xf32>
    %47 = arith.maximumf %45, %46 : vector<32x128xf32>
    %cst_19 = arith.constant dense<0.000000e+00> : vector<8x128xf32>
    %48 = tpu.matmul %1, %47, %cst_19 {dimension_numbers = #tpu.dot_dimension_numbers<[1], [0], [0], [1], [0, 0, 1, 1], [], []>} : vector<8x32xf32>, vector<32x128xf32>, vector<8x128xf32> -> vector<8x128xf32>
    %49 = vector.broadcast %2 : vector<8x1xf32> to vector<8x128xf32>
    %50 = arith.addf %48, %49 : vector<8x128xf32>
    %51 = vector.broadcast %8 : f32 to vector<8x128xf32>
    %52 = arith.mulf %51, %38 : vector<8x128xf32>
    %53 = vector.broadcast %10 : f32 to vector<8x128xf32>
    %54 = arith.mulf %53, %50 : vector<8x128xf32>
    %55 = arith.addf %52, %54 : vector<8x128xf32>
    %56 = arith.subf %38, %55 : vector<8x128xf32>
    %57 = vector.broadcast %12 : f32 to vector<8x128xf32>
    %58 = arith.mulf %56, %57 : vector<8x128xf32>
    %59 = vector.broadcast %14 : f32 to vector<8x128xf32>
    %60 = arith.mulf %58, %59 : vector<8x128xf32>
    %61 = arith.addf %4, %60 : vector<8x128xf32>
    %c0_20 = arith.constant 0 : index
    %c0_21 = arith.constant 0 : index
    %c0_22 = arith.constant 0 : index
    %c0_23 = arith.constant 0 : index
    %62 = vector.load %arg3[%c0_20, %c0_21, %c0_22, %c0_23] : memref<1x7x8x128xf32, #tpu.memory_space<vmem>>, vector<1x1x8x128xf32>
    %63 = vector.shape_cast %62 : vector<1x1x8x128xf32> to vector<8x128xf32>
    %64 = vector.broadcast %15 : f32 to vector<8x128xf32>
    %65 = arith.mulf %63, %64 : vector<8x128xf32>
    %66 = arith.addf %61, %65 : vector<8x128xf32>
    %c11 = arith.constant 11 : index
    %67 = memref.load %arg1[%c11] : memref<77xf32, #tpu.memory_space<smem>>
    %c12 = arith.constant 12 : index
    %68 = memref.load %arg1[%c12] : memref<77xf32, #tpu.memory_space<smem>>
    %c13 = arith.constant 13 : index
    %69 = memref.load %arg1[%c13] : memref<77xf32, #tpu.memory_space<smem>>
    %c14 = arith.constant 14 : index
    %70 = memref.load %arg1[%c14] : memref<77xf32, #tpu.memory_space<smem>>
    %c15 = arith.constant 15 : index
    %71 = memref.load %arg1[%c15] : memref<77xf32, #tpu.memory_space<smem>>
    %c16 = arith.constant 16 : index
    %72 = memref.load %arg1[%c16] : memref<77xf32, #tpu.memory_space<smem>>
    %c17 = arith.constant 17 : index
    %73 = memref.load %arg1[%c17] : memref<77xf32, #tpu.memory_space<smem>>
    %c18 = arith.constant 18 : index
    %74 = memref.load %arg1[%c18] : memref<77xf32, #tpu.memory_space<smem>>
    %c19 = arith.constant 19 : index
    %75 = memref.load %arg1[%c19] : memref<77xf32, #tpu.memory_space<smem>>
    %c20 = arith.constant 20 : index
    %76 = memref.load %arg1[%c20] : memref<77xf32, #tpu.memory_space<smem>>
    %c21 = arith.constant 21 : index
    %77 = memref.load %arg1[%c21] : memref<77xf32, #tpu.memory_space<smem>>
    %c2_24 = arith.constant 2 : index
    %c0_25 = arith.constant 0 : index
    %c0_26 = arith.constant 0 : index
    %78 = vector.load %arg7[%c2_24, %c0_25, %c0_26] : memref<14x32x1xf32, #tpu.memory_space<vmem>>, vector<1x32x1xf32>
    %79 = vector.shape_cast %78 : vector<1x32x1xf32> to vector<32x1xf32>
    %80 = vector.broadcast %68 : f32 to vector<8x128xf32>
    %81 = arith.mulf %80, %66 : vector<8x128xf32>
    %cst_27 = arith.constant dense<0.000000e+00> : vector<32x128xf32>
    %82 = tpu.matmul %0, %81, %cst_27 {dimension_numbers = #tpu.dot_dimension_numbers<[1], [0], [0], [1], [0, 0, 1, 1], [], []>} : vector<32x8xf32>, vector<8x128xf32>, vector<32x128xf32> -> vector<32x128xf32>
    %83 = vector.broadcast %79 : vector<32x1xf32> to vector<32x128xf32>
    %84 = arith.addf %82, %83 : vector<32x128xf32>
    %cst_28 = arith.constant 0.000000e+00 : f32
    %85 = vector.broadcast %cst_28 : f32 to vector<32x128xf32>
    %86 = arith.maximumf %84, %85 : vector<32x128xf32>
    %cst_29 = arith.constant dense<0.000000e+00> : vector<8x128xf32>
    %87 = tpu.matmul %1, %86, %cst_29 {dimension_numbers = #tpu.dot_dimension_numbers<[1], [0], [0], [1], [0, 0, 1, 1], [], []>} : vector<8x32xf32>, vector<32x128xf32>, vector<8x128xf32> -> vector<8x128xf32>
    %88 = vector.broadcast %2 : vector<8x1xf32> to vector<8x128xf32>
    %89 = arith.addf %87, %88 : vector<8x128xf32>
    %90 = vector.broadcast %67 : f32 to vector<8x128xf32>
    %91 = arith.mulf %90, %66 : vector<8x128xf32>
    %92 = vector.broadcast %69 : f32 to vector<8x128xf32>
    %93 = arith.mulf %92, %89 : vector<8x128xf32>
    %94 = arith.addf %91, %93 : vector<8x128xf32>
    %95 = arith.subf %66, %94 : vector<8x128xf32>
    %96 = vector.broadcast %73 : f32 to vector<8x128xf32>
    %97 = arith.mulf %95, %96 : vector<8x128xf32>
    %98 = vector.broadcast %75 : f32 to vector<8x128xf32>
    %99 = arith.mulf %97, %98 : vector<8x128xf32>
    %100 = arith.addf %66, %99 : vector<8x128xf32>
    %c3_30 = arith.constant 3 : index
    %c0_31 = arith.constant 0 : index
    %c0_32 = arith.constant 0 : index
    %101 = vector.load %arg7[%c3_30, %c0_31, %c0_32] : memref<14x32x1xf32, #tpu.memory_space<vmem>>, vector<1x32x1xf32>
    %102 = vector.shape_cast %101 : vector<1x32x1xf32> to vector<32x1xf32>
    %103 = vector.broadcast %71 : f32 to vector<8x128xf32>
    %104 = arith.mulf %103, %100 : vector<8x128xf32>
    %cst_33 = arith.constant dense<0.000000e+00> : vector<32x128xf32>
    %105 = tpu.matmul %0, %104, %cst_33 {dimension_numbers = #tpu.dot_dimension_numbers<[1], [0], [0], [1], [0, 0, 1, 1], [], []>} : vector<32x8xf32>, vector<8x128xf32>, vector<32x128xf32> -> vector<32x128xf32>
    %106 = vector.broadcast %102 : vector<32x1xf32> to vector<32x128xf32>
    %107 = arith.addf %105, %106 : vector<32x128xf32>
    %cst_34 = arith.constant 0.000000e+00 : f32
    %108 = vector.broadcast %cst_34 : f32 to vector<32x128xf32>
    %109 = arith.maximumf %107, %108 : vector<32x128xf32>
    %cst_35 = arith.constant dense<0.000000e+00> : vector<8x128xf32>
    %110 = tpu.matmul %1, %109, %cst_35 {dimension_numbers = #tpu.dot_dimension_numbers<[1], [0], [0], [1], [0, 0, 1, 1], [], []>} : vector<8x32xf32>, vector<32x128xf32>, vector<8x128xf32> -> vector<8x128xf32>
    %111 = vector.broadcast %2 : vector<8x1xf32> to vector<8x128xf32>
    %112 = arith.addf %110, %111 : vector<8x128xf32>
    %113 = vector.broadcast %70 : f32 to vector<8x128xf32>
    %114 = arith.mulf %113, %100 : vector<8x128xf32>
    %115 = vector.broadcast %72 : f32 to vector<8x128xf32>
    %116 = arith.mulf %115, %112 : vector<8x128xf32>
    %117 = arith.addf %114, %116 : vector<8x128xf32>
    %118 = arith.subf %100, %117 : vector<8x128xf32>
    %119 = vector.broadcast %74 : f32 to vector<8x128xf32>
    %120 = arith.mulf %118, %119 : vector<8x128xf32>
    %121 = vector.broadcast %76 : f32 to vector<8x128xf32>
    %122 = arith.mulf %120, %121 : vector<8x128xf32>
    %123 = arith.addf %66, %122 : vector<8x128xf32>
    %c0_36 = arith.constant 0 : index
    %c1_37 = arith.constant 1 : index
    %c0_38 = arith.constant 0 : index
    %c0_39 = arith.constant 0 : index
    %124 = vector.load %arg3[%c0_36, %c1_37, %c0_38, %c0_39] : memref<1x7x8x128xf32, #tpu.memory_space<vmem>>, vector<1x1x8x128xf32>
    %125 = vector.shape_cast %124 : vector<1x1x8x128xf32> to vector<8x128xf32>
    %126 = vector.broadcast %77 : f32 to vector<8x128xf32>
    %127 = arith.mulf %125, %126 : vector<8x128xf32>
    %128 = arith.addf %123, %127 : vector<8x128xf32>
    %c22 = arith.constant 22 : index
    %129 = memref.load %arg1[%c22] : memref<77xf32, #tpu.memory_space<smem>>
    %c23 = arith.constant 23 : index
    %130 = memref.load %arg1[%c23] : memref<77xf32, #tpu.memory_space<smem>>
    %c24 = arith.constant 24 : index
    %131 = memref.load %arg1[%c24] : memref<77xf32, #tpu.memory_space<smem>>
    %c25 = arith.constant 25 : index
    %132 = memref.load %arg1[%c25] : memref<77xf32, #tpu.memory_space<smem>>
    %c26 = arith.constant 26 : index
    %133 = memref.load %arg1[%c26] : memref<77xf32, #tpu.memory_space<smem>>
    %c27 = arith.constant 27 : index
    %134 = memref.load %arg1[%c27] : memref<77xf32, #tpu.memory_space<smem>>
    %c28 = arith.constant 28 : index
    %135 = memref.load %arg1[%c28] : memref<77xf32, #tpu.memory_space<smem>>
    %c29 = arith.constant 29 : index
    %136 = memref.load %arg1[%c29] : memref<77xf32, #tpu.memory_space<smem>>
    %c30 = arith.constant 30 : index
    %137 = memref.load %arg1[%c30] : memref<77xf32, #tpu.memory_space<smem>>
    %c31 = arith.constant 31 : index
    %138 = memref.load %arg1[%c31] : memref<77xf32, #tpu.memory_space<smem>>
    %c32 = arith.constant 32 : index
    %139 = memref.load %arg1[%c32] : memref<77xf32, #tpu.memory_space<smem>>
    %c4_40 = arith.constant 4 : index
    %c0_41 = arith.constant 0 : index
    %c0_42 = arith.constant 0 : index
    %140 = vector.load %arg7[%c4_40, %c0_41, %c0_42] : memref<14x32x1xf32, #tpu.memory_space<vmem>>, vector<1x32x1xf32>
    %141 = vector.shape_cast %140 : vector<1x32x1xf32> to vector<32x1xf32>
    %142 = vector.broadcast %130 : f32 to vector<8x128xf32>
    %143 = arith.mulf %142, %128 : vector<8x128xf32>
    %cst_43 = arith.constant dense<0.000000e+00> : vector<32x128xf32>
    %144 = tpu.matmul %0, %143, %cst_43 {dimension_numbers = #tpu.dot_dimension_numbers<[1], [0], [0], [1], [0, 0, 1, 1], [], []>} : vector<32x8xf32>, vector<8x128xf32>, vector<32x128xf32> -> vector<32x128xf32>
    %145 = vector.broadcast %141 : vector<32x1xf32> to vector<32x128xf32>
    %146 = arith.addf %144, %145 : vector<32x128xf32>
    %cst_44 = arith.constant 0.000000e+00 : f32
    %147 = vector.broadcast %cst_44 : f32 to vector<32x128xf32>
    %148 = arith.maximumf %146, %147 : vector<32x128xf32>
    %cst_45 = arith.constant dense<0.000000e+00> : vector<8x128xf32>
    %149 = tpu.matmul %1, %148, %cst_45 {dimension_numbers = #tpu.dot_dimension_numbers<[1], [0], [0], [1], [0, 0, 1, 1], [], []>} : vector<8x32xf32>, vector<32x128xf32>, vector<8x128xf32> -> vector<8x128xf32>
    %150 = vector.broadcast %2 : vector<8x1xf32> to vector<8x128xf32>
    %151 = arith.addf %149, %150 : vector<8x128xf32>
    %152 = vector.broadcast %129 : f32 to vector<8x128xf32>
    %153 = arith.mulf %152, %128 : vector<8x128xf32>
    %154 = vector.broadcast %131 : f32 to vector<8x128xf32>
    %155 = arith.mulf %154, %151 : vector<8x128xf32>
    %156 = arith.addf %153, %155 : vector<8x128xf32>
    %157 = arith.subf %128, %156 : vector<8x128xf32>
    %158 = vector.broadcast %135 : f32 to vector<8x128xf32>
    %159 = arith.mulf %157, %158 : vector<8x128xf32>
    %160 = vector.broadcast %137 : f32 to vector<8x128xf32>
    %161 = arith.mulf %159, %160 : vector<8x128xf32>
    %162 = arith.addf %128, %161 : vector<8x128xf32>
    %c5_46 = arith.constant 5 : index
    %c0_47 = arith.constant 0 : index
    %c0_48 = arith.constant 0 : index
    %163 = vector.load %arg7[%c5_46, %c0_47, %c0_48] : memref<14x32x1xf32, #tpu.memory_space<vmem>>, vector<1x32x1xf32>
    %164 = vector.shape_cast %163 : vector<1x32x1xf32> to vector<32x1xf32>
    %165 = vector.broadcast %133 : f32 to vector<8x128xf32>
    %166 = arith.mulf %165, %162 : vector<8x128xf32>
    %cst_49 = arith.constant dense<0.000000e+00> : vector<32x128xf32>
    %167 = tpu.matmul %0, %166, %cst_49 {dimension_numbers = #tpu.dot_dimension_numbers<[1], [0], [0], [1], [0, 0, 1, 1], [], []>} : vector<32x8xf32>, vector<8x128xf32>, vector<32x128xf32> -> vector<32x128xf32>
    %168 = vector.broadcast %164 : vector<32x1xf32> to vector<32x128xf32>
    %169 = arith.addf %167, %168 : vector<32x128xf32>
    %cst_50 = arith.constant 0.000000e+00 : f32
    %170 = vector.broadcast %cst_50 : f32 to vector<32x128xf32>
    %171 = arith.maximumf %169, %170 : vector<32x128xf32>
    %cst_51 = arith.constant dense<0.000000e+00> : vector<8x128xf32>
    %172 = tpu.matmul %1, %171, %cst_51 {dimension_numbers = #tpu.dot_dimension_numbers<[1], [0], [0], [1], [0, 0, 1, 1], [], []>} : vector<8x32xf32>, vector<32x128xf32>, vector<8x128xf32> -> vector<8x128xf32>
    %173 = vector.broadcast %2 : vector<8x1xf32> to vector<8x128xf32>
    %174 = arith.addf %172, %173 : vector<8x128xf32>
    %175 = vector.broadcast %132 : f32 to vector<8x128xf32>
    %176 = arith.mulf %175, %162 : vector<8x128xf32>
    %177 = vector.broadcast %134 : f32 to vector<8x128xf32>
    %178 = arith.mulf %177, %174 : vector<8x128xf32>
    %179 = arith.addf %176, %178 : vector<8x128xf32>
    %180 = arith.subf %162, %179 : vector<8x128xf32>
    %181 = vector.broadcast %136 : f32 to vector<8x128xf32>
    %182 = arith.mulf %180, %181 : vector<8x128xf32>
    %183 = vector.broadcast %138 : f32 to vector<8x128xf32>
    %184 = arith.mulf %182, %183 : vector<8x128xf32>
    %185 = arith.addf %128, %184 : vector<8x128xf32>
    %c0_52 = arith.constant 0 : index
    %c2_53 = arith.constant 2 : index
    %c0_54 = arith.constant 0 : index
    %c0_55 = arith.constant 0 : index
    %186 = vector.load %arg3[%c0_52, %c2_53, %c0_54, %c0_55] : memref<1x7x8x128xf32, #tpu.memory_space<vmem>>, vector<1x1x8x128xf32>
    %187 = vector.shape_cast %186 : vector<1x1x8x128xf32> to vector<8x128xf32>
    %188 = vector.broadcast %139 : f32 to vector<8x128xf32>
    %189 = arith.mulf %187, %188 : vector<8x128xf32>
    %190 = arith.addf %185, %189 : vector<8x128xf32>
    %c33 = arith.constant 33 : index
    %191 = memref.load %arg1[%c33] : memref<77xf32, #tpu.memory_space<smem>>
    %c34 = arith.constant 34 : index
    %192 = memref.load %arg1[%c34] : memref<77xf32, #tpu.memory_space<smem>>
    %c35 = arith.constant 35 : index
    %193 = memref.load %arg1[%c35] : memref<77xf32, #tpu.memory_space<smem>>
    %c36 = arith.constant 36 : index
    %194 = memref.load %arg1[%c36] : memref<77xf32, #tpu.memory_space<smem>>
    %c37 = arith.constant 37 : index
    %195 = memref.load %arg1[%c37] : memref<77xf32, #tpu.memory_space<smem>>
    %c38 = arith.constant 38 : index
    %196 = memref.load %arg1[%c38] : memref<77xf32, #tpu.memory_space<smem>>
    %c39 = arith.constant 39 : index
    %197 = memref.load %arg1[%c39] : memref<77xf32, #tpu.memory_space<smem>>
    %c40 = arith.constant 40 : index
    %198 = memref.load %arg1[%c40] : memref<77xf32, #tpu.memory_space<smem>>
    %c41 = arith.constant 41 : index
    %199 = memref.load %arg1[%c41] : memref<77xf32, #tpu.memory_space<smem>>
    %c42 = arith.constant 42 : index
    %200 = memref.load %arg1[%c42] : memref<77xf32, #tpu.memory_space<smem>>
    %c43 = arith.constant 43 : index
    %201 = memref.load %arg1[%c43] : memref<77xf32, #tpu.memory_space<smem>>
    %c6_56 = arith.constant 6 : index
    %c0_57 = arith.constant 0 : index
    %c0_58 = arith.constant 0 : index
    %202 = vector.load %arg7[%c6_56, %c0_57, %c0_58] : memref<14x32x1xf32, #tpu.memory_space<vmem>>, vector<1x32x1xf32>
    %203 = vector.shape_cast %202 : vector<1x32x1xf32> to vector<32x1xf32>
    %204 = vector.broadcast %192 : f32 to vector<8x128xf32>
    %205 = arith.mulf %204, %190 : vector<8x128xf32>
    %cst_59 = arith.constant dense<0.000000e+00> : vector<32x128xf32>
    %206 = tpu.matmul %0, %205, %cst_59 {dimension_numbers = #tpu.dot_dimension_numbers<[1], [0], [0], [1], [0, 0, 1, 1], [], []>} : vector<32x8xf32>, vector<8x128xf32>, vector<32x128xf32> -> vector<32x128xf32>
    %207 = vector.broadcast %203 : vector<32x1xf32> to vector<32x128xf32>
    %208 = arith.addf %206, %207 : vector<32x128xf32>
    %cst_60 = arith.constant 0.000000e+00 : f32
    %209 = vector.broadcast %cst_60 : f32 to vector<32x128xf32>
    %210 = arith.maximumf %208, %209 : vector<32x128xf32>
    %cst_61 = arith.constant dense<0.000000e+00> : vector<8x128xf32>
    %211 = tpu.matmul %1, %210, %cst_61 {dimension_numbers = #tpu.dot_dimension_numbers<[1], [0], [0], [1], [0, 0, 1, 1], [], []>} : vector<8x32xf32>, vector<32x128xf32>, vector<8x128xf32> -> vector<8x128xf32>
    %212 = vector.broadcast %2 : vector<8x1xf32> to vector<8x128xf32>
    %213 = arith.addf %211, %212 : vector<8x128xf32>
    %214 = vector.broadcast %191 : f32 to vector<8x128xf32>
    %215 = arith.mulf %214, %190 : vector<8x128xf32>
    %216 = vector.broadcast %193 : f32 to vector<8x128xf32>
    %217 = arith.mulf %216, %213 : vector<8x128xf32>
    %218 = arith.addf %215, %217 : vector<8x128xf32>
    %219 = arith.subf %190, %218 : vector<8x128xf32>
    %220 = vector.broadcast %197 : f32 to vector<8x128xf32>
    %221 = arith.mulf %219, %220 : vector<8x128xf32>
    %222 = vector.broadcast %199 : f32 to vector<8x128xf32>
    %223 = arith.mulf %221, %222 : vector<8x128xf32>
    %224 = arith.addf %190, %223 : vector<8x128xf32>
    %c7_62 = arith.constant 7 : index
    %c0_63 = arith.constant 0 : index
    %c0_64 = arith.constant 0 : index
    %225 = vector.load %arg7[%c7_62, %c0_63, %c0_64] : memref<14x32x1xf32, #tpu.memory_space<vmem>>, vector<1x32x1xf32>
    %226 = vector.shape_cast %225 : vector<1x32x1xf32> to vector<32x1xf32>
    %227 = vector.broadcast %195 : f32 to vector<8x128xf32>
    %228 = arith.mulf %227, %224 : vector<8x128xf32>
    %cst_65 = arith.constant dense<0.000000e+00> : vector<32x128xf32>
    %229 = tpu.matmul %0, %228, %cst_65 {dimension_numbers = #tpu.dot_dimension_numbers<[1], [0], [0], [1], [0, 0, 1, 1], [], []>} : vector<32x8xf32>, vector<8x128xf32>, vector<32x128xf32> -> vector<32x128xf32>
    %230 = vector.broadcast %226 : vector<32x1xf32> to vector<32x128xf32>
    %231 = arith.addf %229, %230 : vector<32x128xf32>
    %cst_66 = arith.constant 0.000000e+00 : f32
    %232 = vector.broadcast %cst_66 : f32 to vector<32x128xf32>
    %233 = arith.maximumf %231, %232 : vector<32x128xf32>
    %cst_67 = arith.constant dense<0.000000e+00> : vector<8x128xf32>
    %234 = tpu.matmul %1, %233, %cst_67 {dimension_numbers = #tpu.dot_dimension_numbers<[1], [0], [0], [1], [0, 0, 1, 1], [], []>} : vector<8x32xf32>, vector<32x128xf32>, vector<8x128xf32> -> vector<8x128xf32>
    %235 = vector.broadcast %2 : vector<8x1xf32> to vector<8x128xf32>
    %236 = arith.addf %234, %235 : vector<8x128xf32>
    %237 = vector.broadcast %194 : f32 to vector<8x128xf32>
    %238 = arith.mulf %237, %224 : vector<8x128xf32>
    %239 = vector.broadcast %196 : f32 to vector<8x128xf32>
    %240 = arith.mulf %239, %236 : vector<8x128xf32>
    %241 = arith.addf %238, %240 : vector<8x128xf32>
    %242 = arith.subf %224, %241 : vector<8x128xf32>
    %243 = vector.broadcast %198 : f32 to vector<8x128xf32>
    %244 = arith.mulf %242, %243 : vector<8x128xf32>
    %245 = vector.broadcast %200 : f32 to vector<8x128xf32>
    %246 = arith.mulf %244, %245 : vector<8x128xf32>
    %247 = arith.addf %190, %246 : vector<8x128xf32>
    %c0_68 = arith.constant 0 : index
    %c3_69 = arith.constant 3 : index
    %c0_70 = arith.constant 0 : index
    %c0_71 = arith.constant 0 : index
    %248 = vector.load %arg3[%c0_68, %c3_69, %c0_70, %c0_71] : memref<1x7x8x128xf32, #tpu.memory_space<vmem>>, vector<1x1x8x128xf32>
    %249 = vector.shape_cast %248 : vector<1x1x8x128xf32> to vector<8x128xf32>
    %250 = vector.broadcast %201 : f32 to vector<8x128xf32>
    %251 = arith.mulf %249, %250 : vector<8x128xf32>
    %252 = arith.addf %247, %251 : vector<8x128xf32>
    %c44 = arith.constant 44 : index
    %253 = memref.load %arg1[%c44] : memref<77xf32, #tpu.memory_space<smem>>
    %c45 = arith.constant 45 : index
    %254 = memref.load %arg1[%c45] : memref<77xf32, #tpu.memory_space<smem>>
    %c46 = arith.constant 46 : index
    %255 = memref.load %arg1[%c46] : memref<77xf32, #tpu.memory_space<smem>>
    %c47 = arith.constant 47 : index
    %256 = memref.load %arg1[%c47] : memref<77xf32, #tpu.memory_space<smem>>
    %c48 = arith.constant 48 : index
    %257 = memref.load %arg1[%c48] : memref<77xf32, #tpu.memory_space<smem>>
    %c49 = arith.constant 49 : index
    %258 = memref.load %arg1[%c49] : memref<77xf32, #tpu.memory_space<smem>>
    %c50 = arith.constant 50 : index
    %259 = memref.load %arg1[%c50] : memref<77xf32, #tpu.memory_space<smem>>
    %c51 = arith.constant 51 : index
    %260 = memref.load %arg1[%c51] : memref<77xf32, #tpu.memory_space<smem>>
    %c52 = arith.constant 52 : index
    %261 = memref.load %arg1[%c52] : memref<77xf32, #tpu.memory_space<smem>>
    %c53 = arith.constant 53 : index
    %262 = memref.load %arg1[%c53] : memref<77xf32, #tpu.memory_space<smem>>
    %c54 = arith.constant 54 : index
    %263 = memref.load %arg1[%c54] : memref<77xf32, #tpu.memory_space<smem>>
    %c8_72 = arith.constant 8 : index
    %c0_73 = arith.constant 0 : index
    %c0_74 = arith.constant 0 : index
    %264 = vector.load %arg7[%c8_72, %c0_73, %c0_74] : memref<14x32x1xf32, #tpu.memory_space<vmem>>, vector<1x32x1xf32>
    %265 = vector.shape_cast %264 : vector<1x32x1xf32> to vector<32x1xf32>
    %266 = vector.broadcast %254 : f32 to vector<8x128xf32>
    %267 = arith.mulf %266, %252 : vector<8x128xf32>
    %cst_75 = arith.constant dense<0.000000e+00> : vector<32x128xf32>
    %268 = tpu.matmul %0, %267, %cst_75 {dimension_numbers = #tpu.dot_dimension_numbers<[1], [0], [0], [1], [0, 0, 1, 1], [], []>} : vector<32x8xf32>, vector<8x128xf32>, vector<32x128xf32> -> vector<32x128xf32>
    %269 = vector.broadcast %265 : vector<32x1xf32> to vector<32x128xf32>
    %270 = arith.addf %268, %269 : vector<32x128xf32>
    %cst_76 = arith.constant 0.000000e+00 : f32
    %271 = vector.broadcast %cst_76 : f32 to vector<32x128xf32>
    %272 = arith.maximumf %270, %271 : vector<32x128xf32>
    %cst_77 = arith.constant dense<0.000000e+00> : vector<8x128xf32>
    %273 = tpu.matmul %1, %272, %cst_77 {dimension_numbers = #tpu.dot_dimension_numbers<[1], [0], [0], [1], [0, 0, 1, 1], [], []>} : vector<8x32xf32>, vector<32x128xf32>, vector<8x128xf32> -> vector<8x128xf32>
    %274 = vector.broadcast %2 : vector<8x1xf32> to vector<8x128xf32>
    %275 = arith.addf %273, %274 : vector<8x128xf32>
    %276 = vector.broadcast %253 : f32 to vector<8x128xf32>
    %277 = arith.mulf %276, %252 : vector<8x128xf32>
    %278 = vector.broadcast %255 : f32 to vector<8x128xf32>
    %279 = arith.mulf %278, %275 : vector<8x128xf32>
    %280 = arith.addf %277, %279 : vector<8x128xf32>
    %281 = arith.subf %252, %280 : vector<8x128xf32>
    %282 = vector.broadcast %259 : f32 to vector<8x128xf32>
    %283 = arith.mulf %281, %282 : vector<8x128xf32>
    %284 = vector.broadcast %261 : f32 to vector<8x128xf32>
    %285 = arith.mulf %283, %284 : vector<8x128xf32>
    %286 = arith.addf %252, %285 : vector<8x128xf32>
    %c9_78 = arith.constant 9 : index
    %c0_79 = arith.constant 0 : index
    %c0_80 = arith.constant 0 : index
    %287 = vector.load %arg7[%c9_78, %c0_79, %c0_80] : memref<14x32x1xf32, #tpu.memory_space<vmem>>, vector<1x32x1xf32>
    %288 = vector.shape_cast %287 : vector<1x32x1xf32> to vector<32x1xf32>
    %289 = vector.broadcast %257 : f32 to vector<8x128xf32>
    %290 = arith.mulf %289, %286 : vector<8x128xf32>
    %cst_81 = arith.constant dense<0.000000e+00> : vector<32x128xf32>
    %291 = tpu.matmul %0, %290, %cst_81 {dimension_numbers = #tpu.dot_dimension_numbers<[1], [0], [0], [1], [0, 0, 1, 1], [], []>} : vector<32x8xf32>, vector<8x128xf32>, vector<32x128xf32> -> vector<32x128xf32>
    %292 = vector.broadcast %288 : vector<32x1xf32> to vector<32x128xf32>
    %293 = arith.addf %291, %292 : vector<32x128xf32>
    %cst_82 = arith.constant 0.000000e+00 : f32
    %294 = vector.broadcast %cst_82 : f32 to vector<32x128xf32>
    %295 = arith.maximumf %293, %294 : vector<32x128xf32>
    %cst_83 = arith.constant dense<0.000000e+00> : vector<8x128xf32>
    %296 = tpu.matmul %1, %295, %cst_83 {dimension_numbers = #tpu.dot_dimension_numbers<[1], [0], [0], [1], [0, 0, 1, 1], [], []>} : vector<8x32xf32>, vector<32x128xf32>, vector<8x128xf32> -> vector<8x128xf32>
    %297 = vector.broadcast %2 : vector<8x1xf32> to vector<8x128xf32>
    %298 = arith.addf %296, %297 : vector<8x128xf32>
    %299 = vector.broadcast %256 : f32 to vector<8x128xf32>
    %300 = arith.mulf %299, %286 : vector<8x128xf32>
    %301 = vector.broadcast %258 : f32 to vector<8x128xf32>
    %302 = arith.mulf %301, %298 : vector<8x128xf32>
    %303 = arith.addf %300, %302 : vector<8x128xf32>
    %304 = arith.subf %286, %303 : vector<8x128xf32>
    %305 = vector.broadcast %260 : f32 to vector<8x128xf32>
    %306 = arith.mulf %304, %305 : vector<8x128xf32>
    %307 = vector.broadcast %262 : f32 to vector<8x128xf32>
    %308 = arith.mulf %306, %307 : vector<8x128xf32>
    %309 = arith.addf %252, %308 : vector<8x128xf32>
    %c0_84 = arith.constant 0 : index
    %c4_85 = arith.constant 4 : index
    %c0_86 = arith.constant 0 : index
    %c0_87 = arith.constant 0 : index
    %310 = vector.load %arg3[%c0_84, %c4_85, %c0_86, %c0_87] : memref<1x7x8x128xf32, #tpu.memory_space<vmem>>, vector<1x1x8x128xf32>
    %311 = vector.shape_cast %310 : vector<1x1x8x128xf32> to vector<8x128xf32>
    %312 = vector.broadcast %263 : f32 to vector<8x128xf32>
    %313 = arith.mulf %311, %312 : vector<8x128xf32>
    %314 = arith.addf %309, %313 : vector<8x128xf32>
    %c55 = arith.constant 55 : index
    %315 = memref.load %arg1[%c55] : memref<77xf32, #tpu.memory_space<smem>>
    %c56 = arith.constant 56 : index
    %316 = memref.load %arg1[%c56] : memref<77xf32, #tpu.memory_space<smem>>
    %c57 = arith.constant 57 : index
    %317 = memref.load %arg1[%c57] : memref<77xf32, #tpu.memory_space<smem>>
    %c58 = arith.constant 58 : index
    %318 = memref.load %arg1[%c58] : memref<77xf32, #tpu.memory_space<smem>>
    %c59 = arith.constant 59 : index
    %319 = memref.load %arg1[%c59] : memref<77xf32, #tpu.memory_space<smem>>
    %c60 = arith.constant 60 : index
    %320 = memref.load %arg1[%c60] : memref<77xf32, #tpu.memory_space<smem>>
    %c61 = arith.constant 61 : index
    %321 = memref.load %arg1[%c61] : memref<77xf32, #tpu.memory_space<smem>>
    %c62 = arith.constant 62 : index
    %322 = memref.load %arg1[%c62] : memref<77xf32, #tpu.memory_space<smem>>
    %c63 = arith.constant 63 : index
    %323 = memref.load %arg1[%c63] : memref<77xf32, #tpu.memory_space<smem>>
    %c64 = arith.constant 64 : index
    %324 = memref.load %arg1[%c64] : memref<77xf32, #tpu.memory_space<smem>>
    %c65 = arith.constant 65 : index
    %325 = memref.load %arg1[%c65] : memref<77xf32, #tpu.memory_space<smem>>
    %c10_88 = arith.constant 10 : index
    %c0_89 = arith.constant 0 : index
    %c0_90 = arith.constant 0 : index
    %326 = vector.load %arg7[%c10_88, %c0_89, %c0_90] : memref<14x32x1xf32, #tpu.memory_space<vmem>>, vector<1x32x1xf32>
    %327 = vector.shape_cast %326 : vector<1x32x1xf32> to vector<32x1xf32>
    %328 = vector.broadcast %316 : f32 to vector<8x128xf32>
    %329 = arith.mulf %328, %314 : vector<8x128xf32>
    %cst_91 = arith.constant dense<0.000000e+00> : vector<32x128xf32>
    %330 = tpu.matmul %0, %329, %cst_91 {dimension_numbers = #tpu.dot_dimension_numbers<[1], [0], [0], [1], [0, 0, 1, 1], [], []>} : vector<32x8xf32>, vector<8x128xf32>, vector<32x128xf32> -> vector<32x128xf32>
    %331 = vector.broadcast %327 : vector<32x1xf32> to vector<32x128xf32>
    %332 = arith.addf %330, %331 : vector<32x128xf32>
    %cst_92 = arith.constant 0.000000e+00 : f32
    %333 = vector.broadcast %cst_92 : f32 to vector<32x128xf32>
    %334 = arith.maximumf %332, %333 : vector<32x128xf32>
    %cst_93 = arith.constant dense<0.000000e+00> : vector<8x128xf32>
    %335 = tpu.matmul %1, %334, %cst_93 {dimension_numbers = #tpu.dot_dimension_numbers<[1], [0], [0], [1], [0, 0, 1, 1], [], []>} : vector<8x32xf32>, vector<32x128xf32>, vector<8x128xf32> -> vector<8x128xf32>
    %336 = vector.broadcast %2 : vector<8x1xf32> to vector<8x128xf32>
    %337 = arith.addf %335, %336 : vector<8x128xf32>
    %338 = vector.broadcast %315 : f32 to vector<8x128xf32>
    %339 = arith.mulf %338, %314 : vector<8x128xf32>
    %340 = vector.broadcast %317 : f32 to vector<8x128xf32>
    %341 = arith.mulf %340, %337 : vector<8x128xf32>
    %342 = arith.addf %339, %341 : vector<8x128xf32>
    %343 = arith.subf %314, %342 : vector<8x128xf32>
    %344 = vector.broadcast %321 : f32 to vector<8x128xf32>
    %345 = arith.mulf %343, %344 : vector<8x128xf32>
    %346 = vector.broadcast %323 : f32 to vector<8x128xf32>
    %347 = arith.mulf %345, %346 : vector<8x128xf32>
    %348 = arith.addf %314, %347 : vector<8x128xf32>
    %c11_94 = arith.constant 11 : index
    %c0_95 = arith.constant 0 : index
    %c0_96 = arith.constant 0 : index
    %349 = vector.load %arg7[%c11_94, %c0_95, %c0_96] : memref<14x32x1xf32, #tpu.memory_space<vmem>>, vector<1x32x1xf32>
    %350 = vector.shape_cast %349 : vector<1x32x1xf32> to vector<32x1xf32>
    %351 = vector.broadcast %319 : f32 to vector<8x128xf32>
    %352 = arith.mulf %351, %348 : vector<8x128xf32>
    %cst_97 = arith.constant dense<0.000000e+00> : vector<32x128xf32>
    %353 = tpu.matmul %0, %352, %cst_97 {dimension_numbers = #tpu.dot_dimension_numbers<[1], [0], [0], [1], [0, 0, 1, 1], [], []>} : vector<32x8xf32>, vector<8x128xf32>, vector<32x128xf32> -> vector<32x128xf32>
    %354 = vector.broadcast %350 : vector<32x1xf32> to vector<32x128xf32>
    %355 = arith.addf %353, %354 : vector<32x128xf32>
    %cst_98 = arith.constant 0.000000e+00 : f32
    %356 = vector.broadcast %cst_98 : f32 to vector<32x128xf32>
    %357 = arith.maximumf %355, %356 : vector<32x128xf32>
    %cst_99 = arith.constant dense<0.000000e+00> : vector<8x128xf32>
    %358 = tpu.matmul %1, %357, %cst_99 {dimension_numbers = #tpu.dot_dimension_numbers<[1], [0], [0], [1], [0, 0, 1, 1], [], []>} : vector<8x32xf32>, vector<32x128xf32>, vector<8x128xf32> -> vector<8x128xf32>
    %359 = vector.broadcast %2 : vector<8x1xf32> to vector<8x128xf32>
    %360 = arith.addf %358, %359 : vector<8x128xf32>
    %361 = vector.broadcast %318 : f32 to vector<8x128xf32>
    %362 = arith.mulf %361, %348 : vector<8x128xf32>
    %363 = vector.broadcast %320 : f32 to vector<8x128xf32>
    %364 = arith.mulf %363, %360 : vector<8x128xf32>
    %365 = arith.addf %362, %364 : vector<8x128xf32>
    %366 = arith.subf %348, %365 : vector<8x128xf32>
    %367 = vector.broadcast %322 : f32 to vector<8x128xf32>
    %368 = arith.mulf %366, %367 : vector<8x128xf32>
    %369 = vector.broadcast %324 : f32 to vector<8x128xf32>
    %370 = arith.mulf %368, %369 : vector<8x128xf32>
    %371 = arith.addf %314, %370 : vector<8x128xf32>
    %c0_100 = arith.constant 0 : index
    %c5_101 = arith.constant 5 : index
    %c0_102 = arith.constant 0 : index
    %c0_103 = arith.constant 0 : index
    %372 = vector.load %arg3[%c0_100, %c5_101, %c0_102, %c0_103] : memref<1x7x8x128xf32, #tpu.memory_space<vmem>>, vector<1x1x8x128xf32>
    %373 = vector.shape_cast %372 : vector<1x1x8x128xf32> to vector<8x128xf32>
    %374 = vector.broadcast %325 : f32 to vector<8x128xf32>
    %375 = arith.mulf %373, %374 : vector<8x128xf32>
    %376 = arith.addf %371, %375 : vector<8x128xf32>
    %c66 = arith.constant 66 : index
    %377 = memref.load %arg1[%c66] : memref<77xf32, #tpu.memory_space<smem>>
    %c67 = arith.constant 67 : index
    %378 = memref.load %arg1[%c67] : memref<77xf32, #tpu.memory_space<smem>>
    %c68 = arith.constant 68 : index
    %379 = memref.load %arg1[%c68] : memref<77xf32, #tpu.memory_space<smem>>
    %c69 = arith.constant 69 : index
    %380 = memref.load %arg1[%c69] : memref<77xf32, #tpu.memory_space<smem>>
    %c70 = arith.constant 70 : index
    %381 = memref.load %arg1[%c70] : memref<77xf32, #tpu.memory_space<smem>>
    %c71 = arith.constant 71 : index
    %382 = memref.load %arg1[%c71] : memref<77xf32, #tpu.memory_space<smem>>
    %c72 = arith.constant 72 : index
    %383 = memref.load %arg1[%c72] : memref<77xf32, #tpu.memory_space<smem>>
    %c73 = arith.constant 73 : index
    %384 = memref.load %arg1[%c73] : memref<77xf32, #tpu.memory_space<smem>>
    %c74 = arith.constant 74 : index
    %385 = memref.load %arg1[%c74] : memref<77xf32, #tpu.memory_space<smem>>
    %c75 = arith.constant 75 : index
    %386 = memref.load %arg1[%c75] : memref<77xf32, #tpu.memory_space<smem>>
    %c76 = arith.constant 76 : index
    %387 = memref.load %arg1[%c76] : memref<77xf32, #tpu.memory_space<smem>>
    %c12_104 = arith.constant 12 : index
    %c0_105 = arith.constant 0 : index
    %c0_106 = arith.constant 0 : index
    %388 = vector.load %arg7[%c12_104, %c0_105, %c0_106] : memref<14x32x1xf32, #tpu.memory_space<vmem>>, vector<1x32x1xf32>
    %389 = vector.shape_cast %388 : vector<1x32x1xf32> to vector<32x1xf32>
    %390 = vector.broadcast %378 : f32 to vector<8x128xf32>
    %391 = arith.mulf %390, %376 : vector<8x128xf32>
    %cst_107 = arith.constant dense<0.000000e+00> : vector<32x128xf32>
    %392 = tpu.matmul %0, %391, %cst_107 {dimension_numbers = #tpu.dot_dimension_numbers<[1], [0], [0], [1], [0, 0, 1, 1], [], []>} : vector<32x8xf32>, vector<8x128xf32>, vector<32x128xf32> -> vector<32x128xf32>
    %393 = vector.broadcast %389 : vector<32x1xf32> to vector<32x128xf32>
    %394 = arith.addf %392, %393 : vector<32x128xf32>
    %cst_108 = arith.constant 0.000000e+00 : f32
    %395 = vector.broadcast %cst_108 : f32 to vector<32x128xf32>
    %396 = arith.maximumf %394, %395 : vector<32x128xf32>
    %cst_109 = arith.constant dense<0.000000e+00> : vector<8x128xf32>
    %397 = tpu.matmul %1, %396, %cst_109 {dimension_numbers = #tpu.dot_dimension_numbers<[1], [0], [0], [1], [0, 0, 1, 1], [], []>} : vector<8x32xf32>, vector<32x128xf32>, vector<8x128xf32> -> vector<8x128xf32>
    %398 = vector.broadcast %2 : vector<8x1xf32> to vector<8x128xf32>
    %399 = arith.addf %397, %398 : vector<8x128xf32>
    %400 = vector.broadcast %377 : f32 to vector<8x128xf32>
    %401 = arith.mulf %400, %376 : vector<8x128xf32>
    %402 = vector.broadcast %379 : f32 to vector<8x128xf32>
    %403 = arith.mulf %402, %399 : vector<8x128xf32>
    %404 = arith.addf %401, %403 : vector<8x128xf32>
    %405 = arith.subf %376, %404 : vector<8x128xf32>
    %406 = vector.broadcast %383 : f32 to vector<8x128xf32>
    %407 = arith.mulf %405, %406 : vector<8x128xf32>
    %408 = vector.broadcast %385 : f32 to vector<8x128xf32>
    %409 = arith.mulf %407, %408 : vector<8x128xf32>
    %410 = arith.addf %376, %409 : vector<8x128xf32>
    %c13_110 = arith.constant 13 : index
    %c0_111 = arith.constant 0 : index
    %c0_112 = arith.constant 0 : index
    %411 = vector.load %arg7[%c13_110, %c0_111, %c0_112] : memref<14x32x1xf32, #tpu.memory_space<vmem>>, vector<1x32x1xf32>
    %412 = vector.shape_cast %411 : vector<1x32x1xf32> to vector<32x1xf32>
    %413 = vector.broadcast %381 : f32 to vector<8x128xf32>
    %414 = arith.mulf %413, %410 : vector<8x128xf32>
    %cst_113 = arith.constant dense<0.000000e+00> : vector<32x128xf32>
    %415 = tpu.matmul %0, %414, %cst_113 {dimension_numbers = #tpu.dot_dimension_numbers<[1], [0], [0], [1], [0, 0, 1, 1], [], []>} : vector<32x8xf32>, vector<8x128xf32>, vector<32x128xf32> -> vector<32x128xf32>
    %416 = vector.broadcast %412 : vector<32x1xf32> to vector<32x128xf32>
    %417 = arith.addf %415, %416 : vector<32x128xf32>
    %cst_114 = arith.constant 0.000000e+00 : f32
    %418 = vector.broadcast %cst_114 : f32 to vector<32x128xf32>
    %419 = arith.maximumf %417, %418 : vector<32x128xf32>
    %cst_115 = arith.constant dense<0.000000e+00> : vector<8x128xf32>
    %420 = tpu.matmul %1, %419, %cst_115 {dimension_numbers = #tpu.dot_dimension_numbers<[1], [0], [0], [1], [0, 0, 1, 1], [], []>} : vector<8x32xf32>, vector<32x128xf32>, vector<8x128xf32> -> vector<8x128xf32>
    %421 = vector.broadcast %2 : vector<8x1xf32> to vector<8x128xf32>
    %422 = arith.addf %420, %421 : vector<8x128xf32>
    %423 = vector.broadcast %380 : f32 to vector<8x128xf32>
    %424 = arith.mulf %423, %410 : vector<8x128xf32>
    %425 = vector.broadcast %382 : f32 to vector<8x128xf32>
    %426 = arith.mulf %425, %422 : vector<8x128xf32>
    %427 = arith.addf %424, %426 : vector<8x128xf32>
    %428 = arith.subf %410, %427 : vector<8x128xf32>
    %429 = vector.broadcast %384 : f32 to vector<8x128xf32>
    %430 = arith.mulf %428, %429 : vector<8x128xf32>
    %431 = vector.broadcast %386 : f32 to vector<8x128xf32>
    %432 = arith.mulf %430, %431 : vector<8x128xf32>
    %433 = arith.addf %376, %432 : vector<8x128xf32>
    %c0_116 = arith.constant 0 : index
    %c6_117 = arith.constant 6 : index
    %c0_118 = arith.constant 0 : index
    %c0_119 = arith.constant 0 : index
    %434 = vector.load %arg3[%c0_116, %c6_117, %c0_118, %c0_119] : memref<1x7x8x128xf32, #tpu.memory_space<vmem>>, vector<1x1x8x128xf32>
    %435 = vector.shape_cast %434 : vector<1x1x8x128xf32> to vector<8x128xf32>
    %436 = vector.broadcast %387 : f32 to vector<8x128xf32>
    %437 = arith.mulf %435, %436 : vector<8x128xf32>
    %438 = arith.addf %433, %437 : vector<8x128xf32>
    %cst_120 = arith.constant -1.000000e+00 : f32
    %cst_121 = arith.constant 1.000000e+00 : f32
    %439 = vector.broadcast %cst_120 : f32 to vector<8x128xf32>
    %440 = arith.maximumf %439, %438 : vector<8x128xf32>
    %441 = vector.broadcast %cst_121 : f32 to vector<8x128xf32>
    %442 = arith.minimumf %441, %440 : vector<8x128xf32>
    %c0_122 = arith.constant 0 : index
    %c0_123 = arith.constant 0 : index
    %c0_124 = arith.constant 0 : index
    %443 = vector.load %arg8[%c0_122, %c0_123, %c0_124] : memref<1x8x128xf32, #tpu.memory_space<vmem>>, vector<1x8x128xf32>
    %444 = vector.shape_cast %443 : vector<1x8x128xf32> to vector<8x128xf32>
    %445 = vector.shape_cast %442 : vector<8x128xf32> to vector<1x8x128xf32>
    tpu.vector_store %arg8[%c0_122, %c0_123, %c0_124], %445 {strides = array<i32>} : memref<1x8x128xf32, #tpu.memory_space<vmem>>, vector<1x8x128xf32>,
    return
  }
  func.func @transform_0(%arg0: i32) -> i32 {
    %c0_i32 = arith.constant 0 : i32
    %c0_i32_0 = arith.constant 0 : i32
    return %c0_i32 : i32
  }
  func.func @transform_1(%arg0: i32) -> (i32, i32, i32) {
    %c0_i32 = arith.constant 0 : i32
    %c0_i32_0 = arith.constant 0 : i32
    %c0_i32_1 = arith.constant 0 : i32
    return %arg0, %c0_i32, %c0_i32_0 : i32, i32, i32
  }
  func.func @transform_2(%arg0: i32) -> (i32, i32, i32, i32) {
    %c0_i32 = arith.constant 0 : i32
    %c0_i32_0 = arith.constant 0 : i32
    %c0_i32_1 = arith.constant 0 : i32
    %c0_i32_2 = arith.constant 0 : i32
    return %arg0, %c0_i32, %c0_i32_0, %c0_i32_1 : i32, i32, i32, i32
  }
  func.func @transform_3(%arg0: i32) -> (i32, i32) {
    %c0_i32 = arith.constant 0 : i32
    %c0_i32_0 = arith.constant 0 : i32
    %c0_i32_1 = arith.constant 0 : i32
    return %c0_i32, %c0_i32_0 : i32, i32
  }
  func.func @transform_4(%arg0: i32) -> (i32, i32) {
    %c0_i32 = arith.constant 0 : i32
    %c0_i32_0 = arith.constant 0 : i32
    %c0_i32_1 = arith.constant 0 : i32
    return %c0_i32, %c0_i32_0 : i32, i32
  }
  func.func @transform_5(%arg0: i32) -> (i32, i32) {
    %c0_i32 = arith.constant 0 : i32
    %c0_i32_0 = arith.constant 0 : i32
    %c0_i32_1 = arith.constant 0 : i32
    return %c0_i32, %c0_i32_0 : i32, i32
  }
  func.func @transform_6(%arg0: i32) -> (i32, i32, i32) {
    %c0_i32 = arith.constant 0 : i32
    %c0_i32_0 = arith.constant 0 : i32
    %c0_i32_1 = arith.constant 0 : i32
    %c0_i32_2 = arith.constant 0 : i32
    return %c0_i32, %c0_i32_0, %c0_i32_1 : i32, i32, i32
  }
  func.func @transform_7(%arg0: i32) -> (i32, i32, i32) {
    %c0_i32 = arith.constant 0 : i32
    %c0_i32_0 = arith.constant 0 : i32
    %c0_i32_1 = arith.constant 0 : i32
    return %arg0, %c0_i32, %c0_i32_0 : i32, i32, i32
  }
}

</mosaic_0001>

<llo_original>
// kernel: tpu_custom_call.1
$region0: #{tpu_custom_call.1}
  #allocation0 [shape = 'u32[]', space=smem, size = 0x4, offset = 0x4, fixed_abs, tag = 'smem constant byte address 0x4 - core index']
  #allocation1 [shape = 'u32[144,128]{1,0:T(1,128)}', space=vmem, size = 0x12000, scoped, tag = 'internal scratch']
  %s0 = inlined_call_operand.vmem [shape: f32[77], index: 0, kind: input, shape index: {}]
  %s1 = inlined_call_operand.vmem [shape: f32[2,8,128], index: 1, kind: input, shape index: {}]
  %s2 = inlined_call_operand.vmem [shape: f32[2,7,8,128], index: 2, kind: input, shape index: {}]
  %s3 = inlined_call_operand.vmem [shape: f32[32,8], index: 3, kind: input, shape index: {}]
  %s4 = inlined_call_operand.vmem [shape: f32[8,32], index: 4, kind: input, shape index: {}]
  %s5 = inlined_call_operand.vmem [shape: f32[8,1], index: 5, kind: input, shape index: {}]
  %s6 = inlined_call_operand.vmem [shape: f32[14,32,1], index: 6, kind: input, shape index: {}]
  %s7 = inlined_call_operand.hbm [shape: f32[2,8,128], index: 7, kind: output, shape index: {}]
  %s8 = sld [smem:[#allocation0]]
  $region65: #{tpu_custom_call.1} parent=0
    _
  %s10 = ssub.s32 1, %s8
  %s11 = scalar_select 0, %s10, %s8
  $region1: #{tpu_custom_call.1} parent=0
    #allocation2 [shape = 'u8[512]{0}', space=smem, size = 0x200, scoped, tag = 'input window, operand 0, single buffered']
    #allocation3 [shape = 's32[2]{0}', space=sflag, size = 0x8, scoped, tag = 'scoped memory for tpu_custom_call.1']
    #allocation4 [shape = 's32[2]{0}', space=sflag, size = 0x8, scoped, tag = 'scoped memory for tpu_custom_call.1']
    #allocation5 [shape = 'u8[8192]{0}', space=vmem, size = 0x2000, scoped, tag = 'output window, operand 0']
    %12 = vsyncpa [#allocation4], 0
    %13 = vsyncpa [#allocation3], 0
    %s14 = scalar_lea.sflag [#allocation3], 1
    %15 = vsyncpa %s14, 0
    loop: start=0, step=1, limit=4
    $region2: #{tpu_custom_call.1} parent=1 // loop_pre_header
      _
    $region3: #{tpu_custom_call.1} parent=1 // loop_header
      %s17 = sphi 0, %s21
      %p18 = scmp.ge.s32.totalorder %s17, 4
      %s25 = sphi 0, %s25
      %s27 = sphi 0, %s25
      %s28 = sphi 0, %s27
      %s42 = sphi 0, %s28
      %s48 = sphi 0, %s50
      %s51 = sphi 0, %s48
      %s52 = sphi 0, %s51
      %s68 = sphi 0, %s52
      %s74 = sphi 0, %s76
      %s77 = sphi 0, %s74
      %s78 = sphi 0, %s77
      %s94 = sphi 0, %s78
      %s98 = sphi 0, %s98
      %s100 = sphi 0, %s98
      %s101 = sphi 0, %s100
      %s115 = sphi 0, %s101
      %s119 = sphi 0, %s119
      %s121 = sphi 0, %s119
      %s122 = sphi 0, %s121
      %s136 = sphi 0, %s122
      %s140 = sphi 0, %s140
      %s142 = sphi 0, %s140
      %s143 = sphi 0, %s142
      %s157 = sphi 0, %s143
      %s161 = sphi 0, %s161
      %s163 = sphi 0, %s161
      %s164 = sphi 0, %s163
      %s178 = sphi 0, %s164
      %s184 = sphi 0, %s186
      %s187 = sphi 0, %s184
      %s188 = sphi 0, %s187
      %s204 = sphi 0, %s188
    $region4: #{tpu_custom_call.1} parent=1 // loop_header_branch
      %20 = sbr.rel (%p18) target = $region8
    $region5: #{tpu_custom_call.1} parent=1 // loop_body
      %s22 = ssub.s32 %s17, 1
      %s23 = ssub.s32 %s17, 2
      %s24 = sadd.s32 %s17, 1
      %s26 = sadd.s32 %s25, 1
      %p29 = scmp.eq.s32.totalorder %s17, 1
      %p30 = scmp.ne.s32.totalorder %s25, %s27
      %p31 = scmp.eq.s32.totalorder %s17, 0
      %p32 = por %p30, %p31
      %p33 = scmp.ne.s32.totalorder %s25, %s27
      %p34 = scmp.eq.s32.totalorder %s22, 1
      %p35 = por %p33, %p34
      %p36 = scmp.ne.s32.totalorder %s27, %s28
      %p37 = scmp.eq.s32.totalorder %s22, 0
      %p38 = por %p36, %p37
      %p39 = scmp.ne.s32.totalorder %s27, %s28
      %p40 = scmp.eq.s32.totalorder %s23, 1
      %p41 = por %p39, %p40
      %p43 = scmp.ne.s32.totalorder %s28, %s42
      %p44 = scmp.eq.s32.totalorder %s23, 0
      %p45 = por %p43, %p44
      %s46 = ssub.s32 %s17, %s24
      %p47 = scmp.eq.s32.totalorder %s46, 0
      %s49 = sadd.s32 %s48, 1
      %s50 = scalar_select %p47, %s48, %s49
      %p53 = pneg %p47
      %p54 = scmp.eq.s32.totalorder %s17, 1
      %p55 = por %p53, %p54
      %p56 = scmp.ne.s32.totalorder %s48, %s51
      %p57 = scmp.eq.s32.totalorder %s17, 0
      %p58 = por %p56, %p57
      %p59 = scmp.ne.s32.totalorder %s48, %s51
      %p60 = scmp.eq.s32.totalorder %s22, 1
      %p61 = por %p59, %p60
      %p62 = scmp.ne.s32.totalorder %s51, %s52
      %p63 = scmp.eq.s32.totalorder %s22, 0
      %p64 = por %p62, %p63
      %p65 = scmp.ne.s32.totalorder %s51, %s52
      %p66 = scmp.eq.s32.totalorder %s23, 1
      %p67 = por %p65, %p66
      %p69 = scmp.ne.s32.totalorder %s52, %s68
      %p70 = scmp.eq.s32.totalorder %s23, 0
      %p71 = por %p69, %p70
      %s72 = ssub.s32 %s17, %s24
      %p73 = scmp.eq.s32.totalorder %s72, 0
      %s75 = sadd.s32 %s74, 1
      %s76 = scalar_select %p73, %s74, %s75
      %p79 = pneg %p73
      %p80 = scmp.eq.s32.totalorder %s17, 1
      %p81 = por %p79, %p80
      %p82 = scmp.ne.s32.totalorder %s74, %s77
      %p83 = scmp.eq.s32.totalorder %s17, 0
      %p84 = por %p82, %p83
      %p85 = scmp.ne.s32.totalorder %s74, %s77
      %p86 = scmp.eq.s32.totalorder %s22, 1
      %p87 = por %p85, %p86
      %p88 = scmp.ne.s32.totalorder %s77, %s78
      %p89 = scmp.eq.s32.totalorder %s22, 0
      %p90 = por %p88, %p89
      %p91 = scmp.ne.s32.totalorder %s77, %s78
      %p92 = scmp.eq.s32.totalorder %s23, 1
      %p93 = por %p91, %p92
      %p95 = scmp.ne.s32.totalorder %s78, %s94
      %p96 = scmp.eq.s32.totalorder %s23, 0
      %p97 = por %p95, %p96
      %s99 = sadd.s32 %s98, 1
      %p102 = scmp.eq.s32.totalorder %s17, 1
      %p103 = scmp.ne.s32.totalorder %s98, %s100
      %p104 = scmp.eq.s32.totalorder %s17, 0
      %p105 = por %p103, %p104
      %p106 = scmp.ne.s32.totalorder %s98, %s100
      %p107 = scmp.eq.s32.totalorder %s22, 1
      %p108 = por %p106, %p107
      %p109 = scmp.ne.s32.totalorder %s100, %s101
      %p110 = scmp.eq.s32.totalorder %s22, 0
      %p111 = por %p109, %p110
      %p112 = scmp.ne.s32.totalorder %s100, %s101
      %p113 = scmp.eq.s32.totalorder %s23, 1
      %p114 = por %p112, %p113
      %p116 = scmp.ne.s32.totalorder %s101, %s115
      %p117 = scmp.eq.s32.totalorder %s23, 0
      %p118 = por %p116, %p117
      %s120 = sadd.s32 %s119, 1
      %p123 = scmp.eq.s32.totalorder %s17, 1
      %p124 = scmp.ne.s32.totalorder %s119, %s121
      %p125 = scmp.eq.s32.totalorder %s17, 0
      %p126 = por %p124, %p125
      %p127 = scmp.ne.s32.totalorder %s119, %s121
      %p128 = scmp.eq.s32.totalorder %s22, 1
      %p129 = por %p127, %p128
      %p130 = scmp.ne.s32.totalorder %s121, %s122
      %p131 = scmp.eq.s32.totalorder %s22, 0
      %p132 = por %p130, %p131
      %p133 = scmp.ne.s32.totalorder %s121, %s122
      %p134 = scmp.eq.s32.totalorder %s23, 1
      %p135 = por %p133, %p134
      %p137 = scmp.ne.s32.totalorder %s122, %s136
      %p138 = scmp.eq.s32.totalorder %s23, 0
      %p139 = por %p137, %p138
      %s141 = sadd.s32 %s140, 1
      %p144 = scmp.eq.s32.totalorder %s17, 1
      %p145 = scmp.ne.s32.totalorder %s140, %s142
      %p146 = scmp.eq.s32.totalorder %s17, 0
      %p147 = por %p145, %p146
      %p148 = scmp.ne.s32.totalorder %s140, %s142
      %p149 = scmp.eq.s32.totalorder %s22, 1
      %p150 = por %p148, %p149
      %p151 = scmp.ne.s32.totalorder %s142, %s143
      %p152 = scmp.eq.s32.totalorder %s22, 0
      %p153 = por %p151, %p152
      %p154 = scmp.ne.s32.totalorder %s142, %s143
      %p155 = scmp.eq.s32.totalorder %s23, 1
      %p156 = por %p154, %p155
      %p158 = scmp.ne.s32.totalorder %s143, %s157
      %p159 = scmp.eq.s32.totalorder %s23, 0
      %p160 = por %p158, %p159
      %s162 = sadd.s32 %s161, 1
      %p165 = scmp.eq.s32.totalorder %s17, 1
      %p166 = scmp.ne.s32.totalorder %s161, %s163
      %p167 = scmp.eq.s32.totalorder %s17, 0
      %p168 = por %p166, %p167
      %p169 = scmp.ne.s32.totalorder %s161, %s163
      %p170 = scmp.eq.s32.totalorder %s22, 1
      %p171 = por %p169, %p170
      %p172 = scmp.ne.s32.totalorder %s163, %s164
      %p173 = scmp.eq.s32.totalorder %s22, 0
      %p174 = por %p172, %p173
      %p175 = scmp.ne.s32.totalorder %s163, %s164
      %p176 = scmp.eq.s32.totalorder %s23, 1
      %p177 = por %p175, %p176
      %p179 = scmp.ne.s32.totalorder %s164, %s178
      %p180 = scmp.eq.s32.totalorder %s23, 0
      %p181 = por %p179, %p180
      %s182 = ssub.s32 %s17, %s24
      %p183 = scmp.eq.s32.totalorder %s182, 0
      %s185 = sadd.s32 %s184, 1
      %s186 = scalar_select %p183, %s184, %s185
      %p189 = pneg %p183
      %p190 = scmp.eq.s32.totalorder %s17, 1
      %p191 = por %p189, %p190
      %p192 = scmp.ne.s32.totalorder %s184, %s187
      %p193 = scmp.eq.s32.totalorder %s17, 0
      %p194 = por %p192, %p193
      %p195 = scmp.ne.s32.totalorder %s184, %s187
      %p196 = scmp.eq.s32.totalorder %s22, 1
      %p197 = por %p195, %p196
      %p198 = scmp.ne.s32.totalorder %s187, %s188
      %p199 = scmp.eq.s32.totalorder %s22, 0
      %p200 = por %p198, %p199
      %p201 = scmp.ne.s32.totalorder %s187, %s188
      %p202 = scmp.eq.s32.totalorder %s23, 1
      %p203 = por %p201, %p202
      %p205 = scmp.ne.s32.totalorder %s188, %s204
      %p206 = scmp.eq.s32.totalorder %s23, 0
      %p207 = por %p205, %p206
      %p208 = scmp.le.s32.totalorder 1, %s17
      %p209 = scmp.lt.s32.totalorder %s17, 3
      %p210 = pnand %p208, %p209
      %p211 = pneg %p210
      // Predicated region
      $region9: #{tpu_custom_call.1} parent=5 // pred_check
        _
      $region10: #{tpu_custom_call.1} parent=5 // pred_check_branch
        %213 = sbr.rel (%p210) target = $region12
      $region11: #{tpu_custom_call.1} parent=5 // pred_region
        %s214 = ssub.s32 %s17, 1
        // Predicated region
        $region13: #{tpu_custom_call.1} parent=11 // pred_check
          %p215 = pneg %p38
        $region14: #{tpu_custom_call.1} parent=11 // pred_check_branch
          %217 = sbr.rel (%p215) target = $region16
        $region15: #{tpu_custom_call.1} parent=11 // pred_region
          %s219 = ssub.s32 16, 16
          %220 = vsyncadd [#allocation4], %s219
          %s222 = sshll.u32 %s0, 4
          %s223 = int_to_ptr.vmem [resolvable:$true] %s222
          %225 = dma.vmem_to_smem %s223, 16, [#allocation2], [#allocation4]
        $region16: #{tpu_custom_call.1} parent=11 // pred_fallthru
          _
        // Predicated region
        $region17: #{tpu_custom_call.1} parent=11 // pred_check
          %p226 = pneg %p111
        $region18: #{tpu_custom_call.1} parent=11 // pred_check_branch
          %228 = sbr.rel (%p226) target = $region20
        $region19: #{tpu_custom_call.1} parent=11 // pred_region
          _
        $region20: #{tpu_custom_call.1} parent=11 // pred_fallthru
          _
        // Predicated region
        $region21: #{tpu_custom_call.1} parent=11 // pred_check
          %p229 = pneg %p132
        $region22: #{tpu_custom_call.1} parent=11 // pred_check_branch
          %231 = sbr.rel (%p229) target = $region24
        $region23: #{tpu_custom_call.1} parent=11 // pred_region
          _
        $region24: #{tpu_custom_call.1} parent=11 // pred_fallthru
          _
        // Predicated region
        $region25: #{tpu_custom_call.1} parent=11 // pred_check
          %p232 = pneg %p153
        $region26: #{tpu_custom_call.1} parent=11 // pred_check_branch
          %234 = sbr.rel (%p232) target = $region28
        $region27: #{tpu_custom_call.1} parent=11 // pred_region
          _
        $region28: #{tpu_custom_call.1} parent=11 // pred_fallthru
          _
        // Predicated region
        $region29: #{tpu_custom_call.1} parent=11 // pred_check
          %p235 = pneg %p174
        $region30: #{tpu_custom_call.1} parent=11 // pred_check_branch
          %237 = sbr.rel (%p235) target = $region32
        $region31: #{tpu_custom_call.1} parent=11 // pred_region
          _
        $region32: #{tpu_custom_call.1} parent=11 // pred_fallthru
          _
      $region12: #{tpu_custom_call.1} parent=5 // pred_fallthru
        _
      %p238 = scmp.lt.s32.totalorder %s17, 2
      // Predicated region
      $region33: #{tpu_custom_call.1} parent=5 // pred_check
        %p239 = pneg %p238
      $region34: #{tpu_custom_call.1} parent=5 // pred_check_branch
        %241 = sbr.rel (%p239) target = $region36
      $region35: #{tpu_custom_call.1} parent=5 // pred_region
        // Predicated region
        $region37: #{tpu_custom_call.1} parent=35 // pred_check
          %p242 = pneg %p58
        $region38: #{tpu_custom_call.1} parent=35 // pred_check_branch
          %244 = sbr.rel (%p242) target = $region40
        $region39: #{tpu_custom_call.1} parent=35 // pred_region
          %p245 = scmp.lt.s32.totalorder %s17, 1
          %s246 = scalar_select %p245, %s17, 1
          %s247 = smul.addr %s246, 8
          %s248 = scalar_lea.vmem %s1, %s247
        $region40: #{tpu_custom_call.1} parent=35 // pred_fallthru
          _
        // Predicated region
        $region41: #{tpu_custom_call.1} parent=35 // pred_check
          %p249 = pneg %p84
        $region42: #{tpu_custom_call.1} parent=35 // pred_check_branch
          %251 = sbr.rel (%p249) target = $region44
        $region43: #{tpu_custom_call.1} parent=35 // pred_region
          %p252 = scmp.lt.s32.totalorder %s17, 1
          %s253 = scalar_select %p252, %s17, 1
          %s254 = smul.addr %s253, 7
          %s255 = smul.addr %s254, 8
          %s256 = scalar_lea.vmem %s2, %s255
        $region44: #{tpu_custom_call.1} parent=35 // pred_fallthru
          _
      $region36: #{tpu_custom_call.1} parent=5 // pred_fallthru
        _
      %p257 = scmp.le.s32.totalorder 1, %s17
      %p258 = scmp.lt.s32.totalorder %s17, 3
      %p259 = pnand %p257, %p258
      %p260 = pneg %p259
      // Predicated region
      $region45: #{tpu_custom_call.1} parent=5 // pred_check
        _
      $region46: #{tpu_custom_call.1} parent=5 // pred_check_branch
        %262 = sbr.rel (%p259) target = $region48
      $region47: #{tpu_custom_call.1} parent=5 // pred_region
        %s263 = ssub.s32 %s17, 1
        // Predicated region
        $region49: #{tpu_custom_call.1} parent=47 // pred_check
          %p264 = pneg %p38
        $region50: #{tpu_custom_call.1} parent=47 // pred_check_branch
          %266 = sbr.rel (%p264) target = $region52
        $region51: #{tpu_custom_call.1} parent=47 // pred_region
          %267 = dma.done [#allocation4], 16
        $region52: #{tpu_custom_call.1} parent=47 // pred_fallthru
          _
        %268 = sfence
        %p269 = pneg %p38
        %p270 = pneg %p35
        %p271 = scmp.lt.s32.totalorder %s22, 1
        %s272 = scalar_select %p271, %s22, 1
        %s273 = smul.addr %s272, 8
        %s274 = scalar_lea.vmem %s1, %s273
        %p275 = pneg %p64
        %p276 = pneg %p61
        %p277 = scmp.lt.s32.totalorder %s22, 1
        %s278 = scalar_select %p277, %s22, 1
        %s279 = smul.addr %s278, 7
        %s280 = smul.addr %s279, 8
        %s281 = scalar_lea.vmem %s2, %s280
        %p282 = pneg %p90
        %p283 = pneg %p87
        %p284 = pneg %p111
        %p285 = pneg %p108
        %p286 = pneg %p132
        %p287 = pneg %p129
        %p288 = pneg %p153
        %p289 = pneg %p150
        %p290 = pneg %p174
        %p291 = pneg %p171
        %p292 = pneg %p200
        %p293 = pneg %p197
        %s294 = sand.u32 %s187, 1
        %s295 = scalar_lea.sflag [#allocation3], %s294
        %s296 = sand.u32 %s187, 1
        %s297 = smul.addr %s296, 8
        %s298 = scalar_lea.vmem [#allocation5], %s297
        %p299 = scmp.lt.s32.totalorder %s22, 1
        %s300 = scalar_select %p299, %s22, 1
        %s301 = smul.addr %s300, 8
        %s302 = scalar_lea.vmem %s1, %s301
        %p303 = scmp.lt.s32.totalorder %s22, 1
        %s304 = scalar_select %p303, %s22, 1
        %s305 = smul.addr %s304, 7
        %s306 = smul.addr %s305, 8
        %s307 = scalar_lea.vmem %s2, %s306
        %v308 = vld [vmem:[%s3] sm:$0xff]
        %v309 = vld [vmem:[%s3 + $0x8] sm:$0xff]
        %v310 = vld [vmem:[%s3 + $0x10] sm:$0xff]
        %v311 = vld [vmem:[%s3 + $0x18] sm:$0xff]
        %v312 = vld [vmem:[%s4] sm:$0xff]
        %v313 = vld [vmem:[%s5] sm:$0xff]
        %v314 = vld [vmem:[%s302] sm:$0xff]
        %s315 = sld [smem:[#allocation2]]
        %s316 = sld [smem:[#allocation2 + $0x1]]
        %s317 = sld [smem:[#allocation2 + $0x2]]
        %s318 = sld [smem:[#allocation2 + $0x3]]
        %s319 = sld [smem:[#allocation2 + $0x4]]
        %s320 = sld [smem:[#allocation2 + $0x5]]
        %s321 = sld [smem:[#allocation2 + $0x6]]
        %s322 = sld [smem:[#allocation2 + $0x7]]
        %s323 = sld [smem:[#allocation2 + $0x8]]
        %s324 = sld [smem:[#allocation2 + $0x9]]
        %s325 = sld [smem:[#allocation2 + $0xa]]
        %v326 = vld [vmem:[%s6] sm:$0xff]
        %v327 = vld [vmem:[%s6 + $0x8] sm:$0xff]
        %v328 = vld [vmem:[%s6 + $0x10] sm:$0xff]
        %v329 = vld [vmem:[%s6 + $0x18] sm:$0xff]
        %v330 = vstv %s316
        %v331 = vmul.f32 %v330, %v314
        %333 = vset.pattern.permute.xlu0 0
        %334 = vperm.xlu0 %333, %v326
        %v335 = vpop.permute.xlu0 %334
        %338 = vset.pattern.permute.xlu0 0
        %339 = vperm.xlu0 %338, %v327
        %v340 = vpop.permute.xlu0 %339
        %343 = vset.pattern.permute.xlu0 0
        %344 = vperm.xlu0 %343, %v328
        %v345 = vpop.permute.xlu0 %344
        %348 = vset.pattern.permute.xlu0 0
        %349 = vperm.xlu0 %348, %v329
        %v350 = vpop.permute.xlu0 %349
        %vm352 = vcmask 64512
        %v354 = vsel %vm352, %v308, 0
        %v357 = vsel %vm352, %v309, 0
        %v360 = vsel %vm352, %v310, 0
        %v363 = vsel %vm352, %v311, 0
        %365 = vmatprep.subr.mxu0 0.0
        %366 = vmatpush1.msra.mxu0 %v331
        %367 = vmatprep.subr.mxu0 0.0
        %368 = vmatpush1.msra.mxu0 0.0
        %369 = vmatprep.subr.mxu0 0.0
        %370 = vmatpush1.msra.mxu0 0.0
        %371 = vmatprep.subr.mxu0 0.0
        %372 = vmatpush1.msra.mxu0 0.0
        %373 = vmatprep.subr.mxu0 0.0
        %374 = vmatpush1.msra.mxu0 0.0
        %375 = vmatprep.subr.mxu0 0.0
        %376 = vmatpush1.msra.mxu0 0.0
        %377 = vmatprep.subr.mxu0 0.0
        %378 = vmatpush1.msra.mxu0 0.0
        %379 = vmatprep.subr.mxu0 0.0
        %380 = vmatpush1.msra.mxu0 0.0
        %381 = vmatprep.subr.mxu0 0.0
        %382 = vmatpush1.msra.mxu0 0.0
        %383 = vmatprep.subr.mxu0 0.0
        %384 = vmatpush1.msra.mxu0 0.0
        %385 = vmatprep.subr.mxu0 0.0
        %386 = vmatpush1.msra.mxu0 0.0
        %387 = vmatprep.subr.mxu0 0.0
        %388 = vmatpush1.msra.mxu0 0.0
        %389 = vmatprep.subr.mxu0 0.0
        %390 = vmatpush1.msra.mxu0 0.0
        %391 = vmatprep.subr.mxu0 0.0
        %392 = vmatpush1.msra.mxu0 0.0
        %393 = vmatprep.subr.mxu0 0.0
        %394 = vmatpush1.msra.mxu0 0.0
        %395 = vmatprep.subr.mxu0 0.0
        %396 = vmatpush1.msra.mxu0 0.0
        %397 = vmatprep.subr.mxu0 0.0
        %398 = vmatpush1.msra.mxu0 0.0
        %399 = vmatprep.subr.mxu0 0.0
        %400 = vmatpush1.msra.mxu0 0.0
        %401 = vmatprep.subr.mxu0 0.0
        %402 = vmatpush1.msra.mxu0 0.0
        %403 = vmatprep.subr.mxu0 0.0
        %404 = vmatpush1.msra.mxu0 0.0
        %405 = vmatprep.subr.mxu0 0.0
        %406 = vmatpush1.msra.mxu0 0.0
        %407 = vmatprep.subr.mxu0 0.0
        %408 = vmatpush1.msra.mxu0 0.0
        %409 = vmatprep.subr.mxu0 0.0
        %410 = vmatpush1.msra.mxu0 0.0
        %411 = vmatprep.subr.mxu0 0.0
        %412 = vmatpush1.msra.mxu0 0.0
        %413 = vmatprep.subr.mxu0 0.0
        %414 = vmatpush1.msra.mxu0 0.0
        %415 = vmatprep.subr.mxu0 0.0
        %416 = vmatpush1.msra.mxu0 0.0
        %417 = vmatprep.subr.mxu0 0.0
        %418 = vmatpush1.msra.mxu0 0.0
        %419 = vmatprep.subr.mxu0 0.0
        %420 = vmatpush1.msra.mxu0 0.0
        %421 = vmatprep.subr.mxu0 0.0
        %422 = vmatpush1.msra.mxu0 0.0
        %423 = vmatprep.subr.mxu0 0.0
        %424 = vmatpush1.msra.mxu0 0.0
        %425 = vmatprep.subr.mxu0 0.0
        %426 = vmatpush1.msra.mxu0 0.0
        %427 = vmatprep.subr.mxu0 0.0
        %428 = vmatpush1.msra.mxu0 0.0
        %429 = vmatprep.mubr.f32.mxu0 0.0
        %430 = vmatmul.mubr.f32.gmra.mrb[0].mxu0 %v354
        %v431 = vpop.f32.mrb[0].mxu0
        %v432 = vadd.f32 %v335, %v431
        %v433 = vpop.f32.mrb[0].mxu0
        %434 = vmatprep.mubr.f32.mxu0 0.0
        %435 = vmatmul.mubr.f32.gmra.mrb[0].mxu0 %v357
        %v436 = vpop.f32.mrb[0].mxu0
        %v437 = vadd.f32 %v340, %v436
        %v438 = vpop.f32.mrb[0].mxu0
        %439 = vmatprep.mubr.f32.mxu0 0.0
        %440 = vmatmul.mubr.f32.gmra.mrb[0].mxu0 %v360
        %v441 = vpop.f32.mrb[0].mxu0
        %v442 = vadd.f32 %v345, %v441
        %v443 = vpop.f32.mrb[0].mxu0
        %444 = vmatprep.mubr.f32.mxu0 0.0
        %445 = vmatmul.mubr.f32.gmra.mrb[0].mxu0 %v363
        %v446 = vpop.f32.mrb[0].mxu0
        %v447 = vadd.f32 %v350, %v446
        %v448 = vpop.f32.mrb[0].mxu0
        %449 = vdwg.mxu0
        %v450 = vmax.f32 %v432, 0.0
        %v451 = vmax.f32 %v437, 0.0
        %v452 = vmax.f32 %v442, 0.0
        %v453 = vmax.f32 %v447, 0.0
        %455 = vset.pattern.permute.xlu0 0
        %456 = vperm.xlu0 %455, %v313
        %v457 = vpop.permute.xlu0 %456
        %vm459 = vcmask 261120
        %v461 = vsel %vm459, %v312, 0
        %463 = vmatprep.subr.mxu0 0.0
        %464 = vmatpush1.msra.mxu0 %v450
        %465 = vmatprep.subr.mxu0 0.0
        %466 = vmatpush1.msra.mxu0 %v451
        %467 = vmatprep.subr.mxu0 0.0
        %468 = vmatpush1.msra.mxu0 %v452
        %469 = vmatprep.subr.mxu0 0.0
        %470 = vmatpush1.msra.mxu0 %v453
        %471 = vmatprep.subr.mxu0 0.0
        %472 = vmatpush1.msra.mxu0 0.0
        %473 = vmatprep.subr.mxu0 0.0
        %474 = vmatpush1.msra.mxu0 0.0
        %475 = vmatprep.subr.mxu0 0.0
        %476 = vmatpush1.msra.mxu0 0.0
        %477 = vmatprep.subr.mxu0 0.0
        %478 = vmatpush1.msra.mxu0 0.0
        %479 = vmatprep.subr.mxu0 0.0
        %480 = vmatpush1.msra.mxu0 0.0
        %481 = vmatprep.subr.mxu0 0.0
        %482 = vmatpush1.msra.mxu0 0.0
        %483 = vmatprep.subr.mxu0 0.0
        %484 = vmatpush1.msra.mxu0 0.0
        %485 = vmatprep.subr.mxu0 0.0
        %486 = vmatpush1.msra.mxu0 0.0
        %487 = vmatprep.subr.mxu0 0.0
        %488 = vmatpush1.msra.mxu0 0.0
        %489 = vmatprep.subr.mxu0 0.0
        %490 = vmatpush1.msra.mxu0 0.0
        %491 = vmatprep.subr.mxu0 0.0
        %492 = vmatpush1.msra.mxu0 0.0
        %493 = vmatprep.subr.mxu0 0.0
        %494 = vmatpush1.msra.mxu0 0.0
        %495 = vmatprep.subr.mxu0 0.0
        %496 = vmatpush1.msra.mxu0 0.0
        %497 = vmatprep.subr.mxu0 0.0
        %498 = vmatpush1.msra.mxu0 0.0
        %499 = vmatprep.subr.mxu0 0.0
        %500 = vmatpush1.msra.mxu0 0.0
        %501 = vmatprep.subr.mxu0 0.0
        %502 = vmatpush1.msra.mxu0 0.0
        %503 = vmatprep.subr.mxu0 0.0
        %504 = vmatpush1.msra.mxu0 0.0
        %505 = vmatprep.subr.mxu0 0.0
        %506 = vmatpush1.msra.mxu0 0.0
        %507 = vmatprep.subr.mxu0 0.0
        %508 = vmatpush1.msra.mxu0 0.0
        %509 = vmatprep.subr.mxu0 0.0
        %510 = vmatpush1.msra.mxu0 0.0
        %511 = vmatprep.subr.mxu0 0.0
        %512 = vmatpush1.msra.mxu0 0.0
        %513 = vmatprep.subr.mxu0 0.0
        %514 = vmatpush1.msra.mxu0 0.0
        %515 = vmatprep.subr.mxu0 0.0
        %516 = vmatpush1.msra.mxu0 0.0
        %517 = vmatprep.subr.mxu0 0.0
        %518 = vmatpush1.msra.mxu0 0.0
        %519 = vmatprep.subr.mxu0 0.0
        %520 = vmatpush1.msra.mxu0 0.0
        %521 = vmatprep.subr.mxu0 0.0
        %522 = vmatpush1.msra.mxu0 0.0
        %523 = vmatprep.subr.mxu0 0.0
        %524 = vmatpush1.msra.mxu0 0.0
        %525 = vmatprep.subr.mxu0 0.0
        %526 = vmatpush1.msra.mxu0 0.0
        %527 = vmatprep.mubr.f32.mxu0 0.0
        %528 = vmatmul.mubr.f32.gmra.mrb[0].mxu0 %v461
        %v529 = vpop.f32.mrb[0].mxu0
        %v530 = vadd.f32 %v457, %v529
        %v531 = vpop.f32.mrb[0].mxu0
        %532 = vdwg.mxu0
        %v533 = vstv %s315
        %v534 = vmul.f32 %v533, %v314
        %v535 = vstv %s317
        %v536 = vmul.f32 %v535, %v530
        %v537 = vadd.f32 %v534, %v536
        %v538 = vsub.f32 %v314, %v537
        %v539 = vstv %s321
        %v540 = vmul.f32 %v538, %v539
        %v541 = vstv %s323
        %v542 = vmul.f32 %v540, %v541
        %v543 = vadd.f32 %v314, %v542
        %s544 = scalar_lea.vmem %s6, 32
        %v545 = vld [vmem:[%s544] sm:$0xff]
        %v546 = vld [vmem:[%s544 + $0x8] sm:$0xff]
        %v547 = vld [vmem:[%s544 + $0x10] sm:$0xff]
        %v548 = vld [vmem:[%s544 + $0x18] sm:$0xff]
        %v549 = vstv %s319
        %v550 = vmul.f32 %v549, %v543
        %552 = vset.pattern.permute.xlu0 0
        %553 = vperm.xlu0 %552, %v545
        %v554 = vpop.permute.xlu0 %553
        %557 = vset.pattern.permute.xlu0 0
        %558 = vperm.xlu0 %557, %v546
        %v559 = vpop.permute.xlu0 %558
        %562 = vset.pattern.permute.xlu0 0
        %563 = vperm.xlu0 %562, %v547
        %v564 = vpop.permute.xlu0 %563
        %567 = vset.pattern.permute.xlu0 0
        %568 = vperm.xlu0 %567, %v548
        %v569 = vpop.permute.xlu0 %568
        %571 = vmatprep.subr.mxu0 0.0
        %572 = vmatpush1.msra.mxu0 %v550
        %573 = vmatprep.subr.mxu0 0.0
        %574 = vmatpush1.msra.mxu0 0.0
        %575 = vmatprep.subr.mxu0 0.0
        %576 = vmatpush1.msra.mxu0 0.0
        %577 = vmatprep.subr.mxu0 0.0
        %578 = vmatpush1.msra.mxu0 0.0
        %579 = vmatprep.subr.mxu0 0.0
        %580 = vmatpush1.msra.mxu0 0.0
        %581 = vmatprep.subr.mxu0 0.0
        %582 = vmatpush1.msra.mxu0 0.0
        %583 = vmatprep.subr.mxu0 0.0
        %584 = vmatpush1.msra.mxu0 0.0
        %585 = vmatprep.subr.mxu0 0.0
        %586 = vmatpush1.msra.mxu0 0.0
        %587 = vmatprep.subr.mxu0 0.0
        %588 = vmatpush1.msra.mxu0 0.0
        %589 = vmatprep.subr.mxu0 0.0
        %590 = vmatpush1.msra.mxu0 0.0
        %591 = vmatprep.subr.mxu0 0.0
        %592 = vmatpush1.msra.mxu0 0.0
        %593 = vmatprep.subr.mxu0 0.0
        %594 = vmatpush1.msra.mxu0 0.0
        %595 = vmatprep.subr.mxu0 0.0
        %596 = vmatpush1.msra.mxu0 0.0
        %597 = vmatprep.subr.mxu0 0.0
        %598 = vmatpush1.msra.mxu0 0.0
        %599 = vmatprep.subr.mxu0 0.0
        %600 = vmatpush1.msra.mxu0 0.0
        %601 = vmatprep.subr.mxu0 0.0
        %602 = vmatpush1.msra.mxu0 0.0
        %603 = vmatprep.subr.mxu0 0.0
        %604 = vmatpush1.msra.mxu0 0.0
        %605 = vmatprep.subr.mxu0 0.0
        %606 = vmatpush1.msra.mxu0 0.0
        %607 = vmatprep.subr.mxu0 0.0
        %608 = vmatpush1.msra.mxu0 0.0
        %609 = vmatprep.subr.mxu0 0.0
        %610 = vmatpush1.msra.mxu0 0.0
        %611 = vmatprep.subr.mxu0 0.0
        %612 = vmatpush1.msra.mxu0 0.0
        %613 = vmatprep.subr.mxu0 0.0
        %614 = vmatpush1.msra.mxu0 0.0
        %615 = vmatprep.subr.mxu0 0.0
        %616 = vmatpush1.msra.mxu0 0.0
        %617 = vmatprep.subr.mxu0 0.0
        %618 = vmatpush1.msra.mxu0 0.0
        %619 = vmatprep.subr.mxu0 0.0
        %620 = vmatpush1.msra.mxu0 0.0
        %621 = vmatprep.subr.mxu0 0.0
        %622 = vmatpush1.msra.mxu0 0.0
        %623 = vmatprep.subr.mxu0 0.0
        %624 = vmatpush1.msra.mxu0 0.0
        %625 = vmatprep.subr.mxu0 0.0
        %626 = vmatpush1.msra.mxu0 0.0
        %627 = vmatprep.subr.mxu0 0.0
        %628 = vmatpush1.msra.mxu0 0.0
        %629 = vmatprep.subr.mxu0 0.0
        %630 = vmatpush1.msra.mxu0 0.0
        %631 = vmatprep.subr.mxu0 0.0
        %632 = vmatpush1.msra.mxu0 0.0
        %633 = vmatprep.subr.mxu0 0.0
        %634 = vmatpush1.msra.mxu0 0.0
        %635 = vmatprep.mubr.f32.mxu0 0.0
        %636 = vmatmul.mubr.f32.gmra.mrb[0].mxu0 %v354
        %v637 = vpop.f32.mrb[0].mxu0
        %v638 = vadd.f32 %v554, %v637
        %v639 = vpop.f32.mrb[0].mxu0
        %640 = vmatprep.mubr.f32.mxu0 0.0
        %641 = vmatmul.mubr.f32.gmra.mrb[0].mxu0 %v357
        %v642 = vpop.f32.mrb[0].mxu0
        %v643 = vadd.f32 %v559, %v642
        %v644 = vpop.f32.mrb[0].mxu0
        %645 = vmatprep.mubr.f32.mxu0 0.0
        %646 = vmatmul.mubr.f32.gmra.mrb[0].mxu0 %v360
        %v647 = vpop.f32.mrb[0].mxu0
        %v648 = vadd.f32 %v564, %v647
        %v649 = vpop.f32.mrb[0].mxu0
        %650 = vmatprep.mubr.f32.mxu0 0.0
        %651 = vmatmul.mubr.f32.gmra.mrb[0].mxu0 %v363
        %v652 = vpop.f32.mrb[0].mxu0
        %v653 = vadd.f32 %v569, %v652
        %v654 = vpop.f32.mrb[0].mxu0
        %655 = vdwg.mxu0
        %v656 = vmax.f32 %v638, 0.0
        %v657 = vmax.f32 %v643, 0.0
        %v658 = vmax.f32 %v648, 0.0
        %v659 = vmax.f32 %v653, 0.0
        %660 = vmatprep.subr.mxu0 0.0
        %661 = vmatpush1.msra.mxu0 %v656
        %662 = vmatprep.subr.mxu0 0.0
        %663 = vmatpush1.msra.mxu0 %v657
        %664 = vmatprep.subr.mxu0 0.0
        %665 = vmatpush1.msra.mxu0 %v658
        %666 = vmatprep.subr.mxu0 0.0
        %667 = vmatpush1.msra.mxu0 %v659
        %668 = vmatprep.subr.mxu0 0.0
        %669 = vmatpush1.msra.mxu0 0.0
        %670 = vmatprep.subr.mxu0 0.0
        %671 = vmatpush1.msra.mxu0 0.0
        %672 = vmatprep.subr.mxu0 0.0
        %673 = vmatpush1.msra.mxu0 0.0
        %674 = vmatprep.subr.mxu0 0.0
        %675 = vmatpush1.msra.mxu0 0.0
        %676 = vmatprep.subr.mxu0 0.0
        %677 = vmatpush1.msra.mxu0 0.0
        %678 = vmatprep.subr.mxu0 0.0
        %679 = vmatpush1.msra.mxu0 0.0
        %680 = vmatprep.subr.mxu0 0.0
        %681 = vmatpush1.msra.mxu0 0.0
        %682 = vmatprep.subr.mxu0 0.0
        %683 = vmatpush1.msra.mxu0 0.0
        %684 = vmatprep.subr.mxu0 0.0
        %685 = vmatpush1.msra.mxu0 0.0
        %686 = vmatprep.subr.mxu0 0.0
        %687 = vmatpush1.msra.mxu0 0.0
        %688 = vmatprep.subr.mxu0 0.0
        %689 = vmatpush1.msra.mxu0 0.0
        %690 = vmatprep.subr.mxu0 0.0
        %691 = vmatpush1.msra.mxu0 0.0
        %692 = vmatprep.subr.mxu0 0.0
        %693 = vmatpush1.msra.mxu0 0.0
        %694 = vmatprep.subr.mxu0 0.0
        %695 = vmatpush1.msra.mxu0 0.0
        %696 = vmatprep.subr.mxu0 0.0
        %697 = vmatpush1.msra.mxu0 0.0
        %698 = vmatprep.subr.mxu0 0.0
        %699 = vmatpush1.msra.mxu0 0.0
        %700 = vmatprep.subr.mxu0 0.0
        %701 = vmatpush1.msra.mxu0 0.0
        %702 = vmatprep.subr.mxu0 0.0
        %703 = vmatpush1.msra.mxu0 0.0
        %704 = vmatprep.subr.mxu0 0.0
        %705 = vmatpush1.msra.mxu0 0.0
        %706 = vmatprep.subr.mxu0 0.0
        %707 = vmatpush1.msra.mxu0 0.0
        %708 = vmatprep.subr.mxu0 0.0
        %709 = vmatpush1.msra.mxu0 0.0
        %710 = vmatprep.subr.mxu0 0.0
        %711 = vmatpush1.msra.mxu0 0.0
        %712 = vmatprep.subr.mxu0 0.0
        %713 = vmatpush1.msra.mxu0 0.0
        %714 = vmatprep.subr.mxu0 0.0
        %715 = vmatpush1.msra.mxu0 0.0
        %716 = vmatprep.subr.mxu0 0.0
        %717 = vmatpush1.msra.mxu0 0.0
        %718 = vmatprep.subr.mxu0 0.0
        %719 = vmatpush1.msra.mxu0 0.0
        %720 = vmatprep.subr.mxu0 0.0
        %721 = vmatpush1.msra.mxu0 0.0
        %722 = vmatprep.subr.mxu0 0.0
        %723 = vmatpush1.msra.mxu0 0.0
        %724 = vmatprep.mubr.f32.mxu0 0.0
        %725 = vmatmul.mubr.f32.gmra.mrb[0].mxu0 %v461
        %v726 = vpop.f32.mrb[0].mxu0
        %v727 = vadd.f32 %v457, %v726
        %v728 = vpop.f32.mrb[0].mxu0
        %729 = vdwg.mxu0
        %v730 = vstv %s318
        %v731 = vmul.f32 %v730, %v543
        %v732 = vstv %s320
        %v733 = vmul.f32 %v732, %v727
        %v734 = vadd.f32 %v731, %v733
        %v735 = vsub.f32 %v543, %v734
        %v736 = vstv %s322
        %v737 = vmul.f32 %v735, %v736
        %v738 = vstv %s324
        %v739 = vmul.f32 %v737, %v738
        %v740 = vadd.f32 %v314, %v739
        %v741 = vld [vmem:[%s307] sm:$0xff]
        %v742 = vstv %s325
        %v743 = vmul.f32 %v741, %v742
        %v744 = vadd.f32 %v740, %v743
        %s745 = sld [smem:[#allocation2 + $0xb]]
        %s746 = sld [smem:[#allocation2 + $0xc]]
        %s747 = sld [smem:[#allocation2 + $0xd]]
        %s748 = sld [smem:[#allocation2 + $0xe]]
        %s749 = sld [smem:[#allocation2 + $0xf]]
        %s750 = sld [smem:[#allocation2 + $0x10]]
        %s751 = sld [smem:[#allocation2 + $0x11]]
        %s752 = sld [smem:[#allocation2 + $0x12]]
        %s753 = sld [smem:[#allocation2 + $0x13]]
        %s754 = sld [smem:[#allocation2 + $0x14]]
        %s755 = sld [smem:[#allocation2 + $0x15]]
        %s756 = scalar_lea.vmem %s6, 64
        %v757 = vld [vmem:[%s756] sm:$0xff]
        %v758 = vld [vmem:[%s756 + $0x8] sm:$0xff]
        %v759 = vld [vmem:[%s756 + $0x10] sm:$0xff]
        %v760 = vld [vmem:[%s756 + $0x18] sm:$0xff]
        %v761 = vstv %s746
        %v762 = vmul.f32 %v761, %v744
        %764 = vset.pattern.permute.xlu0 0
        %765 = vperm.xlu0 %764, %v757
        %v766 = vpop.permute.xlu0 %765
        %769 = vset.pattern.permute.xlu0 0
        %770 = vperm.xlu0 %769, %v758
        %v771 = vpop.permute.xlu0 %770
        %774 = vset.pattern.permute.xlu0 0
        %775 = vperm.xlu0 %774, %v759
        %v776 = vpop.permute.xlu0 %775
        %779 = vset.pattern.permute.xlu0 0
        %780 = vperm.xlu0 %779, %v760
        %v781 = vpop.permute.xlu0 %780
        %783 = vmatprep.subr.mxu0 0.0
        %784 = vmatpush1.msra.mxu0 %v762
        %785 = vmatprep.subr.mxu0 0.0
        %786 = vmatpush1.msra.mxu0 0.0
        %787 = vmatprep.subr.mxu0 0.0
        %788 = vmatpush1.msra.mxu0 0.0
        %789 = vmatprep.subr.mxu0 0.0
        %790 = vmatpush1.msra.mxu0 0.0
        %791 = vmatprep.subr.mxu0 0.0
        %792 = vmatpush1.msra.mxu0 0.0
        %793 = vmatprep.subr.mxu0 0.0
        %794 = vmatpush1.msra.mxu0 0.0
        %795 = vmatprep.subr.mxu0 0.0
        %796 = vmatpush1.msra.mxu0 0.0
        %797 = vmatprep.subr.mxu0 0.0
        %798 = vmatpush1.msra.mxu0 0.0
        %799 = vmatprep.subr.mxu0 0.0
        %800 = vmatpush1.msra.mxu0 0.0
        %801 = vmatprep.subr.mxu0 0.0
        %802 = vmatpush1.msra.mxu0 0.0
        %803 = vmatprep.subr.mxu0 0.0
        %804 = vmatpush1.msra.mxu0 0.0
        %805 = vmatprep.subr.mxu0 0.0
        %806 = vmatpush1.msra.mxu0 0.0
        %807 = vmatprep.subr.mxu0 0.0
        %808 = vmatpush1.msra.mxu0 0.0
        %809 = vmatprep.subr.mxu0 0.0
        %810 = vmatpush1.msra.mxu0 0.0
        %811 = vmatprep.subr.mxu0 0.0
        %812 = vmatpush1.msra.mxu0 0.0
        %813 = vmatprep.subr.mxu0 0.0
        %814 = vmatpush1.msra.mxu0 0.0
        %815 = vmatprep.subr.mxu0 0.0
        %816 = vmatpush1.msra.mxu0 0.0
        %817 = vmatprep.subr.mxu0 0.0
        %818 = vmatpush1.msra.mxu0 0.0
        %819 = vmatprep.subr.mxu0 0.0
        %820 = vmatpush1.msra.mxu0 0.0
        %821 = vmatprep.subr.mxu0 0.0
        %822 = vmatpush1.msra.mxu0 0.0
        %823 = vmatprep.subr.mxu0 0.0
        %824 = vmatpush1.msra.mxu0 0.0
        %825 = vmatprep.subr.mxu0 0.0
        %826 = vmatpush1.msra.mxu0 0.0
        %827 = vmatprep.subr.mxu0 0.0
        %828 = vmatpush1.msra.mxu0 0.0
        %829 = vmatprep.subr.mxu0 0.0
        %830 = vmatpush1.msra.mxu0 0.0
        %831 = vmatprep.subr.mxu0 0.0
        %832 = vmatpush1.msra.mxu0 0.0
        %833 = vmatprep.subr.mxu0 0.0
        %834 = vmatpush1.msra.mxu0 0.0
        %835 = vmatprep.subr.mxu0 0.0
        %836 = vmatpush1.msra.mxu0 0.0
        %837 = vmatprep.subr.mxu0 0.0
        %838 = vmatpush1.msra.mxu0 0.0
        %839 = vmatprep.subr.mxu0 0.0
        %840 = vmatpush1.msra.mxu0 0.0
        %841 = vmatprep.subr.mxu0 0.0
        %842 = vmatpush1.msra.mxu0 0.0
        %843 = vmatprep.subr.mxu0 0.0
        %844 = vmatpush1.msra.mxu0 0.0
        %845 = vmatprep.subr.mxu0 0.0
        %846 = vmatpush1.msra.mxu0 0.0
        %847 = vmatprep.mubr.f32.mxu0 0.0
        %848 = vmatmul.mubr.f32.gmra.mrb[0].mxu0 %v354
        %v849 = vpop.f32.mrb[0].mxu0
        %v850 = vadd.f32 %v766, %v849
        %v851 = vpop.f32.mrb[0].mxu0
        %852 = vmatprep.mubr.f32.mxu0 0.0
        %853 = vmatmul.mubr.f32.gmra.mrb[0].mxu0 %v357
        %v854 = vpop.f32.mrb[0].mxu0
        %v855 = vadd.f32 %v771, %v854
        %v856 = vpop.f32.mrb[0].mxu0
        %857 = vmatprep.mubr.f32.mxu0 0.0
        %858 = vmatmul.mubr.f32.gmra.mrb[0].mxu0 %v360
        %v859 = vpop.f32.mrb[0].mxu0
        %v860 = vadd.f32 %v776, %v859
        %v861 = vpop.f32.mrb[0].mxu0
        %862 = vmatprep.mubr.f32.mxu0 0.0
        %863 = vmatmul.mubr.f32.gmra.mrb[0].mxu0 %v363
        %v864 = vpop.f32.mrb[0].mxu0
        %v865 = vadd.f32 %v781, %v864
        %v866 = vpop.f32.mrb[0].mxu0
        %867 = vdwg.mxu0
        %v868 = vmax.f32 %v850, 0.0
        %v869 = vmax.f32 %v855, 0.0
        %v870 = vmax.f32 %v860, 0.0
        %v871 = vmax.f32 %v865, 0.0
        %872 = vmatprep.subr.mxu0 0.0
        %873 = vmatpush1.msra.mxu0 %v868
        %874 = vmatprep.subr.mxu0 0.0
        %875 = vmatpush1.msra.mxu0 %v869
        %876 = vmatprep.subr.mxu0 0.0
        %877 = vmatpush1.msra.mxu0 %v870
        %878 = vmatprep.subr.mxu0 0.0
        %879 = vmatpush1.msra.mxu0 %v871
        %880 = vmatprep.subr.mxu0 0.0
        %881 = vmatpush1.msra.mxu0 0.0
        %882 = vmatprep.subr.mxu0 0.0
        %883 = vmatpush1.msra.mxu0 0.0
        %884 = vmatprep.subr.mxu0 0.0
        %885 = vmatpush1.msra.mxu0 0.0
        %886 = vmatprep.subr.mxu0 0.0
        %887 = vmatpush1.msra.mxu0 0.0
        %888 = vmatprep.subr.mxu0 0.0
        %889 = vmatpush1.msra.mxu0 0.0
        %890 = vmatprep.subr.mxu0 0.0
        %891 = vmatpush1.msra.mxu0 0.0
        %892 = vmatprep.subr.mxu0 0.0
        %893 = vmatpush1.msra.mxu0 0.0
        %894 = vmatprep.subr.mxu0 0.0
        %895 = vmatpush1.msra.mxu0 0.0
        %896 = vmatprep.subr.mxu0 0.0
        %897 = vmatpush1.msra.mxu0 0.0
        %898 = vmatprep.subr.mxu0 0.0
        %899 = vmatpush1.msra.mxu0 0.0
        %900 = vmatprep.subr.mxu0 0.0
        %901 = vmatpush1.msra.mxu0 0.0
        %902 = vmatprep.subr.mxu0 0.0
        %903 = vmatpush1.msra.mxu0 0.0
        %904 = vmatprep.subr.mxu0 0.0
        %905 = vmatpush1.msra.mxu0 0.0
        %906 = vmatprep.subr.mxu0 0.0
        %907 = vmatpush1.msra.mxu0 0.0
        %908 = vmatprep.subr.mxu0 0.0
        %909 = vmatpush1.msra.mxu0 0.0
        %910 = vmatprep.subr.mxu0 0.0
        %911 = vmatpush1.msra.mxu0 0.0
        %912 = vmatprep.subr.mxu0 0.0
        %913 = vmatpush1.msra.mxu0 0.0
        %914 = vmatprep.subr.mxu0 0.0
        %915 = vmatpush1.msra.mxu0 0.0
        %916 = vmatprep.subr.mxu0 0.0
        %917 = vmatpush1.msra.mxu0 0.0
        %918 = vmatprep.subr.mxu0 0.0
        %919 = vmatpush1.msra.mxu0 0.0
        %920 = vmatprep.subr.mxu0 0.0
        %921 = vmatpush1.msra.mxu0 0.0
        %922 = vmatprep.subr.mxu0 0.0
        %923 = vmatpush1.msra.mxu0 0.0
        %924 = vmatprep.subr.mxu0 0.0
        %925 = vmatpush1.msra.mxu0 0.0
        %926 = vmatprep.subr.mxu0 0.0
        %927 = vmatpush1.msra.mxu0 0.0
        %928 = vmatprep.subr.mxu0 0.0
        %929 = vmatpush1.msra.mxu0 0.0
        %930 = vmatprep.subr.mxu0 0.0
        %931 = vmatpush1.msra.mxu0 0.0
        %932 = vmatprep.subr.mxu0 0.0
        %933 = vmatpush1.msra.mxu0 0.0
        %934 = vmatprep.subr.mxu0 0.0
        %935 = vmatpush1.msra.mxu0 0.0
        %936 = vmatprep.mubr.f32.mxu0 0.0
        %937 = vmatmul.mubr.f32.gmra.mrb[0].mxu0 %v461
        %v938 = vpop.f32.mrb[0].mxu0
        %v939 = vadd.f32 %v457, %v938
        %v940 = vpop.f32.mrb[0].mxu0
        %941 = vdwg.mxu0
        %v942 = vstv %s745
        %v943 = vmul.f32 %v942, %v744
        %v944 = vstv %s747
        %v945 = vmul.f32 %v944, %v939
        %v946 = vadd.f32 %v943, %v945
        %v947 = vsub.f32 %v744, %v946
        %v948 = vstv %s751
        %v949 = vmul.f32 %v947, %v948
        %v950 = vstv %s753
        %v951 = vmul.f32 %v949, %v950
        %v952 = vadd.f32 %v744, %v951
        %s953 = scalar_lea.vmem %s6, 96
        %v954 = vld [vmem:[%s953] sm:$0xff]
        %v955 = vld [vmem:[%s953 + $0x8] sm:$0xff]
        %v956 = vld [vmem:[%s953 + $0x10] sm:$0xff]
        %v957 = vld [vmem:[%s953 + $0x18] sm:$0xff]
        %v958 = vstv %s749
        %v959 = vmul.f32 %v958, %v952
        %961 = vset.pattern.permute.xlu0 0
        %962 = vperm.xlu0 %961, %v954
        %v963 = vpop.permute.xlu0 %962
        %966 = vset.pattern.permute.xlu0 0
        %967 = vperm.xlu0 %966, %v955
        %v968 = vpop.permute.xlu0 %967
        %971 = vset.pattern.permute.xlu0 0
        %972 = vperm.xlu0 %971, %v956
        %v973 = vpop.permute.xlu0 %972
        %976 = vset.pattern.permute.xlu0 0
        %977 = vperm.xlu0 %976, %v957
        %v978 = vpop.permute.xlu0 %977
        %980 = vmatprep.subr.mxu0 0.0
        %981 = vmatpush1.msra.mxu0 %v959
        %982 = vmatprep.subr.mxu0 0.0
        %983 = vmatpush1.msra.mxu0 0.0
        %984 = vmatprep.subr.mxu0 0.0
        %985 = vmatpush1.msra.mxu0 0.0
        %986 = vmatprep.subr.mxu0 0.0
        %987 = vmatpush1.msra.mxu0 0.0
        %988 = vmatprep.subr.mxu0 0.0
        %989 = vmatpush1.msra.mxu0 0.0
        %990 = vmatprep.subr.mxu0 0.0
        %991 = vmatpush1.msra.mxu0 0.0
        %992 = vmatprep.subr.mxu0 0.0
        %993 = vmatpush1.msra.mxu0 0.0
        %994 = vmatprep.subr.mxu0 0.0
        %995 = vmatpush1.msra.mxu0 0.0
        %996 = vmatprep.subr.mxu0 0.0
        %997 = vmatpush1.msra.mxu0 0.0
        %998 = vmatprep.subr.mxu0 0.0
        %999 = vmatpush1.msra.mxu0 0.0
        %1000 = vmatprep.subr.mxu0 0.0
        %1001 = vmatpush1.msra.mxu0 0.0
        %1002 = vmatprep.subr.mxu0 0.0
        %1003 = vmatpush1.msra.mxu0 0.0
        %1004 = vmatprep.subr.mxu0 0.0
        %1005 = vmatpush1.msra.mxu0 0.0
        %1006 = vmatprep.subr.mxu0 0.0
        %1007 = vmatpush1.msra.mxu0 0.0
        %1008 = vmatprep.subr.mxu0 0.0
        %1009 = vmatpush1.msra.mxu0 0.0
        %1010 = vmatprep.subr.mxu0 0.0
        %1011 = vmatpush1.msra.mxu0 0.0
        %1012 = vmatprep.subr.mxu0 0.0
        %1013 = vmatpush1.msra.mxu0 0.0
        %1014 = vmatprep.subr.mxu0 0.0
        %1015 = vmatpush1.msra.mxu0 0.0
        %1016 = vmatprep.subr.mxu0 0.0
        %1017 = vmatpush1.msra.mxu0 0.0
        %1018 = vmatprep.subr.mxu0 0.0
        %1019 = vmatpush1.msra.mxu0 0.0
        %1020 = vmatprep.subr.mxu0 0.0
        %1021 = vmatpush1.msra.mxu0 0.0
        %1022 = vmatprep.subr.mxu0 0.0
        %1023 = vmatpush1.msra.mxu0 0.0
        %1024 = vmatprep.subr.mxu0 0.0
        %1025 = vmatpush1.msra.mxu0 0.0
        %1026 = vmatprep.subr.mxu0 0.0
        %1027 = vmatpush1.msra.mxu0 0.0
        %1028 = vmatprep.subr.mxu0 0.0
        %1029 = vmatpush1.msra.mxu0 0.0
        %1030 = vmatprep.subr.mxu0 0.0
        %1031 = vmatpush1.msra.mxu0 0.0
        %1032 = vmatprep.subr.mxu0 0.0
        %1033 = vmatpush1.msra.mxu0 0.0
        %1034 = vmatprep.subr.mxu0 0.0
        %1035 = vmatpush1.msra.mxu0 0.0
        %1036 = vmatprep.subr.mxu0 0.0
        %1037 = vmatpush1.msra.mxu0 0.0
        %1038 = vmatprep.subr.mxu0 0.0
        %1039 = vmatpush1.msra.mxu0 0.0
        %1040 = vmatprep.subr.mxu0 0.0
        %1041 = vmatpush1.msra.mxu0 0.0
        %1042 = vmatprep.subr.mxu0 0.0
        %1043 = vmatpush1.msra.mxu0 0.0
        %1044 = vmatprep.mubr.f32.mxu0 0.0
        %1045 = vmatmul.mubr.f32.gmra.mrb[0].mxu0 %v354
        %v1046 = vpop.f32.mrb[0].mxu0
        %v1047 = vadd.f32 %v963, %v1046
        %v1048 = vpop.f32.mrb[0].mxu0
        %1049 = vmatprep.mubr.f32.mxu0 0.0
        %1050 = vmatmul.mubr.f32.gmra.mrb[0].mxu0 %v357
        %v1051 = vpop.f32.mrb[0].mxu0
        %v1052 = vadd.f32 %v968, %v1051
        %v1053 = vpop.f32.mrb[0].mxu0
        %1054 = vmatprep.mubr.f32.mxu0 0.0
        %1055 = vmatmul.mubr.f32.gmra.mrb[0].mxu0 %v360
        %v1056 = vpop.f32.mrb[0].mxu0
        %v1057 = vadd.f32 %v973, %v1056
        %v1058 = vpop.f32.mrb[0].mxu0
        %1059 = vmatprep.mubr.f32.mxu0 0.0
        %1060 = vmatmul.mubr.f32.gmra.mrb[0].mxu0 %v363
        %v1061 = vpop.f32.mrb[0].mxu0
        %v1062 = vadd.f32 %v978, %v1061
        %v1063 = vpop.f32.mrb[0].mxu0
        %1064 = vdwg.mxu0
        %v1065 = vmax.f32 %v1047, 0.0
        %v1066 = vmax.f32 %v1052, 0.0
        %v1067 = vmax.f32 %v1057, 0.0
        %v1068 = vmax.f32 %v1062, 0.0
        %1069 = vmatprep.subr.mxu0 0.0
        %1070 = vmatpush1.msra.mxu0 %v1065
        %1071 = vmatprep.subr.mxu0 0.0
        %1072 = vmatpush1.msra.mxu0 %v1066
        %1073 = vmatprep.subr.mxu0 0.0
        %1074 = vmatpush1.msra.mxu0 %v1067
        %1075 = vmatprep.subr.mxu0 0.0
        %1076 = vmatpush1.msra.mxu0 %v1068
        %1077 = vmatprep.subr.mxu0 0.0
        %1078 = vmatpush1.msra.mxu0 0.0
        %1079 = vmatprep.subr.mxu0 0.0
        %1080 = vmatpush1.msra.mxu0 0.0
        %1081 = vmatprep.subr.mxu0 0.0
        %1082 = vmatpush1.msra.mxu0 0.0
        %1083 = vmatprep.subr.mxu0 0.0
        %1084 = vmatpush1.msra.mxu0 0.0
        %1085 = vmatprep.subr.mxu0 0.0
        %1086 = vmatpush1.msra.mxu0 0.0
        %1087 = vmatprep.subr.mxu0 0.0
        %1088 = vmatpush1.msra.mxu0 0.0
        %1089 = vmatprep.subr.mxu0 0.0
        %1090 = vmatpush1.msra.mxu0 0.0
        %1091 = vmatprep.subr.mxu0 0.0
        %1092 = vmatpush1.msra.mxu0 0.0
        %1093 = vmatprep.subr.mxu0 0.0
        %1094 = vmatpush1.msra.mxu0 0.0
        %1095 = vmatprep.subr.mxu0 0.0
        %1096 = vmatpush1.msra.mxu0 0.0
        %1097 = vmatprep.subr.mxu0 0.0
        %1098 = vmatpush1.msra.mxu0 0.0
        %1099 = vmatprep.subr.mxu0 0.0
        %1100 = vmatpush1.msra.mxu0 0.0
        %1101 = vmatprep.subr.mxu0 0.0
        %1102 = vmatpush1.msra.mxu0 0.0
        %1103 = vmatprep.subr.mxu0 0.0
        %1104 = vmatpush1.msra.mxu0 0.0
        %1105 = vmatprep.subr.mxu0 0.0
        %1106 = vmatpush1.msra.mxu0 0.0
        %1107 = vmatprep.subr.mxu0 0.0
        %1108 = vmatpush1.msra.mxu0 0.0
        %1109 = vmatprep.subr.mxu0 0.0
        %1110 = vmatpush1.msra.mxu0 0.0
        %1111 = vmatprep.subr.mxu0 0.0
        %1112 = vmatpush1.msra.mxu0 0.0
        %1113 = vmatprep.subr.mxu0 0.0
        %1114 = vmatpush1.msra.mxu0 0.0
        %1115 = vmatprep.subr.mxu0 0.0
        %1116 = vmatpush1.msra.mxu0 0.0
        %1117 = vmatprep.subr.mxu0 0.0
        %1118 = vmatpush1.msra.mxu0 0.0
        %1119 = vmatprep.subr.mxu0 0.0
        %1120 = vmatpush1.msra.mxu0 0.0
        %1121 = vmatprep.subr.mxu0 0.0
        %1122 = vmatpush1.msra.mxu0 0.0
        %1123 = vmatprep.subr.mxu0 0.0
        %1124 = vmatpush1.msra.mxu0 0.0
        %1125 = vmatprep.subr.mxu0 0.0
        %1126 = vmatpush1.msra.mxu0 0.0
        %1127 = vmatprep.subr.mxu0 0.0
        %1128 = vmatpush1.msra.mxu0 0.0
        %1129 = vmatprep.subr.mxu0 0.0
        %1130 = vmatpush1.msra.mxu0 0.0
        %1131 = vmatprep.subr.mxu0 0.0
        %1132 = vmatpush1.msra.mxu0 0.0
        %1133 = vmatprep.mubr.f32.mxu0 0.0
        %1134 = vmatmul.mubr.f32.gmra.mrb[0].mxu0 %v461
        %v1135 = vpop.f32.mrb[0].mxu0
        %v1136 = vadd.f32 %v457, %v1135
        %v1137 = vpop.f32.mrb[0].mxu0
        %1138 = vdwg.mxu0
        %v1139 = vstv %s748
        %v1140 = vmul.f32 %v1139, %v952
        %v1141 = vstv %s750
        %v1142 = vmul.f32 %v1141, %v1136
        %v1143 = vadd.f32 %v1140, %v1142
        %v1144 = vsub.f32 %v952, %v1143
        %v1145 = vstv %s752
        %v1146 = vmul.f32 %v1144, %v1145
        %v1147 = vstv %s754
        %v1148 = vmul.f32 %v1146, %v1147
        %v1149 = vadd.f32 %v744, %v1148
        %s1150 = scalar_lea.vmem %s307, 8
        %v1151 = vld [vmem:[%s1150] sm:$0xff]
        %v1152 = vstv %s755
        %v1153 = vmul.f32 %v1151, %v1152
        %v1154 = vadd.f32 %v1149, %v1153
        %s1155 = sld [smem:[#allocation2 + $0x16]]
        %s1156 = sld [smem:[#allocation2 + $0x17]]
        %s1157 = sld [smem:[#allocation2 + $0x18]]
        %s1158 = sld [smem:[#allocation2 + $0x19]]
        %s1159 = sld [smem:[#allocation2 + $0x1a]]
        %s1160 = sld [smem:[#allocation2 + $0x1b]]
        %s1161 = sld [smem:[#allocation2 + $0x1c]]
        %s1162 = sld [smem:[#allocation2 + $0x1d]]
        %s1163 = sld [smem:[#allocation2 + $0x1e]]
        %s1164 = sld [smem:[#allocation2 + $0x1f]]
        %s1165 = sld [smem:[#allocation2 + $0x20]]
        %s1166 = scalar_lea.vmem %s6, 128
        %v1167 = vld [vmem:[%s1166] sm:$0xff]
        %v1168 = vld [vmem:[%s1166 + $0x8] sm:$0xff]
        %v1169 = vld [vmem:[%s1166 + $0x10] sm:$0xff]
        %v1170 = vld [vmem:[%s1166 + $0x18] sm:$0xff]
        %v1171 = vstv %s1156
        %v1172 = vmul.f32 %v1171, %v1154
        %1174 = vset.pattern.permute.xlu0 0
        %1175 = vperm.xlu0 %1174, %v1167
        %v1176 = vpop.permute.xlu0 %1175
        %1179 = vset.pattern.permute.xlu0 0
        %1180 = vperm.xlu0 %1179, %v1168
        %v1181 = vpop.permute.xlu0 %1180
        %1184 = vset.pattern.permute.xlu0 0
        %1185 = vperm.xlu0 %1184, %v1169
        %v1186 = vpop.permute.xlu0 %1185
        %1189 = vset.pattern.permute.xlu0 0
        %1190 = vperm.xlu0 %1189, %v1170
        %v1191 = vpop.permute.xlu0 %1190
        %1193 = vmatprep.subr.mxu0 0.0
        %1194 = vmatpush1.msra.mxu0 %v1172
        %1195 = vmatprep.subr.mxu0 0.0
        %1196 = vmatpush1.msra.mxu0 0.0
        %1197 = vmatprep.subr.mxu0 0.0
        %1198 = vmatpush1.msra.mxu0 0.0
        %1199 = vmatprep.subr.mxu0 0.0
        %1200 = vmatpush1.msra.mxu0 0.0
        %1201 = vmatprep.subr.mxu0 0.0
        %1202 = vmatpush1.msra.mxu0 0.0
        %1203 = vmatprep.subr.mxu0 0.0
        %1204 = vmatpush1.msra.mxu0 0.0
        %1205 = vmatprep.subr.mxu0 0.0
        %1206 = vmatpush1.msra.mxu0 0.0
        %1207 = vmatprep.subr.mxu0 0.0
        %1208 = vmatpush1.msra.mxu0 0.0
        %1209 = vmatprep.subr.mxu0 0.0
        %1210 = vmatpush1.msra.mxu0 0.0
        %1211 = vmatprep.subr.mxu0 0.0
        %1212 = vmatpush1.msra.mxu0 0.0
        %1213 = vmatprep.subr.mxu0 0.0
        %1214 = vmatpush1.msra.mxu0 0.0
        %1215 = vmatprep.subr.mxu0 0.0
        %1216 = vmatpush1.msra.mxu0 0.0
        %1217 = vmatprep.subr.mxu0 0.0
        %1218 = vmatpush1.msra.mxu0 0.0
        %1219 = vmatprep.subr.mxu0 0.0
        %1220 = vmatpush1.msra.mxu0 0.0
        %1221 = vmatprep.subr.mxu0 0.0
        %1222 = vmatpush1.msra.mxu0 0.0
        %1223 = vmatprep.subr.mxu0 0.0
        %1224 = vmatpush1.msra.mxu0 0.0
        %1225 = vmatprep.subr.mxu0 0.0
        %1226 = vmatpush1.msra.mxu0 0.0
        %1227 = vmatprep.subr.mxu0 0.0
        %1228 = vmatpush1.msra.mxu0 0.0
        %1229 = vmatprep.subr.mxu0 0.0
        %1230 = vmatpush1.msra.mxu0 0.0
        %1231 = vmatprep.subr.mxu0 0.0
        %1232 = vmatpush1.msra.mxu0 0.0
        %1233 = vmatprep.subr.mxu0 0.0
        %1234 = vmatpush1.msra.mxu0 0.0
        %1235 = vmatprep.subr.mxu0 0.0
        %1236 = vmatpush1.msra.mxu0 0.0
        %1237 = vmatprep.subr.mxu0 0.0
        %1238 = vmatpush1.msra.mxu0 0.0
        %1239 = vmatprep.subr.mxu0 0.0
        %1240 = vmatpush1.msra.mxu0 0.0
        %1241 = vmatprep.subr.mxu0 0.0
        %1242 = vmatpush1.msra.mxu0 0.0
        %1243 = vmatprep.subr.mxu0 0.0
        %1244 = vmatpush1.msra.mxu0 0.0
        %1245 = vmatprep.subr.mxu0 0.0
        %1246 = vmatpush1.msra.mxu0 0.0
        %1247 = vmatprep.subr.mxu0 0.0
        %1248 = vmatpush1.msra.mxu0 0.0
        %1249 = vmatprep.subr.mxu0 0.0
        %1250 = vmatpush1.msra.mxu0 0.0
        %1251 = vmatprep.subr.mxu0 0.0
        %1252 = vmatpush1.msra.mxu0 0.0
        %1253 = vmatprep.subr.mxu0 0.0
        %1254 = vmatpush1.msra.mxu0 0.0
        %1255 = vmatprep.subr.mxu0 0.0
        %1256 = vmatpush1.msra.mxu0 0.0
        %1257 = vmatprep.mubr.f32.mxu0 0.0
        %1258 = vmatmul.mubr.f32.gmra.mrb[0].mxu0 %v354
        %v1259 = vpop.f32.mrb[0].mxu0
        %v1260 = vadd.f32 %v1176, %v1259
        %v1261 = vpop.f32.mrb[0].mxu0
        %1262 = vmatprep.mubr.f32.mxu0 0.0
        %1263 = vmatmul.mubr.f32.gmra.mrb[0].mxu0 %v357
        %v1264 = vpop.f32.mrb[0].mxu0
        %v1265 = vadd.f32 %v1181, %v1264
        %v1266 = vpop.f32.mrb[0].mxu0
        %1267 = vmatprep.mubr.f32.mxu0 0.0
        %1268 = vmatmul.mubr.f32.gmra.mrb[0].mxu0 %v360
        %v1269 = vpop.f32.mrb[0].mxu0
        %v1270 = vadd.f32 %v1186, %v1269
        %v1271 = vpop.f32.mrb[0].mxu0
        %1272 = vmatprep.mubr.f32.mxu0 0.0
        %1273 = vmatmul.mubr.f32.gmra.mrb[0].mxu0 %v363
        %v1274 = vpop.f32.mrb[0].mxu0
        %v1275 = vadd.f32 %v1191, %v1274
        %v1276 = vpop.f32.mrb[0].mxu0
        %1277 = vdwg.mxu0
        %v1278 = vmax.f32 %v1260, 0.0
        %v1279 = vmax.f32 %v1265, 0.0
        %v1280 = vmax.f32 %v1270, 0.0
        %v1281 = vmax.f32 %v1275, 0.0
        %1282 = vmatprep.subr.mxu0 0.0
        %1283 = vmatpush1.msra.mxu0 %v1278
        %1284 = vmatprep.subr.mxu0 0.0
        %1285 = vmatpush1.msra.mxu0 %v1279
        %1286 = vmatprep.subr.mxu0 0.0
        %1287 = vmatpush1.msra.mxu0 %v1280
        %1288 = vmatprep.subr.mxu0 0.0
        %1289 = vmatpush1.msra.mxu0 %v1281
        %1290 = vmatprep.subr.mxu0 0.0
        %1291 = vmatpush1.msra.mxu0 0.0
        %1292 = vmatprep.subr.mxu0 0.0
        %1293 = vmatpush1.msra.mxu0 0.0
        %1294 = vmatprep.subr.mxu0 0.0
        %1295 = vmatpush1.msra.mxu0 0.0
        %1296 = vmatprep.subr.mxu0 0.0
        %1297 = vmatpush1.msra.mxu0 0.0
        %1298 = vmatprep.subr.mxu0 0.0
        %1299 = vmatpush1.msra.mxu0 0.0
        %1300 = vmatprep.subr.mxu0 0.0
        %1301 = vmatpush1.msra.mxu0 0.0
        %1302 = vmatprep.subr.mxu0 0.0
        %1303 = vmatpush1.msra.mxu0 0.0
        %1304 = vmatprep.subr.mxu0 0.0
        %1305 = vmatpush1.msra.mxu0 0.0
        %1306 = vmatprep.subr.mxu0 0.0
        %1307 = vmatpush1.msra.mxu0 0.0
        %1308 = vmatprep.subr.mxu0 0.0
        %1309 = vmatpush1.msra.mxu0 0.0
        %1310 = vmatprep.subr.mxu0 0.0
        %1311 = vmatpush1.msra.mxu0 0.0
        %1312 = vmatprep.subr.mxu0 0.0
        %1313 = vmatpush1.msra.mxu0 0.0
        %1314 = vmatprep.subr.mxu0 0.0
        %1315 = vmatpush1.msra.mxu0 0.0
        %1316 = vmatprep.subr.mxu0 0.0
        %1317 = vmatpush1.msra.mxu0 0.0
        %1318 = vmatprep.subr.mxu0 0.0
        %1319 = vmatpush1.msra.mxu0 0.0
        %1320 = vmatprep.subr.mxu0 0.0
        %1321 = vmatpush1.msra.mxu0 0.0
        %1322 = vmatprep.subr.mxu0 0.0
        %1323 = vmatpush1.msra.mxu0 0.0
        %1324 = vmatprep.subr.mxu0 0.0
        %1325 = vmatpush1.msra.mxu0 0.0
        %1326 = vmatprep.subr.mxu0 0.0
        %1327 = vmatpush1.msra.mxu0 0.0
        %1328 = vmatprep.subr.mxu0 0.0
        %1329 = vmatpush1.msra.mxu0 0.0
        %1330 = vmatprep.subr.mxu0 0.0
        %1331 = vmatpush1.msra.mxu0 0.0
        %1332 = vmatprep.subr.mxu0 0.0
        %1333 = vmatpush1.msra.mxu0 0.0
        %1334 = vmatprep.subr.mxu0 0.0
        %1335 = vmatpush1.msra.mxu0 0.0
        %1336 = vmatprep.subr.mxu0 0.0
        %1337 = vmatpush1.msra.mxu0 0.0
        %1338 = vmatprep.subr.mxu0 0.0
        %1339 = vmatpush1.msra.mxu0 0.0
        %1340 = vmatprep.subr.mxu0 0.0
        %1341 = vmatpush1.msra.mxu0 0.0
        %1342 = vmatprep.subr.mxu0 0.0
        %1343 = vmatpush1.msra.mxu0 0.0
        %1344 = vmatprep.subr.mxu0 0.0
        %1345 = vmatpush1.msra.mxu0 0.0
        %1346 = vmatprep.mubr.f32.mxu0 0.0
        %1347 = vmatmul.mubr.f32.gmra.mrb[0].mxu0 %v461
        %v1348 = vpop.f32.mrb[0].mxu0
        %v1349 = vadd.f32 %v457, %v1348
        %v1350 = vpop.f32.mrb[0].mxu0
        %1351 = vdwg.mxu0
        %v1352 = vstv %s1155
        %v1353 = vmul.f32 %v1352, %v1154
        %v1354 = vstv %s1157
        %v1355 = vmul.f32 %v1354, %v1349
        %v1356 = vadd.f32 %v1353, %v1355
        %v1357 = vsub.f32 %v1154, %v1356
        %v1358 = vstv %s1161
        %v1359 = vmul.f32 %v1357, %v1358
        %v1360 = vstv %s1163
        %v1361 = vmul.f32 %v1359, %v1360
        %v1362 = vadd.f32 %v1154, %v1361
        %s1363 = scalar_lea.vmem %s6, 160
        %v1364 = vld [vmem:[%s1363] sm:$0xff]
        %v1365 = vld [vmem:[%s1363 + $0x8] sm:$0xff]
        %v1366 = vld [vmem:[%s1363 + $0x10] sm:$0xff]
        %v1367 = vld [vmem:[%s1363 + $0x18] sm:$0xff]
        %v1368 = vstv %s1159
        %v1369 = vmul.f32 %v1368, %v1362
        %1371 = vset.pattern.permute.xlu0 0
        %1372 = vperm.xlu0 %1371, %v1364
        %v1373 = vpop.permute.xlu0 %1372
        %1376 = vset.pattern.permute.xlu0 0
        %1377 = vperm.xlu0 %1376, %v1365
        %v1378 = vpop.permute.xlu0 %1377
        %1381 = vset.pattern.permute.xlu0 0
        %1382 = vperm.xlu0 %1381, %v1366
        %v1383 = vpop.permute.xlu0 %1382
        %1386 = vset.pattern.permute.xlu0 0
        %1387 = vperm.xlu0 %1386, %v1367
        %v1388 = vpop.permute.xlu0 %1387
        %1390 = vmatprep.subr.mxu0 0.0
        %1391 = vmatpush1.msra.mxu0 %v1369
        %1392 = vmatprep.subr.mxu0 0.0
        %1393 = vmatpush1.msra.mxu0 0.0
        %1394 = vmatprep.subr.mxu0 0.0
        %1395 = vmatpush1.msra.mxu0 0.0
        %1396 = vmatprep.subr.mxu0 0.0
        %1397 = vmatpush1.msra.mxu0 0.0
        %1398 = vmatprep.subr.mxu0 0.0
        %1399 = vmatpush1.msra.mxu0 0.0
        %1400 = vmatprep.subr.mxu0 0.0
        %1401 = vmatpush1.msra.mxu0 0.0
        %1402 = vmatprep.subr.mxu0 0.0
        %1403 = vmatpush1.msra.mxu0 0.0
        %1404 = vmatprep.subr.mxu0 0.0
        %1405 = vmatpush1.msra.mxu0 0.0
        %1406 = vmatprep.subr.mxu0 0.0
        %1407 = vmatpush1.msra.mxu0 0.0
        %1408 = vmatprep.subr.mxu0 0.0
        %1409 = vmatpush1.msra.mxu0 0.0
        %1410 = vmatprep.subr.mxu0 0.0
        %1411 = vmatpush1.msra.mxu0 0.0
        %1412 = vmatprep.subr.mxu0 0.0
        %1413 = vmatpush1.msra.mxu0 0.0
        %1414 = vmatprep.subr.mxu0 0.0
        %1415 = vmatpush1.msra.mxu0 0.0
        %1416 = vmatprep.subr.mxu0 0.0
        %1417 = vmatpush1.msra.mxu0 0.0
        %1418 = vmatprep.subr.mxu0 0.0
        %1419 = vmatpush1.msra.mxu0 0.0
        %1420 = vmatprep.subr.mxu0 0.0
        %1421 = vmatpush1.msra.mxu0 0.0
        %1422 = vmatprep.subr.mxu0 0.0
        %1423 = vmatpush1.msra.mxu0 0.0
        %1424 = vmatprep.subr.mxu0 0.0
        %1425 = vmatpush1.msra.mxu0 0.0
        %1426 = vmatprep.subr.mxu0 0.0
        %1427 = vmatpush1.msra.mxu0 0.0
        %1428 = vmatprep.subr.mxu0 0.0
        %1429 = vmatpush1.msra.mxu0 0.0
        %1430 = vmatprep.subr.mxu0 0.0
        %1431 = vmatpush1.msra.mxu0 0.0
        %1432 = vmatprep.subr.mxu0 0.0
        %1433 = vmatpush1.msra.mxu0 0.0
        %1434 = vmatprep.subr.mxu0 0.0
        %1435 = vmatpush1.msra.mxu0 0.0
        %1436 = vmatprep.subr.mxu0 0.0
        %1437 = vmatpush1.msra.mxu0 0.0
        %1438 = vmatprep.subr.mxu0 0.0
        %1439 = vmatpush1.msra.mxu0 0.0
        %1440 = vmatprep.subr.mxu0 0.0
        %1441 = vmatpush1.msra.mxu0 0.0
        %1442 = vmatprep.subr.mxu0 0.0
        %1443 = vmatpush1.msra.mxu0 0.0
        %1444 = vmatprep.subr.mxu0 0.0
        %1445 = vmatpush1.msra.mxu0 0.0
        %1446 = vmatprep.subr.mxu0 0.0
        %1447 = vmatpush1.msra.mxu0 0.0
        %1448 = vmatprep.subr.mxu0 0.0
        %1449 = vmatpush1.msra.mxu0 0.0
        %1450 = vmatprep.subr.mxu0 0.0
        %1451 = vmatpush1.msra.mxu0 0.0
        %1452 = vmatprep.subr.mxu0 0.0
        %1453 = vmatpush1.msra.mxu0 0.0
        %1454 = vmatprep.mubr.f32.mxu0 0.0
        %1455 = vmatmul.mubr.f32.gmra.mrb[0].mxu0 %v354
        %v1456 = vpop.f32.mrb[0].mxu0
        %v1457 = vadd.f32 %v1373, %v1456
        %v1458 = vpop.f32.mrb[0].mxu0
        %1459 = vmatprep.mubr.f32.mxu0 0.0
        %1460 = vmatmul.mubr.f32.gmra.mrb[0].mxu0 %v357
        %v1461 = vpop.f32.mrb[0].mxu0
        %v1462 = vadd.f32 %v1378, %v1461
        %v1463 = vpop.f32.mrb[0].mxu0
        %1464 = vmatprep.mubr.f32.mxu0 0.0
        %1465 = vmatmul.mubr.f32.gmra.mrb[0].mxu0 %v360
        %v1466 = vpop.f32.mrb[0].mxu0
        %v1467 = vadd.f32 %v1383, %v1466
        %v1468 = vpop.f32.mrb[0].mxu0
        %1469 = vmatprep.mubr.f32.mxu0 0.0
        %1470 = vmatmul.mubr.f32.gmra.mrb[0].mxu0 %v363
        %v1471 = vpop.f32.mrb[0].mxu0
        %v1472 = vadd.f32 %v1388, %v1471
        %v1473 = vpop.f32.mrb[0].mxu0
        %1474 = vdwg.mxu0
        %v1475 = vmax.f32 %v1457, 0.0
        %v1476 = vmax.f32 %v1462, 0.0
        %v1477 = vmax.f32 %v1467, 0.0
        %v1478 = vmax.f32 %v1472, 0.0
        %1479 = vmatprep.subr.mxu0 0.0
        %1480 = vmatpush1.msra.mxu0 %v1475
        %1481 = vmatprep.subr.mxu0 0.0
        %1482 = vmatpush1.msra.mxu0 %v1476
        %1483 = vmatprep.subr.mxu0 0.0
        %1484 = vmatpush1.msra.mxu0 %v1477
        %1485 = vmatprep.subr.mxu0 0.0
        %1486 = vmatpush1.msra.mxu0 %v1478
        %1487 = vmatprep.subr.mxu0 0.0
        %1488 = vmatpush1.msra.mxu0 0.0
        %1489 = vmatprep.subr.mxu0 0.0
        %1490 = vmatpush1.msra.mxu0 0.0
        %1491 = vmatprep.subr.mxu0 0.0
        %1492 = vmatpush1.msra.mxu0 0.0
        %1493 = vmatprep.subr.mxu0 0.0
        %1494 = vmatpush1.msra.mxu0 0.0
        %1495 = vmatprep.subr.mxu0 0.0
        %1496 = vmatpush1.msra.mxu0 0.0
        %1497 = vmatprep.subr.mxu0 0.0
        %1498 = vmatpush1.msra.mxu0 0.0
        %1499 = vmatprep.subr.mxu0 0.0
        %1500 = vmatpush1.msra.mxu0 0.0
        %1501 = vmatprep.subr.mxu0 0.0
        %1502 = vmatpush1.msra.mxu0 0.0
        %1503 = vmatprep.subr.mxu0 0.0
        %1504 = vmatpush1.msra.mxu0 0.0
        %1505 = vmatprep.subr.mxu0 0.0
        %1506 = vmatpush1.msra.mxu0 0.0
        %1507 = vmatprep.subr.mxu0 0.0
        %1508 = vmatpush1.msra.mxu0 0.0
        %1509 = vmatprep.subr.mxu0 0.0
        %1510 = vmatpush1.msra.mxu0 0.0
        %1511 = vmatprep.subr.mxu0 0.0
        %1512 = vmatpush1.msra.mxu0 0.0
        %1513 = vmatprep.subr.mxu0 0.0
        %1514 = vmatpush1.msra.mxu0 0.0
        %1515 = vmatprep.subr.mxu0 0.0
        %1516 = vmatpush1.msra.mxu0 0.0
        %1517 = vmatprep.subr.mxu0 0.0
        %1518 = vmatpush1.msra.mxu0 0.0
        %1519 = vmatprep.subr.mxu0 0.0
        %1520 = vmatpush1.msra.mxu0 0.0
        %1521 = vmatprep.subr.mxu0 0.0
        %1522 = vmatpush1.msra.mxu0 0.0
        %1523 = vmatprep.subr.mxu0 0.0
        %1524 = vmatpush1.msra.mxu0 0.0
        %1525 = vmatprep.subr.mxu0 0.0
        %1526 = vmatpush1.msra.mxu0 0.0
        %1527 = vmatprep.subr.mxu0 0.0
        %1528 = vmatpush1.msra.mxu0 0.0
        %1529 = vmatprep.subr.mxu0 0.0
        %1530 = vmatpush1.msra.mxu0 0.0
        %1531 = vmatprep.subr.mxu0 0.0
        %1532 = vmatpush1.msra.mxu0 0.0
        %1533 = vmatprep.subr.mxu0 0.0
        %1534 = vmatpush1.msra.mxu0 0.0
        %1535 = vmatprep.subr.mxu0 0.0
        %1536 = vmatpush1.msra.mxu0 0.0
        %1537 = vmatprep.subr.mxu0 0.0
        %1538 = vmatpush1.msra.mxu0 0.0
        %1539 = vmatprep.subr.mxu0 0.0
        %1540 = vmatpush1.msra.mxu0 0.0
        %1541 = vmatprep.subr.mxu0 0.0
        %1542 = vmatpush1.msra.mxu0 0.0
        %1543 = vmatprep.mubr.f32.mxu0 0.0
        %1544 = vmatmul.mubr.f32.gmra.mrb[0].mxu0 %v461
        %v1545 = vpop.f32.mrb[0].mxu0
        %v1546 = vadd.f32 %v457, %v1545
        %v1547 = vpop.f32.mrb[0].mxu0
        %1548 = vdwg.mxu0
        %v1549 = vstv %s1158
        %v1550 = vmul.f32 %v1549, %v1362
        %v1551 = vstv %s1160
        %v1552 = vmul.f32 %v1551, %v1546
        %v1553 = vadd.f32 %v1550, %v1552
        %v1554 = vsub.f32 %v1362, %v1553
        %v1555 = vstv %s1162
        %v1556 = vmul.f32 %v1554, %v1555
        %v1557 = vstv %s1164
        %v1558 = vmul.f32 %v1556, %v1557
        %v1559 = vadd.f32 %v1154, %v1558
        %s1560 = scalar_lea.vmem %s307, 16
        %v1561 = vld [vmem:[%s1560] sm:$0xff]
        %v1562 = vstv %s1165
        %v1563 = vmul.f32 %v1561, %v1562
        %v1564 = vadd.f32 %v1559, %v1563
        %s1565 = sld [smem:[#allocation2 + $0x21]]
        %s1566 = sld [smem:[#allocation2 + $0x22]]
        %s1567 = sld [smem:[#allocation2 + $0x23]]
        %s1568 = sld [smem:[#allocation2 + $0x24]]
        %s1569 = sld [smem:[#allocation2 + $0x25]]
        %s1570 = sld [smem:[#allocation2 + $0x26]]
        %s1571 = sld [smem:[#allocation2 + $0x27]]
        %s1572 = sld [smem:[#allocation2 + $0x28]]
        %s1573 = sld [smem:[#allocation2 + $0x29]]
        %s1574 = sld [smem:[#allocation2 + $0x2a]]
        %s1575 = sld [smem:[#allocation2 + $0x2b]]
        %s1576 = scalar_lea.vmem %s6, 192
        %v1577 = vld [vmem:[%s1576] sm:$0xff]
        %v1578 = vld [vmem:[%s1576 + $0x8] sm:$0xff]
        %v1579 = vld [vmem:[%s1576 + $0x10] sm:$0xff]
        %v1580 = vld [vmem:[%s1576 + $0x18] sm:$0xff]
        %v1581 = vstv %s1566
        %v1582 = vmul.f32 %v1581, %v1564
        %1584 = vset.pattern.permute.xlu0 0
        %1585 = vperm.xlu0 %1584, %v1577
        %v1586 = vpop.permute.xlu0 %1585
        %1589 = vset.pattern.permute.xlu0 0
        %1590 = vperm.xlu0 %1589, %v1578
        %v1591 = vpop.permute.xlu0 %1590
        %1594 = vset.pattern.permute.xlu0 0
        %1595 = vperm.xlu0 %1594, %v1579
        %v1596 = vpop.permute.xlu0 %1595
        %1599 = vset.pattern.permute.xlu0 0
        %1600 = vperm.xlu0 %1599, %v1580
        %v1601 = vpop.permute.xlu0 %1600
        %1603 = vmatprep.subr.mxu0 0.0
        %1604 = vmatpush1.msra.mxu0 %v1582
        %1605 = vmatprep.subr.mxu0 0.0
        %1606 = vmatpush1.msra.mxu0 0.0
        %1607 = vmatprep.subr.mxu0 0.0
        %1608 = vmatpush1.msra.mxu0 0.0
        %1609 = vmatprep.subr.mxu0 0.0
        %1610 = vmatpush1.msra.mxu0 0.0
        %1611 = vmatprep.subr.mxu0 0.0
        %1612 = vmatpush1.msra.mxu0 0.0
        %1613 = vmatprep.subr.mxu0 0.0
        %1614 = vmatpush1.msra.mxu0 0.0
        %1615 = vmatprep.subr.mxu0 0.0
        %1616 = vmatpush1.msra.mxu0 0.0
        %1617 = vmatprep.subr.mxu0 0.0
        %1618 = vmatpush1.msra.mxu0 0.0
        %1619 = vmatprep.subr.mxu0 0.0
        %1620 = vmatpush1.msra.mxu0 0.0
        %1621 = vmatprep.subr.mxu0 0.0
        %1622 = vmatpush1.msra.mxu0 0.0
        %1623 = vmatprep.subr.mxu0 0.0
        %1624 = vmatpush1.msra.mxu0 0.0
        %1625 = vmatprep.subr.mxu0 0.0
        %1626 = vmatpush1.msra.mxu0 0.0
        %1627 = vmatprep.subr.mxu0 0.0
        %1628 = vmatpush1.msra.mxu0 0.0
        %1629 = vmatprep.subr.mxu0 0.0
        %1630 = vmatpush1.msra.mxu0 0.0
        %1631 = vmatprep.subr.mxu0 0.0
        %1632 = vmatpush1.msra.mxu0 0.0
        %1633 = vmatprep.subr.mxu0 0.0
        %1634 = vmatpush1.msra.mxu0 0.0
        %1635 = vmatprep.subr.mxu0 0.0
        %1636 = vmatpush1.msra.mxu0 0.0
        %1637 = vmatprep.subr.mxu0 0.0
        %1638 = vmatpush1.msra.mxu0 0.0
        %1639 = vmatprep.subr.mxu0 0.0
        %1640 = vmatpush1.msra.mxu0 0.0
        %1641 = vmatprep.subr.mxu0 0.0
        %1642 = vmatpush1.msra.mxu0 0.0
        %1643 = vmatprep.subr.mxu0 0.0
        %1644 = vmatpush1.msra.mxu0 0.0
        %1645 = vmatprep.subr.mxu0 0.0
        %1646 = vmatpush1.msra.mxu0 0.0
        %1647 = vmatprep.subr.mxu0 0.0
        %1648 = vmatpush1.msra.mxu0 0.0
        %1649 = vmatprep.subr.mxu0 0.0
        %1650 = vmatpush1.msra.mxu0 0.0
        %1651 = vmatprep.subr.mxu0 0.0
        %1652 = vmatpush1.msra.mxu0 0.0
        %1653 = vmatprep.subr.mxu0 0.0
        %1654 = vmatpush1.msra.mxu0 0.0
        %1655 = vmatprep.subr.mxu0 0.0
        %1656 = vmatpush1.msra.mxu0 0.0
        %1657 = vmatprep.subr.mxu0 0.0
        %1658 = vmatpush1.msra.mxu0 0.0
        %1659 = vmatprep.subr.mxu0 0.0
        %1660 = vmatpush1.msra.mxu0 0.0
        %1661 = vmatprep.subr.mxu0 0.0
        %1662 = vmatpush1.msra.mxu0 0.0
        %1663 = vmatprep.subr.mxu0 0.0
        %1664 = vmatpush1.msra.mxu0 0.0
        %1665 = vmatprep.subr.mxu0 0.0
        %1666 = vmatpush1.msra.mxu0 0.0
        %1667 = vmatprep.mubr.f32.mxu0 0.0
        %1668 = vmatmul.mubr.f32.gmra.mrb[0].mxu0 %v354
        %v1669 = vpop.f32.mrb[0].mxu0
        %v1670 = vadd.f32 %v1586, %v1669
        %v1671 = vpop.f32.mrb[0].mxu0
        %1672 = vmatprep.mubr.f32.mxu0 0.0
        %1673 = vmatmul.mubr.f32.gmra.mrb[0].mxu0 %v357
        %v1674 = vpop.f32.mrb[0].mxu0
        %v1675 = vadd.f32 %v1591, %v1674
        %v1676 = vpop.f32.mrb[0].mxu0
        %1677 = vmatprep.mubr.f32.mxu0 0.0
        %1678 = vmatmul.mubr.f32.gmra.mrb[0].mxu0 %v360
        %v1679 = vpop.f32.mrb[0].mxu0
        %v1680 = vadd.f32 %v1596, %v1679
        %v1681 = vpop.f32.mrb[0].mxu0
        %1682 = vmatprep.mubr.f32.mxu0 0.0
        %1683 = vmatmul.mubr.f32.gmra.mrb[0].mxu0 %v363
        %v1684 = vpop.f32.mrb[0].mxu0
        %v1685 = vadd.f32 %v1601, %v1684
        %v1686 = vpop.f32.mrb[0].mxu0
        %1687 = vdwg.mxu0
        %v1688 = vmax.f32 %v1670, 0.0
        %v1689 = vmax.f32 %v1675, 0.0
        %v1690 = vmax.f32 %v1680, 0.0
        %v1691 = vmax.f32 %v1685, 0.0
        %1692 = vmatprep.subr.mxu0 0.0
        %1693 = vmatpush1.msra.mxu0 %v1688
        %1694 = vmatprep.subr.mxu0 0.0
        %1695 = vmatpush1.msra.mxu0 %v1689
        %1696 = vmatprep.subr.mxu0 0.0
        %1697 = vmatpush1.msra.mxu0 %v1690
        %1698 = vmatprep.subr.mxu0 0.0
        %1699 = vmatpush1.msra.mxu0 %v1691
        %1700 = vmatprep.subr.mxu0 0.0
        %1701 = vmatpush1.msra.mxu0 0.0
        %1702 = vmatprep.subr.mxu0 0.0
        %1703 = vmatpush1.msra.mxu0 0.0
        %1704 = vmatprep.subr.mxu0 0.0
        %1705 = vmatpush1.msra.mxu0 0.0
        %1706 = vmatprep.subr.mxu0 0.0
        %1707 = vmatpush1.msra.mxu0 0.0
        %1708 = vmatprep.subr.mxu0 0.0
        %1709 = vmatpush1.msra.mxu0 0.0
        %1710 = vmatprep.subr.mxu0 0.0
        %1711 = vmatpush1.msra.mxu0 0.0
        %1712 = vmatprep.subr.mxu0 0.0
        %1713 = vmatpush1.msra.mxu0 0.0
        %1714 = vmatprep.subr.mxu0 0.0
        %1715 = vmatpush1.msra.mxu0 0.0
        %1716 = vmatprep.subr.mxu0 0.0
        %1717 = vmatpush1.msra.mxu0 0.0
        %1718 = vmatprep.subr.mxu0 0.0
        %1719 = vmatpush1.msra.mxu0 0.0
        %1720 = vmatprep.subr.mxu0 0.0
        %1721 = vmatpush1.msra.mxu0 0.0
        %1722 = vmatprep.subr.mxu0 0.0
        %1723 = vmatpush1.msra.mxu0 0.0
        %1724 = vmatprep.subr.mxu0 0.0
        %1725 = vmatpush1.msra.mxu0 0.0
        %1726 = vmatprep.subr.mxu0 0.0
        %1727 = vmatpush1.msra.mxu0 0.0
        %1728 = vmatprep.subr.mxu0 0.0
        %1729 = vmatpush1.msra.mxu0 0.0
        %1730 = vmatprep.subr.mxu0 0.0
        %1731 = vmatpush1.msra.mxu0 0.0
        %1732 = vmatprep.subr.mxu0 0.0
        %1733 = vmatpush1.msra.mxu0 0.0
        %1734 = vmatprep.subr.mxu0 0.0
        %1735 = vmatpush1.msra.mxu0 0.0
        %1736 = vmatprep.subr.mxu0 0.0
        %1737 = vmatpush1.msra.mxu0 0.0
        %1738 = vmatprep.subr.mxu0 0.0
        %1739 = vmatpush1.msra.mxu0 0.0
        %1740 = vmatprep.subr.mxu0 0.0
        %1741 = vmatpush1.msra.mxu0 0.0
        %1742 = vmatprep.subr.mxu0 0.0
        %1743 = vmatpush1.msra.mxu0 0.0
        %1744 = vmatprep.subr.mxu0 0.0
        %1745 = vmatpush1.msra.mxu0 0.0
        %1746 = vmatprep.subr.mxu0 0.0
        %1747 = vmatpush1.msra.mxu0 0.0
        %1748 = vmatprep.subr.mxu0 0.0
        %1749 = vmatpush1.msra.mxu0 0.0
        %1750 = vmatprep.subr.mxu0 0.0
        %1751 = vmatpush1.msra.mxu0 0.0
        %1752 = vmatprep.subr.mxu0 0.0
        %1753 = vmatpush1.msra.mxu0 0.0
        %1754 = vmatprep.subr.mxu0 0.0
        %1755 = vmatpush1.msra.mxu0 0.0
        %1756 = vmatprep.mubr.f32.mxu0 0.0
        %1757 = vmatmul.mubr.f32.gmra.mrb[0].mxu0 %v461
        %v1758 = vpop.f32.mrb[0].mxu0
        %v1759 = vadd.f32 %v457, %v1758
        %v1760 = vpop.f32.mrb[0].mxu0
        %1761 = vdwg.mxu0
        %v1762 = vstv %s1565
        %v1763 = vmul.f32 %v1762, %v1564
        %v1764 = vstv %s1567
        %v1765 = vmul.f32 %v1764, %v1759
        %v1766 = vadd.f32 %v1763, %v1765
        %v1767 = vsub.f32 %v1564, %v1766
        %v1768 = vstv %s1571
        %v1769 = vmul.f32 %v1767, %v1768
        %v1770 = vstv %s1573
        %v1771 = vmul.f32 %v1769, %v1770
        %v1772 = vadd.f32 %v1564, %v1771
        %s1773 = scalar_lea.vmem %s6, 224
        %v1774 = vld [vmem:[%s1773] sm:$0xff]
        %v1775 = vld [vmem:[%s1773 + $0x8] sm:$0xff]
        %v1776 = vld [vmem:[%s1773 + $0x10] sm:$0xff]
        %v1777 = vld [vmem:[%s1773 + $0x18] sm:$0xff]
        %v1778 = vstv %s1569
        %v1779 = vmul.f32 %v1778, %v1772
        %1781 = vset.pattern.permute.xlu0 0
        %1782 = vperm.xlu0 %1781, %v1774
        %v1783 = vpop.permute.xlu0 %1782
        %1786 = vset.pattern.permute.xlu0 0
        %1787 = vperm.xlu0 %1786, %v1775
        %v1788 = vpop.permute.xlu0 %1787
        %1791 = vset.pattern.permute.xlu0 0
        %1792 = vperm.xlu0 %1791, %v1776
        %v1793 = vpop.permute.xlu0 %1792
        %1796 = vset.pattern.permute.xlu0 0
        %1797 = vperm.xlu0 %1796, %v1777
        %v1798 = vpop.permute.xlu0 %1797
        %1800 = vmatprep.subr.mxu0 0.0
        %1801 = vmatpush1.msra.mxu0 %v1779
        %1802 = vmatprep.subr.mxu0 0.0
        %1803 = vmatpush1.msra.mxu0 0.0
        %1804 = vmatprep.subr.mxu0 0.0
        %1805 = vmatpush1.msra.mxu0 0.0
        %1806 = vmatprep.subr.mxu0 0.0
        %1807 = vmatpush1.msra.mxu0 0.0
        %1808 = vmatprep.subr.mxu0 0.0
        %1809 = vmatpush1.msra.mxu0 0.0
        %1810 = vmatprep.subr.mxu0 0.0
        %1811 = vmatpush1.msra.mxu0 0.0
        %1812 = vmatprep.subr.mxu0 0.0
        %1813 = vmatpush1.msra.mxu0 0.0
        %1814 = vmatprep.subr.mxu0 0.0
        %1815 = vmatpush1.msra.mxu0 0.0
        %1816 = vmatprep.subr.mxu0 0.0
        %1817 = vmatpush1.msra.mxu0 0.0
        %1818 = vmatprep.subr.mxu0 0.0
        %1819 = vmatpush1.msra.mxu0 0.0
        %1820 = vmatprep.subr.mxu0 0.0
        %1821 = vmatpush1.msra.mxu0 0.0
        %1822 = vmatprep.subr.mxu0 0.0
        %1823 = vmatpush1.msra.mxu0 0.0
        %1824 = vmatprep.subr.mxu0 0.0
        %1825 = vmatpush1.msra.mxu0 0.0
        %1826 = vmatprep.subr.mxu0 0.0
        %1827 = vmatpush1.msra.mxu0 0.0
        %1828 = vmatprep.subr.mxu0 0.0
        %1829 = vmatpush1.msra.mxu0 0.0
        %1830 = vmatprep.subr.mxu0 0.0
        %1831 = vmatpush1.msra.mxu0 0.0
        %1832 = vmatprep.subr.mxu0 0.0
        %1833 = vmatpush1.msra.mxu0 0.0
        %1834 = vmatprep.subr.mxu0 0.0
        %1835 = vmatpush1.msra.mxu0 0.0
        %1836 = vmatprep.subr.mxu0 0.0
        %1837 = vmatpush1.msra.mxu0 0.0
        %1838 = vmatprep.subr.mxu0 0.0
        %1839 = vmatpush1.msra.mxu0 0.0
        %1840 = vmatprep.subr.mxu0 0.0
        %1841 = vmatpush1.msra.mxu0 0.0
        %1842 = vmatprep.subr.mxu0 0.0
        %1843 = vmatpush1.msra.mxu0 0.0
        %1844 = vmatprep.subr.mxu0 0.0
        %1845 = vmatpush1.msra.mxu0 0.0
        %1846 = vmatprep.subr.mxu0 0.0
        %1847 = vmatpush1.msra.mxu0 0.0
        %1848 = vmatprep.subr.mxu0 0.0
        %1849 = vmatpush1.msra.mxu0 0.0
        %1850 = vmatprep.subr.mxu0 0.0
        %1851 = vmatpush1.msra.mxu0 0.0
        %1852 = vmatprep.subr.mxu0 0.0
        %1853 = vmatpush1.msra.mxu0 0.0
        %1854 = vmatprep.subr.mxu0 0.0
        %1855 = vmatpush1.msra.mxu0 0.0
        %1856 = vmatprep.subr.mxu0 0.0
        %1857 = vmatpush1.msra.mxu0 0.0
        %1858 = vmatprep.subr.mxu0 0.0
        %1859 = vmatpush1.msra.mxu0 0.0
        %1860 = vmatprep.subr.mxu0 0.0
        %1861 = vmatpush1.msra.mxu0 0.0
        %1862 = vmatprep.subr.mxu0 0.0
        %1863 = vmatpush1.msra.mxu0 0.0
        %1864 = vmatprep.mubr.f32.mxu0 0.0
        %1865 = vmatmul.mubr.f32.gmra.mrb[0].mxu0 %v354
        %v1866 = vpop.f32.mrb[0].mxu0
        %v1867 = vadd.f32 %v1783, %v1866
        %v1868 = vpop.f32.mrb[0].mxu0
        %1869 = vmatprep.mubr.f32.mxu0 0.0
        %1870 = vmatmul.mubr.f32.gmra.mrb[0].mxu0 %v357
        %v1871 = vpop.f32.mrb[0].mxu0
        %v1872 = vadd.f32 %v1788, %v1871
        %v1873 = vpop.f32.mrb[0].mxu0
        %1874 = vmatprep.mubr.f32.mxu0 0.0
        %1875 = vmatmul.mubr.f32.gmra.mrb[0].mxu0 %v360
        %v1876 = vpop.f32.mrb[0].mxu0
        %v1877 = vadd.f32 %v1793, %v1876
        %v1878 = vpop.f32.mrb[0].mxu0
        %1879 = vmatprep.mubr.f32.mxu0 0.0
        %1880 = vmatmul.mubr.f32.gmra.mrb[0].mxu0 %v363
        %v1881 = vpop.f32.mrb[0].mxu0
        %v1882 = vadd.f32 %v1798, %v1881
        %v1883 = vpop.f32.mrb[0].mxu0
        %1884 = vdwg.mxu0
        %v1885 = vmax.f32 %v1867, 0.0
        %v1886 = vmax.f32 %v1872, 0.0
        %v1887 = vmax.f32 %v1877, 0.0
        %v1888 = vmax.f32 %v1882, 0.0
        %1889 = vmatprep.subr.mxu0 0.0
        %1890 = vmatpush1.msra.mxu0 %v1885
        %1891 = vmatprep.subr.mxu0 0.0
        %1892 = vmatpush1.msra.mxu0 %v1886
        %1893 = vmatprep.subr.mxu0 0.0
        %1894 = vmatpush1.msra.mxu0 %v1887
        %1895 = vmatprep.subr.mxu0 0.0
        %1896 = vmatpush1.msra.mxu0 %v1888
        %1897 = vmatprep.subr.mxu0 0.0
        %1898 = vmatpush1.msra.mxu0 0.0
        %1899 = vmatprep.subr.mxu0 0.0
        %1900 = vmatpush1.msra.mxu0 0.0
        %1901 = vmatprep.subr.mxu0 0.0
        %1902 = vmatpush1.msra.mxu0 0.0
        %1903 = vmatprep.subr.mxu0 0.0
        %1904 = vmatpush1.msra.mxu0 0.0
        %1905 = vmatprep.subr.mxu0 0.0
        %1906 = vmatpush1.msra.mxu0 0.0
        %1907 = vmatprep.subr.mxu0 0.0
        %1908 = vmatpush1.msra.mxu0 0.0
        %1909 = vmatprep.subr.mxu0 0.0
        %1910 = vmatpush1.msra.mxu0 0.0
        %1911 = vmatprep.subr.mxu0 0.0
        %1912 = vmatpush1.msra.mxu0 0.0
        %1913 = vmatprep.subr.mxu0 0.0
        %1914 = vmatpush1.msra.mxu0 0.0
        %1915 = vmatprep.subr.mxu0 0.0
        %1916 = vmatpush1.msra.mxu0 0.0
        %1917 = vmatprep.subr.mxu0 0.0
        %1918 = vmatpush1.msra.mxu0 0.0
        %1919 = vmatprep.subr.mxu0 0.0
        %1920 = vmatpush1.msra.mxu0 0.0
        %1921 = vmatprep.subr.mxu0 0.0
        %1922 = vmatpush1.msra.mxu0 0.0
        %1923 = vmatprep.subr.mxu0 0.0
        %1924 = vmatpush1.msra.mxu0 0.0
        %1925 = vmatprep.subr.mxu0 0.0
        %1926 = vmatpush1.msra.mxu0 0.0
        %1927 = vmatprep.subr.mxu0 0.0
        %1928 = vmatpush1.msra.mxu0 0.0
        %1929 = vmatprep.subr.mxu0 0.0
        %1930 = vmatpush1.msra.mxu0 0.0
        %1931 = vmatprep.subr.mxu0 0.0
        %1932 = vmatpush1.msra.mxu0 0.0
        %1933 = vmatprep.subr.mxu0 0.0
        %1934 = vmatpush1.msra.mxu0 0.0
        %1935 = vmatprep.subr.mxu0 0.0
        %1936 = vmatpush1.msra.mxu0 0.0
        %1937 = vmatprep.subr.mxu0 0.0
        %1938 = vmatpush1.msra.mxu0 0.0
        %1939 = vmatprep.subr.mxu0 0.0
        %1940 = vmatpush1.msra.mxu0 0.0
        %1941 = vmatprep.subr.mxu0 0.0
        %1942 = vmatpush1.msra.mxu0 0.0
        %1943 = vmatprep.subr.mxu0 0.0
        %1944 = vmatpush1.msra.mxu0 0.0
        %1945 = vmatprep.subr.mxu0 0.0
        %1946 = vmatpush1.msra.mxu0 0.0
        %1947 = vmatprep.subr.mxu0 0.0
        %1948 = vmatpush1.msra.mxu0 0.0
        %1949 = vmatprep.subr.mxu0 0.0
        %1950 = vmatpush1.msra.mxu0 0.0
        %1951 = vmatprep.subr.mxu0 0.0
        %1952 = vmatpush1.msra.mxu0 0.0
        %1953 = vmatprep.mubr.f32.mxu0 0.0
        %1954 = vmatmul.mubr.f32.gmra.mrb[0].mxu0 %v461
        %v1955 = vpop.f32.mrb[0].mxu0
        %v1956 = vadd.f32 %v457, %v1955
        %v1957 = vpop.f32.mrb[0].mxu0
        %1958 = vdwg.mxu0
        %v1959 = vstv %s1568
        %v1960 = vmul.f32 %v1959, %v1772
        %v1961 = vstv %s1570
        %v1962 = vmul.f32 %v1961, %v1956
        %v1963 = vadd.f32 %v1960, %v1962
        %v1964 = vsub.f32 %v1772, %v1963
        %v1965 = vstv %s1572
        %v1966 = vmul.f32 %v1964, %v1965
        %v1967 = vstv %s1574
        %v1968 = vmul.f32 %v1966, %v1967
        %v1969 = vadd.f32 %v1564, %v1968
        %s1970 = scalar_lea.vmem %s307, 24
        %v1971 = vld [vmem:[%s1970] sm:$0xff]
        %v1972 = vstv %s1575
        %v1973 = vmul.f32 %v1971, %v1972
        %v1974 = vadd.f32 %v1969, %v1973
        %s1975 = sld [smem:[#allocation2 + $0x2c]]
        %s1976 = sld [smem:[#allocation2 + $0x2d]]
        %s1977 = sld [smem:[#allocation2 + $0x2e]]
        %s1978 = sld [smem:[#allocation2 + $0x2f]]
        %s1979 = sld [smem:[#allocation2 + $0x30]]
        %s1980 = sld [smem:[#allocation2 + $0x31]]
        %s1981 = sld [smem:[#allocation2 + $0x32]]
        %s1982 = sld [smem:[#allocation2 + $0x33]]
        %s1983 = sld [smem:[#allocation2 + $0x34]]
        %s1984 = sld [smem:[#allocation2 + $0x35]]
        %s1985 = sld [smem:[#allocation2 + $0x36]]
        %s1986 = scalar_lea.vmem %s6, 256
        %v1987 = vld [vmem:[%s1986] sm:$0xff]
        %v1988 = vld [vmem:[%s1986 + $0x8] sm:$0xff]
        %v1989 = vld [vmem:[%s1986 + $0x10] sm:$0xff]
        %v1990 = vld [vmem:[%s1986 + $0x18] sm:$0xff]
        %v1991 = vstv %s1976
        %v1992 = vmul.f32 %v1991, %v1974
        %1994 = vset.pattern.permute.xlu0 0
        %1995 = vperm.xlu0 %1994, %v1987
        %v1996 = vpop.permute.xlu0 %1995
        %1999 = vset.pattern.permute.xlu0 0
        %2000 = vperm.xlu0 %1999, %v1988
        %v2001 = vpop.permute.xlu0 %2000
        %2004 = vset.pattern.permute.xlu0 0
        %2005 = vperm.xlu0 %2004, %v1989
        %v2006 = vpop.permute.xlu0 %2005
        %2009 = vset.pattern.permute.xlu0 0
        %2010 = vperm.xlu0 %2009, %v1990
        %v2011 = vpop.permute.xlu0 %2010
        %2013 = vmatprep.subr.mxu0 0.0
        %2014 = vmatpush1.msra.mxu0 %v1992
        %2015 = vmatprep.subr.mxu0 0.0
        %2016 = vmatpush1.msra.mxu0 0.0
        %2017 = vmatprep.subr.mxu0 0.0
        %2018 = vmatpush1.msra.mxu0 0.0
        %2019 = vmatprep.subr.mxu0 0.0
        %2020 = vmatpush1.msra.mxu0 0.0
        %2021 = vmatprep.subr.mxu0 0.0
        %2022 = vmatpush1.msra.mxu0 0.0
        %2023 = vmatprep.subr.mxu0 0.0
        %2024 = vmatpush1.msra.mxu0 0.0
        %2025 = vmatprep.subr.mxu0 0.0
        %2026 = vmatpush1.msra.mxu0 0.0
        %2027 = vmatprep.subr.mxu0 0.0
        %2028 = vmatpush1.msra.mxu0 0.0
        %2029 = vmatprep.subr.mxu0 0.0
        %2030 = vmatpush1.msra.mxu0 0.0
        %2031 = vmatprep.subr.mxu0 0.0
        %2032 = vmatpush1.msra.mxu0 0.0
        %2033 = vmatprep.subr.mxu0 0.0
        %2034 = vmatpush1.msra.mxu0 0.0
        %2035 = vmatprep.subr.mxu0 0.0
        %2036 = vmatpush1.msra.mxu0 0.0
        %2037 = vmatprep.subr.mxu0 0.0
        %2038 = vmatpush1.msra.mxu0 0.0
        %2039 = vmatprep.subr.mxu0 0.0
        %2040 = vmatpush1.msra.mxu0 0.0
        %2041 = vmatprep.subr.mxu0 0.0
        %2042 = vmatpush1.msra.mxu0 0.0
        %2043 = vmatprep.subr.mxu0 0.0
        %2044 = vmatpush1.msra.mxu0 0.0
        %2045 = vmatprep.subr.mxu0 0.0
        %2046 = vmatpush1.msra.mxu0 0.0
        %2047 = vmatprep.subr.mxu0 0.0
        %2048 = vmatpush1.msra.mxu0 0.0
        %2049 = vmatprep.subr.mxu0 0.0
        %2050 = vmatpush1.msra.mxu0 0.0
        %2051 = vmatprep.subr.mxu0 0.0
        %2052 = vmatpush1.msra.mxu0 0.0
        %2053 = vmatprep.subr.mxu0 0.0
        %2054 = vmatpush1.msra.mxu0 0.0
        %2055 = vmatprep.subr.mxu0 0.0
        %2056 = vmatpush1.msra.mxu0 0.0
        %2057 = vmatprep.subr.mxu0 0.0
        %2058 = vmatpush1.msra.mxu0 0.0
        %2059 = vmatprep.subr.mxu0 0.0
        %2060 = vmatpush1.msra.mxu0 0.0
        %2061 = vmatprep.subr.mxu0 0.0
        %2062 = vmatpush1.msra.mxu0 0.0
        %2063 = vmatprep.subr.mxu0 0.0
        %2064 = vmatpush1.msra.mxu0 0.0
        %2065 = vmatprep.subr.mxu0 0.0
        %2066 = vmatpush1.msra.mxu0 0.0
        %2067 = vmatprep.subr.mxu0 0.0
        %2068 = vmatpush1.msra.mxu0 0.0
        %2069 = vmatprep.subr.mxu0 0.0
        %2070 = vmatpush1.msra.mxu0 0.0
        %2071 = vmatprep.subr.mxu0 0.0
        %2072 = vmatpush1.msra.mxu0 0.0
        %2073 = vmatprep.subr.mxu0 0.0
        %2074 = vmatpush1.msra.mxu0 0.0
        %2075 = vmatprep.subr.mxu0 0.0
        %2076 = vmatpush1.msra.mxu0 0.0
        %2077 = vmatprep.mubr.f32.mxu0 0.0
        %2078 = vmatmul.mubr.f32.gmra.mrb[0].mxu0 %v354
        %v2079 = vpop.f32.mrb[0].mxu0
        %v2080 = vadd.f32 %v1996, %v2079
        %v2081 = vpop.f32.mrb[0].mxu0
        %2082 = vmatprep.mubr.f32.mxu0 0.0
        %2083 = vmatmul.mubr.f32.gmra.mrb[0].mxu0 %v357
        %v2084 = vpop.f32.mrb[0].mxu0
        %v2085 = vadd.f32 %v2001, %v2084
        %v2086 = vpop.f32.mrb[0].mxu0
        %2087 = vmatprep.mubr.f32.mxu0 0.0
        %2088 = vmatmul.mubr.f32.gmra.mrb[0].mxu0 %v360
        %v2089 = vpop.f32.mrb[0].mxu0
        %v2090 = vadd.f32 %v2006, %v2089
        %v2091 = vpop.f32.mrb[0].mxu0
        %2092 = vmatprep.mubr.f32.mxu0 0.0
        %2093 = vmatmul.mubr.f32.gmra.mrb[0].mxu0 %v363
        %v2094 = vpop.f32.mrb[0].mxu0
        %v2095 = vadd.f32 %v2011, %v2094
        %v2096 = vpop.f32.mrb[0].mxu0
        %2097 = vdwg.mxu0
        %v2098 = vmax.f32 %v2080, 0.0
        %v2099 = vmax.f32 %v2085, 0.0
        %v2100 = vmax.f32 %v2090, 0.0
        %v2101 = vmax.f32 %v2095, 0.0
        %2102 = vmatprep.subr.mxu0 0.0
        %2103 = vmatpush1.msra.mxu0 %v2098
        %2104 = vmatprep.subr.mxu0 0.0
        %2105 = vmatpush1.msra.mxu0 %v2099
        %2106 = vmatprep.subr.mxu0 0.0
        %2107 = vmatpush1.msra.mxu0 %v2100
        %2108 = vmatprep.subr.mxu0 0.0
        %2109 = vmatpush1.msra.mxu0 %v2101
        %2110 = vmatprep.subr.mxu0 0.0
        %2111 = vmatpush1.msra.mxu0 0.0
        %2112 = vmatprep.subr.mxu0 0.0
        %2113 = vmatpush1.msra.mxu0 0.0
        %2114 = vmatprep.subr.mxu0 0.0
        %2115 = vmatpush1.msra.mxu0 0.0
        %2116 = vmatprep.subr.mxu0 0.0
        %2117 = vmatpush1.msra.mxu0 0.0
        %2118 = vmatprep.subr.mxu0 0.0
        %2119 = vmatpush1.msra.mxu0 0.0
        %2120 = vmatprep.subr.mxu0 0.0
        %2121 = vmatpush1.msra.mxu0 0.0
        %2122 = vmatprep.subr.mxu0 0.0
        %2123 = vmatpush1.msra.mxu0 0.0
        %2124 = vmatprep.subr.mxu0 0.0
        %2125 = vmatpush1.msra.mxu0 0.0
        %2126 = vmatprep.subr.mxu0 0.0
        %2127 = vmatpush1.msra.mxu0 0.0
        %2128 = vmatprep.subr.mxu0 0.0
        %2129 = vmatpush1.msra.mxu0 0.0
        %2130 = vmatprep.subr.mxu0 0.0
        %2131 = vmatpush1.msra.mxu0 0.0
        %2132 = vmatprep.subr.mxu0 0.0
        %2133 = vmatpush1.msra.mxu0 0.0
        %2134 = vmatprep.subr.mxu0 0.0
        %2135 = vmatpush1.msra.mxu0 0.0
        %2136 = vmatprep.subr.mxu0 0.0
        %2137 = vmatpush1.msra.mxu0 0.0
        %2138 = vmatprep.subr.mxu0 0.0
        %2139 = vmatpush1.msra.mxu0 0.0
        %2140 = vmatprep.subr.mxu0 0.0
        %2141 = vmatpush1.msra.mxu0 0.0
        %2142 = vmatprep.subr.mxu0 0.0
        %2143 = vmatpush1.msra.mxu0 0.0
        %2144 = vmatprep.subr.mxu0 0.0
        %2145 = vmatpush1.msra.mxu0 0.0
        %2146 = vmatprep.subr.mxu0 0.0
        %2147 = vmatpush1.msra.mxu0 0.0
        %2148 = vmatprep.subr.mxu0 0.0
        %2149 = vmatpush1.msra.mxu0 0.0
        %2150 = vmatprep.subr.mxu0 0.0
        %2151 = vmatpush1.msra.mxu0 0.0
        %2152 = vmatprep.subr.mxu0 0.0
        %2153 = vmatpush1.msra.mxu0 0.0
        %2154 = vmatprep.subr.mxu0 0.0
        %2155 = vmatpush1.msra.mxu0 0.0
        %2156 = vmatprep.subr.mxu0 0.0
        %2157 = vmatpush1.msra.mxu0 0.0
        %2158 = vmatprep.subr.mxu0 0.0
        %2159 = vmatpush1.msra.mxu0 0.0
        %2160 = vmatprep.subr.mxu0 0.0
        %2161 = vmatpush1.msra.mxu0 0.0
        %2162 = vmatprep.subr.mxu0 0.0
        %2163 = vmatpush1.msra.mxu0 0.0
        %2164 = vmatprep.subr.mxu0 0.0
        %2165 = vmatpush1.msra.mxu0 0.0
        %2166 = vmatprep.mubr.f32.mxu0 0.0
        %2167 = vmatmul.mubr.f32.gmra.mrb[0].mxu0 %v461
        %v2168 = vpop.f32.mrb[0].mxu0
        %v2169 = vadd.f32 %v457, %v2168
        %v2170 = vpop.f32.mrb[0].mxu0
        %2171 = vdwg.mxu0
        %v2172 = vstv %s1975
        %v2173 = vmul.f32 %v2172, %v1974
        %v2174 = vstv %s1977
        %v2175 = vmul.f32 %v2174, %v2169
        %v2176 = vadd.f32 %v2173, %v2175
        %v2177 = vsub.f32 %v1974, %v2176
        %v2178 = vstv %s1981
        %v2179 = vmul.f32 %v2177, %v2178
        %v2180 = vstv %s1983
        %v2181 = vmul.f32 %v2179, %v2180
        %v2182 = vadd.f32 %v1974, %v2181
        %s2183 = scalar_lea.vmem %s6, 288
        %v2184 = vld [vmem:[%s2183] sm:$0xff]
        %v2185 = vld [vmem:[%s2183 + $0x8] sm:$0xff]
        %v2186 = vld [vmem:[%s2183 + $0x10] sm:$0xff]
        %v2187 = vld [vmem:[%s2183 + $0x18] sm:$0xff]
        %v2188 = vstv %s1979
        %v2189 = vmul.f32 %v2188, %v2182
        %2191 = vset.pattern.permute.xlu0 0
        %2192 = vperm.xlu0 %2191, %v2184
        %v2193 = vpop.permute.xlu0 %2192
        %2196 = vset.pattern.permute.xlu0 0
        %2197 = vperm.xlu0 %2196, %v2185
        %v2198 = vpop.permute.xlu0 %2197
        %2201 = vset.pattern.permute.xlu0 0
        %2202 = vperm.xlu0 %2201, %v2186
        %v2203 = vpop.permute.xlu0 %2202
        %2206 = vset.pattern.permute.xlu0 0
        %2207 = vperm.xlu0 %2206, %v2187
        %v2208 = vpop.permute.xlu0 %2207
        %2210 = vmatprep.subr.mxu0 0.0
        %2211 = vmatpush1.msra.mxu0 %v2189
        %2212 = vmatprep.subr.mxu0 0.0
        %2213 = vmatpush1.msra.mxu0 0.0
        %2214 = vmatprep.subr.mxu0 0.0
        %2215 = vmatpush1.msra.mxu0 0.0
        %2216 = vmatprep.subr.mxu0 0.0
        %2217 = vmatpush1.msra.mxu0 0.0
        %2218 = vmatprep.subr.mxu0 0.0
        %2219 = vmatpush1.msra.mxu0 0.0
        %2220 = vmatprep.subr.mxu0 0.0
        %2221 = vmatpush1.msra.mxu0 0.0
        %2222 = vmatprep.subr.mxu0 0.0
        %2223 = vmatpush1.msra.mxu0 0.0
        %2224 = vmatprep.subr.mxu0 0.0
        %2225 = vmatpush1.msra.mxu0 0.0
        %2226 = vmatprep.subr.mxu0 0.0
        %2227 = vmatpush1.msra.mxu0 0.0
        %2228 = vmatprep.subr.mxu0 0.0
        %2229 = vmatpush1.msra.mxu0 0.0
        %2230 = vmatprep.subr.mxu0 0.0
        %2231 = vmatpush1.msra.mxu0 0.0
        %2232 = vmatprep.subr.mxu0 0.0
        %2233 = vmatpush1.msra.mxu0 0.0
        %2234 = vmatprep.subr.mxu0 0.0
        %2235 = vmatpush1.msra.mxu0 0.0
        %2236 = vmatprep.subr.mxu0 0.0
        %2237 = vmatpush1.msra.mxu0 0.0
        %2238 = vmatprep.subr.mxu0 0.0
        %2239 = vmatpush1.msra.mxu0 0.0
        %2240 = vmatprep.subr.mxu0 0.0
        %2241 = vmatpush1.msra.mxu0 0.0
        %2242 = vmatprep.subr.mxu0 0.0
        %2243 = vmatpush1.msra.mxu0 0.0
        %2244 = vmatprep.subr.mxu0 0.0
        %2245 = vmatpush1.msra.mxu0 0.0
        %2246 = vmatprep.subr.mxu0 0.0
        %2247 = vmatpush1.msra.mxu0 0.0
        %2248 = vmatprep.subr.mxu0 0.0
        %2249 = vmatpush1.msra.mxu0 0.0
        %2250 = vmatprep.subr.mxu0 0.0
        %2251 = vmatpush1.msra.mxu0 0.0
        %2252 = vmatprep.subr.mxu0 0.0
        %2253 = vmatpush1.msra.mxu0 0.0
        %2254 = vmatprep.subr.mxu0 0.0
        %2255 = vmatpush1.msra.mxu0 0.0
        %2256 = vmatprep.subr.mxu0 0.0
        %2257 = vmatpush1.msra.mxu0 0.0
        %2258 = vmatprep.subr.mxu0 0.0
        %2259 = vmatpush1.msra.mxu0 0.0
        %2260 = vmatprep.subr.mxu0 0.0
        %2261 = vmatpush1.msra.mxu0 0.0
        %2262 = vmatprep.subr.mxu0 0.0
        %2263 = vmatpush1.msra.mxu0 0.0
        %2264 = vmatprep.subr.mxu0 0.0
        %2265 = vmatpush1.msra.mxu0 0.0
        %2266 = vmatprep.subr.mxu0 0.0
        %2267 = vmatpush1.msra.mxu0 0.0
        %2268 = vmatprep.subr.mxu0 0.0
        %2269 = vmatpush1.msra.mxu0 0.0
        %2270 = vmatprep.subr.mxu0 0.0
        %2271 = vmatpush1.msra.mxu0 0.0
        %2272 = vmatprep.subr.mxu0 0.0
        %2273 = vmatpush1.msra.mxu0 0.0
        %2274 = vmatprep.mubr.f32.mxu0 0.0
        %2275 = vmatmul.mubr.f32.gmra.mrb[0].mxu0 %v354
        %v2276 = vpop.f32.mrb[0].mxu0
        %v2277 = vadd.f32 %v2193, %v2276
        %v2278 = vpop.f32.mrb[0].mxu0
        %2279 = vmatprep.mubr.f32.mxu0 0.0
        %2280 = vmatmul.mubr.f32.gmra.mrb[0].mxu0 %v357
        %v2281 = vpop.f32.mrb[0].mxu0
        %v2282 = vadd.f32 %v2198, %v2281
        %v2283 = vpop.f32.mrb[0].mxu0
        %2284 = vmatprep.mubr.f32.mxu0 0.0
        %2285 = vmatmul.mubr.f32.gmra.mrb[0].mxu0 %v360
        %v2286 = vpop.f32.mrb[0].mxu0
        %v2287 = vadd.f32 %v2203, %v2286
        %v2288 = vpop.f32.mrb[0].mxu0
        %2289 = vmatprep.mubr.f32.mxu0 0.0
        %2290 = vmatmul.mubr.f32.gmra.mrb[0].mxu0 %v363
        %v2291 = vpop.f32.mrb[0].mxu0
        %v2292 = vadd.f32 %v2208, %v2291
        %v2293 = vpop.f32.mrb[0].mxu0
        %2294 = vdwg.mxu0
        %v2295 = vmax.f32 %v2277, 0.0
        %v2296 = vmax.f32 %v2282, 0.0
        %v2297 = vmax.f32 %v2287, 0.0
        %v2298 = vmax.f32 %v2292, 0.0
        %2299 = vmatprep.subr.mxu0 0.0
        %2300 = vmatpush1.msra.mxu0 %v2295
        %2301 = vmatprep.subr.mxu0 0.0
        %2302 = vmatpush1.msra.mxu0 %v2296
        %2303 = vmatprep.subr.mxu0 0.0
        %2304 = vmatpush1.msra.mxu0 %v2297
        %2305 = vmatprep.subr.mxu0 0.0
        %2306 = vmatpush1.msra.mxu0 %v2298
        %2307 = vmatprep.subr.mxu0 0.0
        %2308 = vmatpush1.msra.mxu0 0.0
        %2309 = vmatprep.subr.mxu0 0.0
        %2310 = vmatpush1.msra.mxu0 0.0
        %2311 = vmatprep.subr.mxu0 0.0
        %2312 = vmatpush1.msra.mxu0 0.0
        %2313 = vmatprep.subr.mxu0 0.0
        %2314 = vmatpush1.msra.mxu0 0.0
        %2315 = vmatprep.subr.mxu0 0.0
        %2316 = vmatpush1.msra.mxu0 0.0
        %2317 = vmatprep.subr.mxu0 0.0
        %2318 = vmatpush1.msra.mxu0 0.0
        %2319 = vmatprep.subr.mxu0 0.0
        %2320 = vmatpush1.msra.mxu0 0.0
        %2321 = vmatprep.subr.mxu0 0.0
        %2322 = vmatpush1.msra.mxu0 0.0
        %2323 = vmatprep.subr.mxu0 0.0
        %2324 = vmatpush1.msra.mxu0 0.0
        %2325 = vmatprep.subr.mxu0 0.0
        %2326 = vmatpush1.msra.mxu0 0.0
        %2327 = vmatprep.subr.mxu0 0.0
        %2328 = vmatpush1.msra.mxu0 0.0
        %2329 = vmatprep.subr.mxu0 0.0
        %2330 = vmatpush1.msra.mxu0 0.0
        %2331 = vmatprep.subr.mxu0 0.0
        %2332 = vmatpush1.msra.mxu0 0.0
        %2333 = vmatprep.subr.mxu0 0.0
        %2334 = vmatpush1.msra.mxu0 0.0
        %2335 = vmatprep.subr.mxu0 0.0
        %2336 = vmatpush1.msra.mxu0 0.0
        %2337 = vmatprep.subr.mxu0 0.0
        %2338 = vmatpush1.msra.mxu0 0.0
        %2339 = vmatprep.subr.mxu0 0.0
        %2340 = vmatpush1.msra.mxu0 0.0
        %2341 = vmatprep.subr.mxu0 0.0
        %2342 = vmatpush1.msra.mxu0 0.0
        %2343 = vmatprep.subr.mxu0 0.0
        %2344 = vmatpush1.msra.mxu0 0.0
        %2345 = vmatprep.subr.mxu0 0.0
        %2346 = vmatpush1.msra.mxu0 0.0
        %2347 = vmatprep.subr.mxu0 0.0
        %2348 = vmatpush1.msra.mxu0 0.0
        %2349 = vmatprep.subr.mxu0 0.0
        %2350 = vmatpush1.msra.mxu0 0.0
        %2351 = vmatprep.subr.mxu0 0.0
        %2352 = vmatpush1.msra.mxu0 0.0
        %2353 = vmatprep.subr.mxu0 0.0
        %2354 = vmatpush1.msra.mxu0 0.0
        %2355 = vmatprep.subr.mxu0 0.0
        %2356 = vmatpush1.msra.mxu0 0.0
        %2357 = vmatprep.subr.mxu0 0.0
        %2358 = vmatpush1.msra.mxu0 0.0
        %2359 = vmatprep.subr.mxu0 0.0
        %2360 = vmatpush1.msra.mxu0 0.0
        %2361 = vmatprep.subr.mxu0 0.0
        %2362 = vmatpush1.msra.mxu0 0.0
        %2363 = vmatprep.mubr.f32.mxu0 0.0
        %2364 = vmatmul.mubr.f32.gmra.mrb[0].mxu0 %v461
        %v2365 = vpop.f32.mrb[0].mxu0
        %v2366 = vadd.f32 %v457, %v2365
        %v2367 = vpop.f32.mrb[0].mxu0
        %2368 = vdwg.mxu0
        %v2369 = vstv %s1978
        %v2370 = vmul.f32 %v2369, %v2182
        %v2371 = vstv %s1980
        %v2372 = vmul.f32 %v2371, %v2366
        %v2373 = vadd.f32 %v2370, %v2372
        %v2374 = vsub.f32 %v2182, %v2373
        %v2375 = vstv %s1982
        %v2376 = vmul.f32 %v2374, %v2375
        %v2377 = vstv %s1984
        %v2378 = vmul.f32 %v2376, %v2377
        %v2379 = vadd.f32 %v1974, %v2378
        %s2380 = scalar_lea.vmem %s307, 32
        %v2381 = vld [vmem:[%s2380] sm:$0xff]
        %v2382 = vstv %s1985
        %v2383 = vmul.f32 %v2381, %v2382
        %v2384 = vadd.f32 %v2379, %v2383
        %s2385 = sld [smem:[#allocation2 + $0x37]]
        %s2386 = sld [smem:[#allocation2 + $0x38]]
        %s2387 = sld [smem:[#allocation2 + $0x39]]
        %s2388 = sld [smem:[#allocation2 + $0x3a]]
        %s2389 = sld [smem:[#allocation2 + $0x3b]]
        %s2390 = sld [smem:[#allocation2 + $0x3c]]
        %s2391 = sld [smem:[#allocation2 + $0x3d]]
        %s2392 = sld [smem:[#allocation2 + $0x3e]]
        %s2393 = sld [smem:[#allocation2 + $0x3f]]
        %s2394 = sld [smem:[#allocation2 + $0x40]]
        %s2395 = sld [smem:[#allocation2 + $0x41]]
        %s2396 = scalar_lea.vmem %s6, 320
        %v2397 = vld [vmem:[%s2396] sm:$0xff]
        %v2398 = vld [vmem:[%s2396 + $0x8] sm:$0xff]
        %v2399 = vld [vmem:[%s2396 + $0x10] sm:$0xff]
        %v2400 = vld [vmem:[%s2396 + $0x18] sm:$0xff]
        %v2401 = vstv %s2386
        %v2402 = vmul.f32 %v2401, %v2384
        %2404 = vset.pattern.permute.xlu0 0
        %2405 = vperm.xlu0 %2404, %v2397
        %v2406 = vpop.permute.xlu0 %2405
        %2409 = vset.pattern.permute.xlu0 0
        %2410 = vperm.xlu0 %2409, %v2398
        %v2411 = vpop.permute.xlu0 %2410
        %2414 = vset.pattern.permute.xlu0 0
        %2415 = vperm.xlu0 %2414, %v2399
        %v2416 = vpop.permute.xlu0 %2415
        %2419 = vset.pattern.permute.xlu0 0
        %2420 = vperm.xlu0 %2419, %v2400
        %v2421 = vpop.permute.xlu0 %2420
        %2423 = vmatprep.subr.mxu0 0.0
        %2424 = vmatpush1.msra.mxu0 %v2402
        %2425 = vmatprep.subr.mxu0 0.0
        %2426 = vmatpush1.msra.mxu0 0.0
        %2427 = vmatprep.subr.mxu0 0.0
        %2428 = vmatpush1.msra.mxu0 0.0
        %2429 = vmatprep.subr.mxu0 0.0
        %2430 = vmatpush1.msra.mxu0 0.0
        %2431 = vmatprep.subr.mxu0 0.0
        %2432 = vmatpush1.msra.mxu0 0.0
        %2433 = vmatprep.subr.mxu0 0.0
        %2434 = vmatpush1.msra.mxu0 0.0
        %2435 = vmatprep.subr.mxu0 0.0
        %2436 = vmatpush1.msra.mxu0 0.0
        %2437 = vmatprep.subr.mxu0 0.0
        %2438 = vmatpush1.msra.mxu0 0.0
        %2439 = vmatprep.subr.mxu0 0.0
        %2440 = vmatpush1.msra.mxu0 0.0
        %2441 = vmatprep.subr.mxu0 0.0
        %2442 = vmatpush1.msra.mxu0 0.0
        %2443 = vmatprep.subr.mxu0 0.0
        %2444 = vmatpush1.msra.mxu0 0.0
        %2445 = vmatprep.subr.mxu0 0.0
        %2446 = vmatpush1.msra.mxu0 0.0
        %2447 = vmatprep.subr.mxu0 0.0
        %2448 = vmatpush1.msra.mxu0 0.0
        %2449 = vmatprep.subr.mxu0 0.0
        %2450 = vmatpush1.msra.mxu0 0.0
        %2451 = vmatprep.subr.mxu0 0.0
        %2452 = vmatpush1.msra.mxu0 0.0
        %2453 = vmatprep.subr.mxu0 0.0
        %2454 = vmatpush1.msra.mxu0 0.0
        %2455 = vmatprep.subr.mxu0 0.0
        %2456 = vmatpush1.msra.mxu0 0.0
        %2457 = vmatprep.subr.mxu0 0.0
        %2458 = vmatpush1.msra.mxu0 0.0
        %2459 = vmatprep.subr.mxu0 0.0
        %2460 = vmatpush1.msra.mxu0 0.0
        %2461 = vmatprep.subr.mxu0 0.0
        %2462 = vmatpush1.msra.mxu0 0.0
        %2463 = vmatprep.subr.mxu0 0.0
        %2464 = vmatpush1.msra.mxu0 0.0
        %2465 = vmatprep.subr.mxu0 0.0
        %2466 = vmatpush1.msra.mxu0 0.0
        %2467 = vmatprep.subr.mxu0 0.0
        %2468 = vmatpush1.msra.mxu0 0.0
        %2469 = vmatprep.subr.mxu0 0.0
        %2470 = vmatpush1.msra.mxu0 0.0
        %2471 = vmatprep.subr.mxu0 0.0
        %2472 = vmatpush1.msra.mxu0 0.0
        %2473 = vmatprep.subr.mxu0 0.0
        %2474 = vmatpush1.msra.mxu0 0.0
        %2475 = vmatprep.subr.mxu0 0.0
        %2476 = vmatpush1.msra.mxu0 0.0
        %2477 = vmatprep.subr.mxu0 0.0
        %2478 = vmatpush1.msra.mxu0 0.0
        %2479 = vmatprep.subr.mxu0 0.0
        %2480 = vmatpush1.msra.mxu0 0.0
        %2481 = vmatprep.subr.mxu0 0.0
        %2482 = vmatpush1.msra.mxu0 0.0
        %2483 = vmatprep.subr.mxu0 0.0
        %2484 = vmatpush1.msra.mxu0 0.0
        %2485 = vmatprep.subr.mxu0 0.0
        %2486 = vmatpush1.msra.mxu0 0.0
        %2487 = vmatprep.mubr.f32.mxu0 0.0
        %2488 = vmatmul.mubr.f32.gmra.mrb[0].mxu0 %v354
        %v2489 = vpop.f32.mrb[0].mxu0
        %v2490 = vadd.f32 %v2406, %v2489
        %v2491 = vpop.f32.mrb[0].mxu0
        %2492 = vmatprep.mubr.f32.mxu0 0.0
        %2493 = vmatmul.mubr.f32.gmra.mrb[0].mxu0 %v357
        %v2494 = vpop.f32.mrb[0].mxu0
        %v2495 = vadd.f32 %v2411, %v2494
        %v2496 = vpop.f32.mrb[0].mxu0
        %2497 = vmatprep.mubr.f32.mxu0 0.0
        %2498 = vmatmul.mubr.f32.gmra.mrb[0].mxu0 %v360
        %v2499 = vpop.f32.mrb[0].mxu0
        %v2500 = vadd.f32 %v2416, %v2499
        %v2501 = vpop.f32.mrb[0].mxu0
        %2502 = vmatprep.mubr.f32.mxu0 0.0
        %2503 = vmatmul.mubr.f32.gmra.mrb[0].mxu0 %v363
        %v2504 = vpop.f32.mrb[0].mxu0
        %v2505 = vadd.f32 %v2421, %v2504
        %v2506 = vpop.f32.mrb[0].mxu0
        %2507 = vdwg.mxu0
        %v2508 = vmax.f32 %v2490, 0.0
        %v2509 = vmax.f32 %v2495, 0.0
        %v2510 = vmax.f32 %v2500, 0.0
        %v2511 = vmax.f32 %v2505, 0.0
        %2512 = vmatprep.subr.mxu0 0.0
        %2513 = vmatpush1.msra.mxu0 %v2508
        %2514 = vmatprep.subr.mxu0 0.0
        %2515 = vmatpush1.msra.mxu0 %v2509
        %2516 = vmatprep.subr.mxu0 0.0
        %2517 = vmatpush1.msra.mxu0 %v2510
        %2518 = vmatprep.subr.mxu0 0.0
        %2519 = vmatpush1.msra.mxu0 %v2511
        %2520 = vmatprep.subr.mxu0 0.0
        %2521 = vmatpush1.msra.mxu0 0.0
        %2522 = vmatprep.subr.mxu0 0.0
        %2523 = vmatpush1.msra.mxu0 0.0
        %2524 = vmatprep.subr.mxu0 0.0
        %2525 = vmatpush1.msra.mxu0 0.0
        %2526 = vmatprep.subr.mxu0 0.0
        %2527 = vmatpush1.msra.mxu0 0.0
        %2528 = vmatprep.subr.mxu0 0.0
        %2529 = vmatpush1.msra.mxu0 0.0
        %2530 = vmatprep.subr.mxu0 0.0
        %2531 = vmatpush1.msra.mxu0 0.0
        %2532 = vmatprep.subr.mxu0 0.0
        %2533 = vmatpush1.msra.mxu0 0.0
        %2534 = vmatprep.subr.mxu0 0.0
        %2535 = vmatpush1.msra.mxu0 0.0
        %2536 = vmatprep.subr.mxu0 0.0
        %2537 = vmatpush1.msra.mxu0 0.0
        %2538 = vmatprep.subr.mxu0 0.0
        %2539 = vmatpush1.msra.mxu0 0.0
        %2540 = vmatprep.subr.mxu0 0.0
        %2541 = vmatpush1.msra.mxu0 0.0
        %2542 = vmatprep.subr.mxu0 0.0
        %2543 = vmatpush1.msra.mxu0 0.0
        %2544 = vmatprep.subr.mxu0 0.0
        %2545 = vmatpush1.msra.mxu0 0.0
        %2546 = vmatprep.subr.mxu0 0.0
        %2547 = vmatpush1.msra.mxu0 0.0
        %2548 = vmatprep.subr.mxu0 0.0
        %2549 = vmatpush1.msra.mxu0 0.0
        %2550 = vmatprep.subr.mxu0 0.0
        %2551 = vmatpush1.msra.mxu0 0.0
        %2552 = vmatprep.subr.mxu0 0.0
        %2553 = vmatpush1.msra.mxu0 0.0
        %2554 = vmatprep.subr.mxu0 0.0
        %2555 = vmatpush1.msra.mxu0 0.0
        %2556 = vmatprep.subr.mxu0 0.0
        %2557 = vmatpush1.msra.mxu0 0.0
        %2558 = vmatprep.subr.mxu0 0.0
        %2559 = vmatpush1.msra.mxu0 0.0
        %2560 = vmatprep.subr.mxu0 0.0
        %2561 = vmatpush1.msra.mxu0 0.0
        %2562 = vmatprep.subr.mxu0 0.0
        %2563 = vmatpush1.msra.mxu0 0.0
        %2564 = vmatprep.subr.mxu0 0.0
        %2565 = vmatpush1.msra.mxu0 0.0
        %2566 = vmatprep.subr.mxu0 0.0
        %2567 = vmatpush1.msra.mxu0 0.0
        %2568 = vmatprep.subr.mxu0 0.0
        %2569 = vmatpush1.msra.mxu0 0.0
        %2570 = vmatprep.subr.mxu0 0.0
        %2571 = vmatpush1.msra.mxu0 0.0
        %2572 = vmatprep.subr.mxu0 0.0
        %2573 = vmatpush1.msra.mxu0 0.0
        %2574 = vmatprep.subr.mxu0 0.0
        %2575 = vmatpush1.msra.mxu0 0.0
        %2576 = vmatprep.mubr.f32.mxu0 0.0
        %2577 = vmatmul.mubr.f32.gmra.mrb[0].mxu0 %v461
        %v2578 = vpop.f32.mrb[0].mxu0
        %v2579 = vadd.f32 %v457, %v2578
        %v2580 = vpop.f32.mrb[0].mxu0
        %2581 = vdwg.mxu0
        %v2582 = vstv %s2385
        %v2583 = vmul.f32 %v2582, %v2384
        %v2584 = vstv %s2387
        %v2585 = vmul.f32 %v2584, %v2579
        %v2586 = vadd.f32 %v2583, %v2585
        %v2587 = vsub.f32 %v2384, %v2586
        %v2588 = vstv %s2391
        %v2589 = vmul.f32 %v2587, %v2588
        %v2590 = vstv %s2393
        %v2591 = vmul.f32 %v2589, %v2590
        %v2592 = vadd.f32 %v2384, %v2591
        %s2593 = scalar_lea.vmem %s6, 352
        %v2594 = vld [vmem:[%s2593] sm:$0xff]
        %v2595 = vld [vmem:[%s2593 + $0x8] sm:$0xff]
        %v2596 = vld [vmem:[%s2593 + $0x10] sm:$0xff]
        %v2597 = vld [vmem:[%s2593 + $0x18] sm:$0xff]
        %v2598 = vstv %s2389
        %v2599 = vmul.f32 %v2598, %v2592
        %2601 = vset.pattern.permute.xlu0 0
        %2602 = vperm.xlu0 %2601, %v2594
        %v2603 = vpop.permute.xlu0 %2602
        %2606 = vset.pattern.permute.xlu0 0
        %2607 = vperm.xlu0 %2606, %v2595
        %v2608 = vpop.permute.xlu0 %2607
        %2611 = vset.pattern.permute.xlu0 0
        %2612 = vperm.xlu0 %2611, %v2596
        %v2613 = vpop.permute.xlu0 %2612
        %2616 = vset.pattern.permute.xlu0 0
        %2617 = vperm.xlu0 %2616, %v2597
        %v2618 = vpop.permute.xlu0 %2617
        %2620 = vmatprep.subr.mxu0 0.0
        %2621 = vmatpush1.msra.mxu0 %v2599
        %2622 = vmatprep.subr.mxu0 0.0
        %2623 = vmatpush1.msra.mxu0 0.0
        %2624 = vmatprep.subr.mxu0 0.0
        %2625 = vmatpush1.msra.mxu0 0.0
        %2626 = vmatprep.subr.mxu0 0.0
        %2627 = vmatpush1.msra.mxu0 0.0
        %2628 = vmatprep.subr.mxu0 0.0
        %2629 = vmatpush1.msra.mxu0 0.0
        %2630 = vmatprep.subr.mxu0 0.0
        %2631 = vmatpush1.msra.mxu0 0.0
        %2632 = vmatprep.subr.mxu0 0.0
        %2633 = vmatpush1.msra.mxu0 0.0
        %2634 = vmatprep.subr.mxu0 0.0
        %2635 = vmatpush1.msra.mxu0 0.0
        %2636 = vmatprep.subr.mxu0 0.0
        %2637 = vmatpush1.msra.mxu0 0.0
        %2638 = vmatprep.subr.mxu0 0.0
        %2639 = vmatpush1.msra.mxu0 0.0
        %2640 = vmatprep.subr.mxu0 0.0
        %2641 = vmatpush1.msra.mxu0 0.0
        %2642 = vmatprep.subr.mxu0 0.0
        %2643 = vmatpush1.msra.mxu0 0.0
        %2644 = vmatprep.subr.mxu0 0.0
        %2645 = vmatpush1.msra.mxu0 0.0
        %2646 = vmatprep.subr.mxu0 0.0
        %2647 = vmatpush1.msra.mxu0 0.0
        %2648 = vmatprep.subr.mxu0 0.0
        %2649 = vmatpush1.msra.mxu0 0.0
        %2650 = vmatprep.subr.mxu0 0.0
        %2651 = vmatpush1.msra.mxu0 0.0
        %2652 = vmatprep.subr.mxu0 0.0
        %2653 = vmatpush1.msra.mxu0 0.0
        %2654 = vmatprep.subr.mxu0 0.0
        %2655 = vmatpush1.msra.mxu0 0.0
        %2656 = vmatprep.subr.mxu0 0.0
        %2657 = vmatpush1.msra.mxu0 0.0
        %2658 = vmatprep.subr.mxu0 0.0
        %2659 = vmatpush1.msra.mxu0 0.0
        %2660 = vmatprep.subr.mxu0 0.0
        %2661 = vmatpush1.msra.mxu0 0.0
        %2662 = vmatprep.subr.mxu0 0.0
        %2663 = vmatpush1.msra.mxu0 0.0
        %2664 = vmatprep.subr.mxu0 0.0
        %2665 = vmatpush1.msra.mxu0 0.0
        %2666 = vmatprep.subr.mxu0 0.0
        %2667 = vmatpush1.msra.mxu0 0.0
        %2668 = vmatprep.subr.mxu0 0.0
        %2669 = vmatpush1.msra.mxu0 0.0
        %2670 = vmatprep.subr.mxu0 0.0
        %2671 = vmatpush1.msra.mxu0 0.0
        %2672 = vmatprep.subr.mxu0 0.0
        %2673 = vmatpush1.msra.mxu0 0.0
        %2674 = vmatprep.subr.mxu0 0.0
        %2675 = vmatpush1.msra.mxu0 0.0
        %2676 = vmatprep.subr.mxu0 0.0
        %2677 = vmatpush1.msra.mxu0 0.0
        %2678 = vmatprep.subr.mxu0 0.0
        %2679 = vmatpush1.msra.mxu0 0.0
        %2680 = vmatprep.subr.mxu0 0.0
        %2681 = vmatpush1.msra.mxu0 0.0
        %2682 = vmatprep.subr.mxu0 0.0
        %2683 = vmatpush1.msra.mxu0 0.0
        %2684 = vmatprep.mubr.f32.mxu0 0.0
        %2685 = vmatmul.mubr.f32.gmra.mrb[0].mxu0 %v354
        %v2686 = vpop.f32.mrb[0].mxu0
        %v2687 = vadd.f32 %v2603, %v2686
        %v2688 = vpop.f32.mrb[0].mxu0
        %2689 = vmatprep.mubr.f32.mxu0 0.0
        %2690 = vmatmul.mubr.f32.gmra.mrb[0].mxu0 %v357
        %v2691 = vpop.f32.mrb[0].mxu0
        %v2692 = vadd.f32 %v2608, %v2691
        %v2693 = vpop.f32.mrb[0].mxu0
        %2694 = vmatprep.mubr.f32.mxu0 0.0
        %2695 = vmatmul.mubr.f32.gmra.mrb[0].mxu0 %v360
        %v2696 = vpop.f32.mrb[0].mxu0
        %v2697 = vadd.f32 %v2613, %v2696
        %v2698 = vpop.f32.mrb[0].mxu0
        %2699 = vmatprep.mubr.f32.mxu0 0.0
        %2700 = vmatmul.mubr.f32.gmra.mrb[0].mxu0 %v363
        %v2701 = vpop.f32.mrb[0].mxu0
        %v2702 = vadd.f32 %v2618, %v2701
        %v2703 = vpop.f32.mrb[0].mxu0
        %2704 = vdwg.mxu0
        %v2705 = vmax.f32 %v2687, 0.0
        %v2706 = vmax.f32 %v2692, 0.0
        %v2707 = vmax.f32 %v2697, 0.0
        %v2708 = vmax.f32 %v2702, 0.0
        %2709 = vmatprep.subr.mxu0 0.0
        %2710 = vmatpush1.msra.mxu0 %v2705
        %2711 = vmatprep.subr.mxu0 0.0
        %2712 = vmatpush1.msra.mxu0 %v2706
        %2713 = vmatprep.subr.mxu0 0.0
        %2714 = vmatpush1.msra.mxu0 %v2707
        %2715 = vmatprep.subr.mxu0 0.0
        %2716 = vmatpush1.msra.mxu0 %v2708
        %2717 = vmatprep.subr.mxu0 0.0
        %2718 = vmatpush1.msra.mxu0 0.0
        %2719 = vmatprep.subr.mxu0 0.0
        %2720 = vmatpush1.msra.mxu0 0.0
        %2721 = vmatprep.subr.mxu0 0.0
        %2722 = vmatpush1.msra.mxu0 0.0
        %2723 = vmatprep.subr.mxu0 0.0
        %2724 = vmatpush1.msra.mxu0 0.0
        %2725 = vmatprep.subr.mxu0 0.0
        %2726 = vmatpush1.msra.mxu0 0.0
        %2727 = vmatprep.subr.mxu0 0.0
        %2728 = vmatpush1.msra.mxu0 0.0
        %2729 = vmatprep.subr.mxu0 0.0
        %2730 = vmatpush1.msra.mxu0 0.0
        %2731 = vmatprep.subr.mxu0 0.0
        %2732 = vmatpush1.msra.mxu0 0.0
        %2733 = vmatprep.subr.mxu0 0.0
        %2734 = vmatpush1.msra.mxu0 0.0
        %2735 = vmatprep.subr.mxu0 0.0
        %2736 = vmatpush1.msra.mxu0 0.0
        %2737 = vmatprep.subr.mxu0 0.0
        %2738 = vmatpush1.msra.mxu0 0.0
        %2739 = vmatprep.subr.mxu0 0.0
        %2740 = vmatpush1.msra.mxu0 0.0
        %2741 = vmatprep.subr.mxu0 0.0
        %2742 = vmatpush1.msra.mxu0 0.0
        %2743 = vmatprep.subr.mxu0 0.0
        %2744 = vmatpush1.msra.mxu0 0.0
        %2745 = vmatprep.subr.mxu0 0.0
        %2746 = vmatpush1.msra.mxu0 0.0
        %2747 = vmatprep.subr.mxu0 0.0
        %2748 = vmatpush1.msra.mxu0 0.0
        %2749 = vmatprep.subr.mxu0 0.0
        %2750 = vmatpush1.msra.mxu0 0.0
        %2751 = vmatprep.subr.mxu0 0.0
        %2752 = vmatpush1.msra.mxu0 0.0
        %2753 = vmatprep.subr.mxu0 0.0
        %2754 = vmatpush1.msra.mxu0 0.0
        %2755 = vmatprep.subr.mxu0 0.0
        %2756 = vmatpush1.msra.mxu0 0.0
        %2757 = vmatprep.subr.mxu0 0.0
        %2758 = vmatpush1.msra.mxu0 0.0
        %2759 = vmatprep.subr.mxu0 0.0
        %2760 = vmatpush1.msra.mxu0 0.0
        %2761 = vmatprep.subr.mxu0 0.0
        %2762 = vmatpush1.msra.mxu0 0.0
        %2763 = vmatprep.subr.mxu0 0.0
        %2764 = vmatpush1.msra.mxu0 0.0
        %2765 = vmatprep.subr.mxu0 0.0
        %2766 = vmatpush1.msra.mxu0 0.0
        %2767 = vmatprep.subr.mxu0 0.0
        %2768 = vmatpush1.msra.mxu0 0.0
        %2769 = vmatprep.subr.mxu0 0.0
        %2770 = vmatpush1.msra.mxu0 0.0
        %2771 = vmatprep.subr.mxu0 0.0
        %2772 = vmatpush1.msra.mxu0 0.0
        %2773 = vmatprep.mubr.f32.mxu0 0.0
        %2774 = vmatmul.mubr.f32.gmra.mrb[0].mxu0 %v461
        %v2775 = vpop.f32.mrb[0].mxu0
        %v2776 = vadd.f32 %v457, %v2775
        %v2777 = vpop.f32.mrb[0].mxu0
        %2778 = vdwg.mxu0
        %v2779 = vstv %s2388
        %v2780 = vmul.f32 %v2779, %v2592
        %v2781 = vstv %s2390
        %v2782 = vmul.f32 %v2781, %v2776
        %v2783 = vadd.f32 %v2780, %v2782
        %v2784 = vsub.f32 %v2592, %v2783
        %v2785 = vstv %s2392
        %v2786 = vmul.f32 %v2784, %v2785
        %v2787 = vstv %s2394
        %v2788 = vmul.f32 %v2786, %v2787
        %v2789 = vadd.f32 %v2384, %v2788
        %s2790 = scalar_lea.vmem %s307, 40
        %v2791 = vld [vmem:[%s2790] sm:$0xff]
        %v2792 = vstv %s2395
        %v2793 = vmul.f32 %v2791, %v2792
        %v2794 = vadd.f32 %v2789, %v2793
        %s2795 = sld [smem:[#allocation2 + $0x42]]
        %s2796 = sld [smem:[#allocation2 + $0x43]]
        %s2797 = sld [smem:[#allocation2 + $0x44]]
        %s2798 = sld [smem:[#allocation2 + $0x45]]
        %s2799 = sld [smem:[#allocation2 + $0x46]]
        %s2800 = sld [smem:[#allocation2 + $0x47]]
        %s2801 = sld [smem:[#allocation2 + $0x48]]
        %s2802 = sld [smem:[#allocation2 + $0x49]]
        %s2803 = sld [smem:[#allocation2 + $0x4a]]
        %s2804 = sld [smem:[#allocation2 + $0x4b]]
        %s2805 = sld [smem:[#allocation2 + $0x4c]]
        %s2806 = scalar_lea.vmem %s6, 384
        %v2807 = vld [vmem:[%s2806] sm:$0xff]
        %v2808 = vld [vmem:[%s2806 + $0x8] sm:$0xff]
        %v2809 = vld [vmem:[%s2806 + $0x10] sm:$0xff]
        %v2810 = vld [vmem:[%s2806 + $0x18] sm:$0xff]
        %v2811 = vstv %s2796
        %v2812 = vmul.f32 %v2811, %v2794
        %2814 = vset.pattern.permute.xlu0 0
        %2815 = vperm.xlu0 %2814, %v2807
        %v2816 = vpop.permute.xlu0 %2815
        %2819 = vset.pattern.permute.xlu0 0
        %2820 = vperm.xlu0 %2819, %v2808
        %v2821 = vpop.permute.xlu0 %2820
        %2824 = vset.pattern.permute.xlu0 0
        %2825 = vperm.xlu0 %2824, %v2809
        %v2826 = vpop.permute.xlu0 %2825
        %2829 = vset.pattern.permute.xlu0 0
        %2830 = vperm.xlu0 %2829, %v2810
        %v2831 = vpop.permute.xlu0 %2830
        %2833 = vmatprep.subr.mxu0 0.0
        %2834 = vmatpush1.msra.mxu0 %v2812
        %2835 = vmatprep.subr.mxu0 0.0
        %2836 = vmatpush1.msra.mxu0 0.0
        %2837 = vmatprep.subr.mxu0 0.0
        %2838 = vmatpush1.msra.mxu0 0.0
        %2839 = vmatprep.subr.mxu0 0.0
        %2840 = vmatpush1.msra.mxu0 0.0
        %2841 = vmatprep.subr.mxu0 0.0
        %2842 = vmatpush1.msra.mxu0 0.0
        %2843 = vmatprep.subr.mxu0 0.0
        %2844 = vmatpush1.msra.mxu0 0.0
        %2845 = vmatprep.subr.mxu0 0.0
        %2846 = vmatpush1.msra.mxu0 0.0
        %2847 = vmatprep.subr.mxu0 0.0
        %2848 = vmatpush1.msra.mxu0 0.0
        %2849 = vmatprep.subr.mxu0 0.0
        %2850 = vmatpush1.msra.mxu0 0.0
        %2851 = vmatprep.subr.mxu0 0.0
        %2852 = vmatpush1.msra.mxu0 0.0
        %2853 = vmatprep.subr.mxu0 0.0
        %2854 = vmatpush1.msra.mxu0 0.0
        %2855 = vmatprep.subr.mxu0 0.0
        %2856 = vmatpush1.msra.mxu0 0.0
        %2857 = vmatprep.subr.mxu0 0.0
        %2858 = vmatpush1.msra.mxu0 0.0
        %2859 = vmatprep.subr.mxu0 0.0
        %2860 = vmatpush1.msra.mxu0 0.0
        %2861 = vmatprep.subr.mxu0 0.0
        %2862 = vmatpush1.msra.mxu0 0.0
        %2863 = vmatprep.subr.mxu0 0.0
        %2864 = vmatpush1.msra.mxu0 0.0
        %2865 = vmatprep.subr.mxu0 0.0
        %2866 = vmatpush1.msra.mxu0 0.0
        %2867 = vmatprep.subr.mxu0 0.0
        %2868 = vmatpush1.msra.mxu0 0.0
        %2869 = vmatprep.subr.mxu0 0.0
        %2870 = vmatpush1.msra.mxu0 0.0
        %2871 = vmatprep.subr.mxu0 0.0
        %2872 = vmatpush1.msra.mxu0 0.0
        %2873 = vmatprep.subr.mxu0 0.0
        %2874 = vmatpush1.msra.mxu0 0.0
        %2875 = vmatprep.subr.mxu0 0.0
        %2876 = vmatpush1.msra.mxu0 0.0
        %2877 = vmatprep.subr.mxu0 0.0
        %2878 = vmatpush1.msra.mxu0 0.0
        %2879 = vmatprep.subr.mxu0 0.0
        %2880 = vmatpush1.msra.mxu0 0.0
        %2881 = vmatprep.subr.mxu0 0.0
        %2882 = vmatpush1.msra.mxu0 0.0
        %2883 = vmatprep.subr.mxu0 0.0
        %2884 = vmatpush1.msra.mxu0 0.0
        %2885 = vmatprep.subr.mxu0 0.0
        %2886 = vmatpush1.msra.mxu0 0.0
        %2887 = vmatprep.subr.mxu0 0.0
        %2888 = vmatpush1.msra.mxu0 0.0
        %2889 = vmatprep.subr.mxu0 0.0
        %2890 = vmatpush1.msra.mxu0 0.0
        %2891 = vmatprep.subr.mxu0 0.0
        %2892 = vmatpush1.msra.mxu0 0.0
        %2893 = vmatprep.subr.mxu0 0.0
        %2894 = vmatpush1.msra.mxu0 0.0
        %2895 = vmatprep.subr.mxu0 0.0
        %2896 = vmatpush1.msra.mxu0 0.0
        %2897 = vmatprep.mubr.f32.mxu0 0.0
        %2898 = vmatmul.mubr.f32.gmra.mrb[0].mxu0 %v354
        %v2899 = vpop.f32.mrb[0].mxu0
        %v2900 = vadd.f32 %v2816, %v2899
        %v2901 = vpop.f32.mrb[0].mxu0
        %2902 = vmatprep.mubr.f32.mxu0 0.0
        %2903 = vmatmul.mubr.f32.gmra.mrb[0].mxu0 %v357
        %v2904 = vpop.f32.mrb[0].mxu0
        %v2905 = vadd.f32 %v2821, %v2904
        %v2906 = vpop.f32.mrb[0].mxu0
        %2907 = vmatprep.mubr.f32.mxu0 0.0
        %2908 = vmatmul.mubr.f32.gmra.mrb[0].mxu0 %v360
        %v2909 = vpop.f32.mrb[0].mxu0
        %v2910 = vadd.f32 %v2826, %v2909
        %v2911 = vpop.f32.mrb[0].mxu0
        %2912 = vmatprep.mubr.f32.mxu0 0.0
        %2913 = vmatmul.mubr.f32.gmra.mrb[0].mxu0 %v363
        %v2914 = vpop.f32.mrb[0].mxu0
        %v2915 = vadd.f32 %v2831, %v2914
        %v2916 = vpop.f32.mrb[0].mxu0
        %2917 = vdwg.mxu0
        %v2918 = vmax.f32 %v2900, 0.0
        %v2919 = vmax.f32 %v2905, 0.0
        %v2920 = vmax.f32 %v2910, 0.0
        %v2921 = vmax.f32 %v2915, 0.0
        %2922 = vmatprep.subr.mxu0 0.0
        %2923 = vmatpush1.msra.mxu0 %v2918
        %2924 = vmatprep.subr.mxu0 0.0
        %2925 = vmatpush1.msra.mxu0 %v2919
        %2926 = vmatprep.subr.mxu0 0.0
        %2927 = vmatpush1.msra.mxu0 %v2920
        %2928 = vmatprep.subr.mxu0 0.0
        %2929 = vmatpush1.msra.mxu0 %v2921
        %2930 = vmatprep.subr.mxu0 0.0
        %2931 = vmatpush1.msra.mxu0 0.0
        %2932 = vmatprep.subr.mxu0 0.0
        %2933 = vmatpush1.msra.mxu0 0.0
        %2934 = vmatprep.subr.mxu0 0.0
        %2935 = vmatpush1.msra.mxu0 0.0
        %2936 = vmatprep.subr.mxu0 0.0
        %2937 = vmatpush1.msra.mxu0 0.0
        %2938 = vmatprep.subr.mxu0 0.0
        %2939 = vmatpush1.msra.mxu0 0.0
        %2940 = vmatprep.subr.mxu0 0.0
        %2941 = vmatpush1.msra.mxu0 0.0
        %2942 = vmatprep.subr.mxu0 0.0
        %2943 = vmatpush1.msra.mxu0 0.0
        %2944 = vmatprep.subr.mxu0 0.0
        %2945 = vmatpush1.msra.mxu0 0.0
        %2946 = vmatprep.subr.mxu0 0.0
        %2947 = vmatpush1.msra.mxu0 0.0
        %2948 = vmatprep.subr.mxu0 0.0
        %2949 = vmatpush1.msra.mxu0 0.0
        %2950 = vmatprep.subr.mxu0 0.0
        %2951 = vmatpush1.msra.mxu0 0.0
        %2952 = vmatprep.subr.mxu0 0.0
        %2953 = vmatpush1.msra.mxu0 0.0
        %2954 = vmatprep.subr.mxu0 0.0
        %2955 = vmatpush1.msra.mxu0 0.0
        %2956 = vmatprep.subr.mxu0 0.0
        %2957 = vmatpush1.msra.mxu0 0.0
        %2958 = vmatprep.subr.mxu0 0.0
        %2959 = vmatpush1.msra.mxu0 0.0
        %2960 = vmatprep.subr.mxu0 0.0
        %2961 = vmatpush1.msra.mxu0 0.0
        %2962 = vmatprep.subr.mxu0 0.0
        %2963 = vmatpush1.msra.mxu0 0.0
        %2964 = vmatprep.subr.mxu0 0.0
        %2965 = vmatpush1.msra.mxu0 0.0
        %2966 = vmatprep.subr.mxu0 0.0
        %2967 = vmatpush1.msra.mxu0 0.0
        %2968 = vmatprep.subr.mxu0 0.0
        %2969 = vmatpush1.msra.mxu0 0.0
        %2970 = vmatprep.subr.mxu0 0.0
        %2971 = vmatpush1.msra.mxu0 0.0
        %2972 = vmatprep.subr.mxu0 0.0
        %2973 = vmatpush1.msra.mxu0 0.0
        %2974 = vmatprep.subr.mxu0 0.0
        %2975 = vmatpush1.msra.mxu0 0.0
        %2976 = vmatprep.subr.mxu0 0.0
        %2977 = vmatpush1.msra.mxu0 0.0
        %2978 = vmatprep.subr.mxu0 0.0
        %2979 = vmatpush1.msra.mxu0 0.0
        %2980 = vmatprep.subr.mxu0 0.0
        %2981 = vmatpush1.msra.mxu0 0.0
        %2982 = vmatprep.subr.mxu0 0.0
        %2983 = vmatpush1.msra.mxu0 0.0
        %2984 = vmatprep.subr.mxu0 0.0
        %2985 = vmatpush1.msra.mxu0 0.0
        %2986 = vmatprep.mubr.f32.mxu0 0.0
        %2987 = vmatmul.mubr.f32.gmra.mrb[0].mxu0 %v461
        %v2988 = vpop.f32.mrb[0].mxu0
        %v2989 = vadd.f32 %v457, %v2988
        %v2990 = vpop.f32.mrb[0].mxu0
        %2991 = vdwg.mxu0
        %v2992 = vstv %s2795
        %v2993 = vmul.f32 %v2992, %v2794
        %v2994 = vstv %s2797
        %v2995 = vmul.f32 %v2994, %v2989
        %v2996 = vadd.f32 %v2993, %v2995
        %v2997 = vsub.f32 %v2794, %v2996
        %v2998 = vstv %s2801
        %v2999 = vmul.f32 %v2997, %v2998
        %v3000 = vstv %s2803
        %v3001 = vmul.f32 %v2999, %v3000
        %v3002 = vadd.f32 %v2794, %v3001
        %s3003 = scalar_lea.vmem %s6, 416
        %v3004 = vld [vmem:[%s3003] sm:$0xff]
        %v3005 = vld [vmem:[%s3003 + $0x8] sm:$0xff]
        %v3006 = vld [vmem:[%s3003 + $0x10] sm:$0xff]
        %v3007 = vld [vmem:[%s3003 + $0x18] sm:$0xff]
        %v3008 = vstv %s2799
        %v3009 = vmul.f32 %v3008, %v3002
        %3011 = vset.pattern.permute.xlu0 0
        %3012 = vperm.xlu0 %3011, %v3004
        %v3013 = vpop.permute.xlu0 %3012
        %3016 = vset.pattern.permute.xlu0 0
        %3017 = vperm.xlu0 %3016, %v3005
        %v3018 = vpop.permute.xlu0 %3017
        %3021 = vset.pattern.permute.xlu0 0
        %3022 = vperm.xlu0 %3021, %v3006
        %v3023 = vpop.permute.xlu0 %3022
        %3026 = vset.pattern.permute.xlu0 0
        %3027 = vperm.xlu0 %3026, %v3007
        %v3028 = vpop.permute.xlu0 %3027
        %3030 = vmatprep.subr.mxu0 0.0
        %3031 = vmatpush1.msra.mxu0 %v3009
        %3032 = vmatprep.subr.mxu0 0.0
        %3033 = vmatpush1.msra.mxu0 0.0
        %3034 = vmatprep.subr.mxu0 0.0
        %3035 = vmatpush1.msra.mxu0 0.0
        %3036 = vmatprep.subr.mxu0 0.0
        %3037 = vmatpush1.msra.mxu0 0.0
        %3038 = vmatprep.subr.mxu0 0.0
        %3039 = vmatpush1.msra.mxu0 0.0
        %3040 = vmatprep.subr.mxu0 0.0
        %3041 = vmatpush1.msra.mxu0 0.0
        %3042 = vmatprep.subr.mxu0 0.0
        %3043 = vmatpush1.msra.mxu0 0.0
        %3044 = vmatprep.subr.mxu0 0.0
        %3045 = vmatpush1.msra.mxu0 0.0
        %3046 = vmatprep.subr.mxu0 0.0
        %3047 = vmatpush1.msra.mxu0 0.0
        %3048 = vmatprep.subr.mxu0 0.0
        %3049 = vmatpush1.msra.mxu0 0.0
        %3050 = vmatprep.subr.mxu0 0.0
        %3051 = vmatpush1.msra.mxu0 0.0
        %3052 = vmatprep.subr.mxu0 0.0
        %3053 = vmatpush1.msra.mxu0 0.0
        %3054 = vmatprep.subr.mxu0 0.0
        %3055 = vmatpush1.msra.mxu0 0.0
        %3056 = vmatprep.subr.mxu0 0.0
        %3057 = vmatpush1.msra.mxu0 0.0
        %3058 = vmatprep.subr.mxu0 0.0
        %3059 = vmatpush1.msra.mxu0 0.0
        %3060 = vmatprep.subr.mxu0 0.0
        %3061 = vmatpush1.msra.mxu0 0.0
        %3062 = vmatprep.subr.mxu0 0.0
        %3063 = vmatpush1.msra.mxu0 0.0
        %3064 = vmatprep.subr.mxu0 0.0
        %3065 = vmatpush1.msra.mxu0 0.0
        %3066 = vmatprep.subr.mxu0 0.0
        %3067 = vmatpush1.msra.mxu0 0.0
        %3068 = vmatprep.subr.mxu0 0.0
        %3069 = vmatpush1.msra.mxu0 0.0
        %3070 = vmatprep.subr.mxu0 0.0
        %3071 = vmatpush1.msra.mxu0 0.0
        %3072 = vmatprep.subr.mxu0 0.0
        %3073 = vmatpush1.msra.mxu0 0.0
        %3074 = vmatprep.subr.mxu0 0.0
        %3075 = vmatpush1.msra.mxu0 0.0
        %3076 = vmatprep.subr.mxu0 0.0
        %3077 = vmatpush1.msra.mxu0 0.0
        %3078 = vmatprep.subr.mxu0 0.0
        %3079 = vmatpush1.msra.mxu0 0.0
        %3080 = vmatprep.subr.mxu0 0.0
        %3081 = vmatpush1.msra.mxu0 0.0
        %3082 = vmatprep.subr.mxu0 0.0
        %3083 = vmatpush1.msra.mxu0 0.0
        %3084 = vmatprep.subr.mxu0 0.0
        %3085 = vmatpush1.msra.mxu0 0.0
        %3086 = vmatprep.subr.mxu0 0.0
        %3087 = vmatpush1.msra.mxu0 0.0
        %3088 = vmatprep.subr.mxu0 0.0
        %3089 = vmatpush1.msra.mxu0 0.0
        %3090 = vmatprep.subr.mxu0 0.0
        %3091 = vmatpush1.msra.mxu0 0.0
        %3092 = vmatprep.subr.mxu0 0.0
        %3093 = vmatpush1.msra.mxu0 0.0
        %3094 = vmatprep.mubr.f32.mxu0 0.0
        %3095 = vmatmul.mubr.f32.gmra.mrb[0].mxu0 %v354
        %v3096 = vpop.f32.mrb[0].mxu0
        %v3097 = vadd.f32 %v3013, %v3096
        %v3098 = vpop.f32.mrb[0].mxu0
        %3099 = vmatprep.mubr.f32.mxu0 0.0
        %3100 = vmatmul.mubr.f32.gmra.mrb[0].mxu0 %v357
        %v3101 = vpop.f32.mrb[0].mxu0
        %v3102 = vadd.f32 %v3018, %v3101
        %v3103 = vpop.f32.mrb[0].mxu0
        %3104 = vmatprep.mubr.f32.mxu0 0.0
        %3105 = vmatmul.mubr.f32.gmra.mrb[0].mxu0 %v360
        %v3106 = vpop.f32.mrb[0].mxu0
        %v3107 = vadd.f32 %v3023, %v3106
        %v3108 = vpop.f32.mrb[0].mxu0
        %3109 = vmatprep.mubr.f32.mxu0 0.0
        %3110 = vmatmul.mubr.f32.gmra.mrb[0].mxu0 %v363
        %v3111 = vpop.f32.mrb[0].mxu0
        %v3112 = vadd.f32 %v3028, %v3111
        %v3113 = vpop.f32.mrb[0].mxu0
        %3114 = vdwg.mxu0
        %v3115 = vmax.f32 %v3097, 0.0
        %v3116 = vmax.f32 %v3102, 0.0
        %v3117 = vmax.f32 %v3107, 0.0
        %v3118 = vmax.f32 %v3112, 0.0
        %3119 = vmatprep.subr.mxu0 0.0
        %3120 = vmatpush1.msra.mxu0 %v3115
        %3121 = vmatprep.subr.mxu0 0.0
        %3122 = vmatpush1.msra.mxu0 %v3116
        %3123 = vmatprep.subr.mxu0 0.0
        %3124 = vmatpush1.msra.mxu0 %v3117
        %3125 = vmatprep.subr.mxu0 0.0
        %3126 = vmatpush1.msra.mxu0 %v3118
        %3127 = vmatprep.subr.mxu0 0.0
        %3128 = vmatpush1.msra.mxu0 0.0
        %3129 = vmatprep.subr.mxu0 0.0
        %3130 = vmatpush1.msra.mxu0 0.0
        %3131 = vmatprep.subr.mxu0 0.0
        %3132 = vmatpush1.msra.mxu0 0.0
        %3133 = vmatprep.subr.mxu0 0.0
        %3134 = vmatpush1.msra.mxu0 0.0
        %3135 = vmatprep.subr.mxu0 0.0
        %3136 = vmatpush1.msra.mxu0 0.0
        %3137 = vmatprep.subr.mxu0 0.0
        %3138 = vmatpush1.msra.mxu0 0.0
        %3139 = vmatprep.subr.mxu0 0.0
        %3140 = vmatpush1.msra.mxu0 0.0
        %3141 = vmatprep.subr.mxu0 0.0
        %3142 = vmatpush1.msra.mxu0 0.0
        %3143 = vmatprep.subr.mxu0 0.0
        %3144 = vmatpush1.msra.mxu0 0.0
        %3145 = vmatprep.subr.mxu0 0.0
        %3146 = vmatpush1.msra.mxu0 0.0
        %3147 = vmatprep.subr.mxu0 0.0
        %3148 = vmatpush1.msra.mxu0 0.0
        %3149 = vmatprep.subr.mxu0 0.0
        %3150 = vmatpush1.msra.mxu0 0.0
        %3151 = vmatprep.subr.mxu0 0.0
        %3152 = vmatpush1.msra.mxu0 0.0
        %3153 = vmatprep.subr.mxu0 0.0
        %3154 = vmatpush1.msra.mxu0 0.0
        %3155 = vmatprep.subr.mxu0 0.0
        %3156 = vmatpush1.msra.mxu0 0.0
        %3157 = vmatprep.subr.mxu0 0.0
        %3158 = vmatpush1.msra.mxu0 0.0
        %3159 = vmatprep.subr.mxu0 0.0
        %3160 = vmatpush1.msra.mxu0 0.0
        %3161 = vmatprep.subr.mxu0 0.0
        %3162 = vmatpush1.msra.mxu0 0.0
        %3163 = vmatprep.subr.mxu0 0.0
        %3164 = vmatpush1.msra.mxu0 0.0
        %3165 = vmatprep.subr.mxu0 0.0
        %3166 = vmatpush1.msra.mxu0 0.0
        %3167 = vmatprep.subr.mxu0 0.0
        %3168 = vmatpush1.msra.mxu0 0.0
        %3169 = vmatprep.subr.mxu0 0.0
        %3170 = vmatpush1.msra.mxu0 0.0
        %3171 = vmatprep.subr.mxu0 0.0
        %3172 = vmatpush1.msra.mxu0 0.0
        %3173 = vmatprep.subr.mxu0 0.0
        %3174 = vmatpush1.msra.mxu0 0.0
        %3175 = vmatprep.subr.mxu0 0.0
        %3176 = vmatpush1.msra.mxu0 0.0
        %3177 = vmatprep.subr.mxu0 0.0
        %3178 = vmatpush1.msra.mxu0 0.0
        %3179 = vmatprep.subr.mxu0 0.0
        %3180 = vmatpush1.msra.mxu0 0.0
        %3181 = vmatprep.subr.mxu0 0.0
        %3182 = vmatpush1.msra.mxu0 0.0
        %3183 = vmatprep.mubr.f32.mxu0 0.0
        %3184 = vmatmul.mubr.f32.gmra.mrb[0].mxu0 %v461
        %v3185 = vpop.f32.mrb[0].mxu0
        %v3186 = vadd.f32 %v457, %v3185
        %v3187 = vpop.f32.mrb[0].mxu0
        %3188 = vdwg.mxu0
        %v3189 = vstv %s2798
        %v3190 = vmul.f32 %v3189, %v3002
        %v3191 = vstv %s2800
        %v3192 = vmul.f32 %v3191, %v3186
        %v3193 = vadd.f32 %v3190, %v3192
        %v3194 = vsub.f32 %v3002, %v3193
        %v3195 = vstv %s2802
        %v3196 = vmul.f32 %v3194, %v3195
        %v3197 = vstv %s2804
        %v3198 = vmul.f32 %v3196, %v3197
        %v3199 = vadd.f32 %v2794, %v3198
        %s3200 = scalar_lea.vmem %s307, 48
        %v3201 = vld [vmem:[%s3200] sm:$0xff]
        %v3202 = vstv %s2805
        %v3203 = vmul.f32 %v3201, %v3202
        %v3204 = vadd.f32 %v3199, %v3203
        %v3205 = vmax.f32 %v3204, -1.0
        %v3206 = vmin.f32 %v3205, 1.0
        %3207 = vst [vmem:[%s298] sm:$0xff] %v3206
        %s3208 = sand.u32 %s187, 1
        %s3209 = scalar_lea.sflag [#allocation3], %s3208
        %s3210 = sand.u32 %s187, 1
        %s3211 = smul.addr %s3210, 8
        %s3212 = scalar_lea.vmem [#allocation5], %s3211
        // Predicated region
        $region53: #{tpu_custom_call.1} parent=47 // pred_check
          %p3213 = pneg %p197
        $region54: #{tpu_custom_call.1} parent=47 // pred_check_branch
          %3215 = sbr.rel (%p3213) target = $region56
        $region55: #{tpu_custom_call.1} parent=47 // pred_region
          %s3217 = ssub.s32 128, 128
          %3218 = vsyncadd %s3209, %s3217
          %s3219 = smul.addr %s22, 128
          %s3220 = scalar_lea.hbm %s7, %s3219
          %s3222 = sshll.u32 %s3212, 4
          %s3223 = int_to_ptr.vmem [resolvable:$true] %s3222
          %3225 = dma.vmem_to_hbm [thread:$0]  %s3223, 128, %s3220, %s3209
        $region56: #{tpu_custom_call.1} parent=47 // pred_fallthru
          _
      $region48: #{tpu_custom_call.1} parent=5 // pred_fallthru
        _
      %p3226 = scmp.le.s32.totalorder 2, %s17
      // Predicated region
      $region57: #{tpu_custom_call.1} parent=5 // pred_check
        %p3227 = pneg %p3226
      $region58: #{tpu_custom_call.1} parent=5 // pred_check_branch
        %3229 = sbr.rel (%p3227) target = $region60
      $region59: #{tpu_custom_call.1} parent=5 // pred_region
        %s3230 = ssub.s32 %s17, 2
        // Predicated region
        $region61: #{tpu_custom_call.1} parent=59 // pred_check
          %p3231 = pneg %p203
        $region62: #{tpu_custom_call.1} parent=59 // pred_check_branch
          %3233 = sbr.rel (%p3231) target = $region64
        $region63: #{tpu_custom_call.1} parent=59 // pred_region
          %s3234 = sand.u32 %s188, 1
          %s3235 = scalar_lea.sflag [#allocation3], %s3234
          %s3236 = sand.u32 %s188, 1
          %s3237 = smul.addr %s3236, 8
          %s3238 = scalar_lea.vmem [#allocation5], %s3237
          %3239 = dma.done %s3235, 128
        $region64: #{tpu_custom_call.1} parent=59 // pred_fallthru
          _
      $region60: #{tpu_custom_call.1} parent=5 // pred_fallthru
        _
    $region6: #{tpu_custom_call.1} parent=1 // loop_footer
      %s21 = sadd.s32 1, %s17
    $region7: #{tpu_custom_call.1} parent=1 // loop_footer_branch
      %16 = sbr.rel target = $region3
    $region8: #{tpu_custom_call.1} parent=1 // loop_exit
      _
    %3240 = vsyncpa [#allocation3], 1
    %s3241 = scalar_lea.sflag [#allocation3], 1
    %3242 = vsyncpa %s3241, 1
    %3243 = vsyncpa [#allocation4], 1
    %s3244 = scalar_lea.sflag [#allocation4], 1
    %3245 = vsyncpa %s3244, 1

</llo_original>
